<compile_context>
chip_gen: v5e
topology: v5e:2x2
jax: 0.10.0
libtpu: 0.0.40
codegen_flags: <defaults>
</compile_context>

<pallas_src>
import jax
import jax.numpy as jnp
from jax import lax
from jax.experimental import pallas as pl
from jax.experimental.pallas import tpu as pltpu

IN_FEATURES = 57600
OUT_FEATURES = 10


def _detect_k_split() -> int:
    """2-way TensorCore-parallel outer K split on v7x (2 TCs/chip); 1 elsewhere."""
    try:
        kind = jax.devices()[0].device_kind.lower()
    except Exception:
        return 1
    return 2 if ("v7" in kind or "tpu7" in kind) else 1


K_SPLIT = _detect_k_split()                 # outer "parallel" axis (TensorCores)
K_INNER = 3                                 # inner "arbitrary" axis (pipelined reduction)
TK = IN_FEATURES // (K_SPLIT * K_INNER)     # 19200 (1 TC) or 9600 (2 TCs)
assert IN_FEATURES % (K_SPLIT * K_INNER) == 0
assert TK % 128 == 0                        # lane-aligned K slabs


def _linear_kernel(x_ref, w_ref, b_ref, o_ref):
    """Grid step (c, k): o[c] (+)= x[:, slab] @ W[:, slab]^T  (bias in the c==0,k==0 init).

    x_ref: (B, TK)    f32   lane-dense K slab of the activations
    w_ref: (N, TK)    bf16  lane-dense K slab of the PyTorch-native (out, in) weight
    b_ref: (1, N)     f32   bias (resident, constant index_map)
    o_ref: (1, B, N)  f32   per-outer-step partial, resident across the inner k axis
    """
    c = pl.program_id(0)
    k = pl.program_id(1)

    # bf16 x bf16 -> f32 accumulate on the MXU.  Contraction over the last
    # (lane) dim of BOTH operands == x @ W^T, so no weight transpose is needed.
    acc = lax.dot_general(
        x_ref[...].astype(jnp.bfloat16),
        w_ref[...],
        dimension_numbers=(((1,), (1,)), ((), ())),
        preferred_element_type=jnp.float32,
    )

    @pl.when(k == 0)
    def _init():
        # Partial 0 starts from the bias; any other partial starts from zero.
        scale = (c == 0).astype(jnp.float32)
        o_ref[0] = scale * jnp.broadcast_to(b_ref[...], o_ref.shape[1:])

    o_ref[0] += acc


@jax.jit
def ltrans_forward(x, weight_bf16, bias):
    """Pallas LTrans.forward: nn.Linear(57600 -> 10) with a bf16-streamed weight.

    x:           (B, IN_FEATURES)   f32
    weight_bf16: (OUT, IN_FEATURES) bf16  (PyTorch-native (out, in) layout)
    bias:        (1, OUT)           f32
    returns      (B, OUT)           f32
    """
    B, K = x.shape
    N, Kw = weight_bf16.shape
    assert K == Kw == IN_FEATURES and N == OUT_FEATURES

    cost = pl.CostEstimate(
        flops=2 * B * K * N,
        transcendentals=0,
        bytes_accessed=B * K * 4 + N * K * 2 + K_SPLIT * B * N * 4 + N * 4,
    )

    partials = pl.pallas_call(
        _linear_kernel,
        out_shape=jax.ShapeDtypeStruct((K_SPLIT, B, N), jnp.float32),
        grid_spec=pltpu.PrefetchScalarGridSpec(
            num_scalar_prefetch=0,
            grid=(K_SPLIT, K_INNER),
            in_specs=[
                pl.BlockSpec((B, TK), lambda c, k: (0, c * K_INNER + k)),  # x K slab
                pl.BlockSpec((N, TK), lambda c, k: (0, c * K_INNER + k)),  # W K slab (bf16)
                pl.BlockSpec((1, N), lambda c, k: (0, 0)),                 # bias (resident)
            ],
            out_specs=pl.BlockSpec((1, B, N), lambda c, k: (c, 0, 0)),     # resident over k
        ),
        compiler_params=pltpu.CompilerParams(
            dimension_semantics=("parallel", "arbitrary"),  # TC split x in-kernel reduction
        ),
        cost_estimate=cost,
    )(x, weight_bf16, bias)

    if K_SPLIT == 1:
        # Single TensorCore: no partials, no wrapper reduction HLO.
        return partials[0]
    # v7x: combine the two per-TensorCore partials (bias already in partial 0).
    return jnp.sum(partials, axis=0)


if __name__ == "__main__":
    key = jax.random.PRNGKey(0)
    k_x, k_w, k_b = jax.random.split(key, 3)

    # Small batch per the module's forward; larger B rides along nearly free
    # (cost is dominated by streaming the weight, independent of B).
    B = 2
    bound = 1.0 / (IN_FEATURES ** 0.5)
    weight_f32 = jax.random.uniform(
        k_w, (OUT_FEATURES, IN_FEATURES), jnp.float32, -bound, bound
    )
    bias = jax.random.uniform(k_b, (1, OUT_FEATURES), jnp.float32, -bound, bound)
    x = jax.random.normal(k_x, (B, IN_FEATURES), jnp.float32)

    # Parameter stored persistently as bf16 (done once, outside the forward,
    # so the forward never re-reads / re-casts the f32 weight).
    weight_bf16 = weight_f32.astype(jnp.bfloat16)

    logits = ltrans_forward(x, weight_bf16, bias)
    jax.block_until_ready(logits)
    assert logits.shape == (B, OUT_FEATURES)

    # Reference 1: same quantized operands (bf16), exact f32 accumulation --
    # differs from the kernel only by accumulation order.
    x_q = x.astype(jnp.bfloat16).astype(jnp.float32)
    w_q = weight_bf16.astype(jnp.float32)
    ref_q = jnp.dot(x_q, w_q.T, precision=lax.Precision.HIGHEST) + bias
    assert jnp.allclose(logits, ref_q, atol=2e-3, rtol=2e-3)

    # Reference 2: full-f32 nn.Linear math; loose tolerance covers bf16 operand
    # quantization over the K=57600 contraction.
    ref_f32 = jnp.dot(x, weight_f32.T, precision=lax.Precision.HIGHEST) + bias
    assert jnp.allclose(logits, ref_f32, atol=3e-2, rtol=3e-2)

    print("KERNEL_OK")
</pallas_src>

<mosaic_0001>
module attributes {stable_mosaic.version = 11 : i64} {
  func.func @_linear_kernel(%arg0: i32, %arg1: i32, %arg2: memref<2x19200xf32, #tpu.memory_space<vmem>>, %arg3: memref<10x19200xbf16, #tpu.memory_space<vmem>>, %arg4: memref<1x10xf32, #tpu.memory_space<vmem>>, %arg5: memref<1x2x10xf32, #tpu.memory_space<vmem>>) attributes {dimension_semantics = [#tpu.dimension_semantics<parallel>, #tpu.dimension_semantics<arbitrary>], iteration_bounds = array<i64: 1, 3>, scalar_prefetch = 0 : i64, scratch_operands = 0 : i64, tpu.core_type = #tpu.core_type<tc>, window_params = [{transform_indices = @transform_0, window_bounds = array<i64: 2, 19200>}, {transform_indices = @transform_1, window_bounds = array<i64: 10, 19200>}, {pipeline_mode = #tpu.pipeline_mode<synchronous>, transform_indices = @transform_2, window_bounds = array<i64: 1, 10>}, {transform_indices = @transform_3, window_bounds = array<i64: 1, 2, 10>}]} {
    %c0 = arith.constant 0 : index
    %c0_0 = arith.constant 0 : index
    %0 = vector.load %arg2[%c0, %c0_0] : memref<2x19200xf32, #tpu.memory_space<vmem>>, vector<2x19200xf32>
    %1 = arith.truncf %0 : vector<2x19200xf32> to vector<2x19200xbf16>
    %c0_1 = arith.constant 0 : index
    %c0_2 = arith.constant 0 : index
    %2 = vector.load %arg3[%c0_1, %c0_2] : memref<10x19200xbf16, #tpu.memory_space<vmem>>, vector<10x19200xbf16>
    %cst = arith.constant dense<0.000000e+00> : vector<2x10xf32>
    %3 = tpu.matmul %1, %2, %cst {dimension_numbers = #tpu.dot_dimension_numbers<[1], [1], [0], [0], [0, 0, 1, 0], [], []>} : vector<2x19200xbf16>, vector<10x19200xbf16>, vector<2x10xf32> -> vector<2x10xf32>
    %c0_i32 = arith.constant 0 : i32
    %4 = arith.cmpi eq, %arg1, %c0_i32 : i32
    %5 = arith.extui %4 : i1 to i32
    %c0_i32_3 = arith.constant 0 : i32
    %6 = arith.cmpi ne, %5, %c0_i32_3 : i32
    scf.if %6 {
      %c0_i32_10 = arith.constant 0 : i32
      %13 = arith.cmpi eq, %arg0, %c0_i32_10 : i32
      %14 = arith.extui %13 : i1 to i32
      %15 = arith.sitofp %14 : i32 to f32
      %c0_11 = arith.constant 0 : index
      %c0_12 = arith.constant 0 : index
      %16 = vector.load %arg4[%c0_11, %c0_12] : memref<1x10xf32, #tpu.memory_space<vmem>>, vector<1x10xf32>
      %17 = vector.shape_cast %16 : vector<1x10xf32> to vector<1x10xf32>
      %18 = vector.broadcast %17 : vector<1x10xf32> to vector<2x10xf32>
      %19 = vector.broadcast %15 : f32 to vector<2x10xf32>
      %20 = arith.mulf %19, %18 : vector<2x10xf32>
      %c0_13 = arith.constant 0 : index
      %c0_14 = arith.constant 0 : index
      %c0_15 = arith.constant 0 : index
      %21 = vector.load %arg5[%c0_13, %c0_14, %c0_15] : memref<1x2x10xf32, #tpu.memory_space<vmem>>, vector<1x2x10xf32>
      %22 = vector.shape_cast %21 : vector<1x2x10xf32> to vector<2x10xf32>
      %23 = vector.shape_cast %20 : vector<2x10xf32> to vector<1x2x10xf32>
      tpu.vector_store %arg5[%c0_13, %c0_14, %c0_15], %23 {strides = array<i32>} : memref<1x2x10xf32, #tpu.memory_space<vmem>>, vector<1x2x10xf32>,
    } else {
    }
    %c0_4 = arith.constant 0 : index
    %c0_5 = arith.constant 0 : index
    %c0_6 = arith.constant 0 : index
    %7 = vector.load %arg5[%c0_4, %c0_5, %c0_6] : memref<1x2x10xf32, #tpu.memory_space<vmem>>, vector<1x2x10xf32>
    %8 = vector.shape_cast %7 : vector<1x2x10xf32> to vector<2x10xf32>
    %9 = arith.addf %8, %3 : vector<2x10xf32>
    %c0_7 = arith.constant 0 : index
    %c0_8 = arith.constant 0 : index
    %c0_9 = arith.constant 0 : index
    %10 = vector.load %arg5[%c0_7, %c0_8, %c0_9] : memref<1x2x10xf32, #tpu.memory_space<vmem>>, vector<1x2x10xf32>
    %11 = vector.shape_cast %10 : vector<1x2x10xf32> to vector<2x10xf32>
    %12 = vector.shape_cast %9 : vector<2x10xf32> to vector<1x2x10xf32>
    tpu.vector_store %arg5[%c0_7, %c0_8, %c0_9], %12 {strides = array<i32>} : memref<1x2x10xf32, #tpu.memory_space<vmem>>, vector<1x2x10xf32>,
    return
  }
  func.func @transform_0(%arg0: i32, %arg1: i32) -> (i32, i32) {
    %c3_i32 = arith.constant 3 : i32
    %0 = arith.muli %arg0, %c3_i32 : i32
    %1 = arith.addi %0, %arg1 : i32
    %c0_i32 = arith.constant 0 : i32
    %c0_i32_0 = arith.constant 0 : i32
    return %c0_i32, %1 : i32, i32
  }
  func.func @transform_1(%arg0: i32, %arg1: i32) -> (i32, i32) {
    %c3_i32 = arith.constant 3 : i32
    %0 = arith.muli %arg0, %c3_i32 : i32
    %1 = arith.addi %0, %arg1 : i32
    %c0_i32 = arith.constant 0 : i32
    %c0_i32_0 = arith.constant 0 : i32
    return %c0_i32, %1 : i32, i32
  }
  func.func @transform_2(%arg0: i32, %arg1: i32) -> (i32, i32) {
    %c0_i32 = arith.constant 0 : i32
    %c0_i32_0 = arith.constant 0 : i32
    %c0_i32_1 = arith.constant 0 : i32
    return %c0_i32, %c0_i32_0 : i32, i32
  }
  func.func @transform_3(%arg0: i32, %arg1: i32) -> (i32, i32, i32) {
    %c0_i32 = arith.constant 0 : i32
    %c0_i32_0 = arith.constant 0 : i32
    %c0_i32_1 = arith.constant 0 : i32
    return %arg0, %c0_i32, %c0_i32_0 : i32, i32, i32
  }
}

</mosaic_0001>

<llo_original>
// kernel: ltrans_forward.1
$region0: #{ltrans_forward.1}
  #allocation0 [shape = 'u32[]', space=smem, size = 0x4, offset = 0x4, fixed_abs, tag = 'smem constant byte address 0x4 - core index']
  #allocation1 [shape = 'u32[72,128]{1,0:T(1,128)}', space=vmem, size = 0x9000, scoped, tag = 'internal scratch']
  %s0 = inlined_call_operand.hbm [shape: f32[2,57600], index: 0, kind: input, shape index: {}]
  %s1 = inlined_call_operand.hbm [shape: bf16[10,57600], index: 1, kind: input, shape index: {}]
  %s2 = inlined_call_operand.hbm [shape: f32[1,10], index: 2, kind: input, shape index: {}]
  %s3 = inlined_call_operand.hbm [shape: f32[1,2,10], index: 3, kind: output, shape index: {}]
  %s4 = sld [smem:[#allocation0]]
  $region61: #{ltrans_forward.1} parent=0
    _
  %s6 = ssub.s32 1, %s4
  %s7 = scalar_select 0, %s6, %s4
  $region1: #{ltrans_forward.1} parent=0
    #allocation2 [shape = 'u8[307200]{0}', space=vmem, size = 0x4b000, scoped, tag = 'input window, operand 0']
    #allocation3 [shape = 's32[2]{0}', space=sflag, size = 0x8, scoped, tag = 'scoped memory for ltrans_forward.1']
    #allocation4 [shape = 's32[2]{0}', space=sflag, size = 0x8, scoped, tag = 'scoped memory for ltrans_forward.1']
    #allocation5 [shape = 'u8[1228800]{0}', space=vmem, size = 0x12c000, scoped, tag = 'input window, operand 1']
    #allocation6 [shape = 's32[2]{0}', space=sflag, size = 0x8, scoped, tag = 'scoped memory for ltrans_forward.1']
    #allocation7 [shape = 'u8[512]{0}', space=vmem, size = 0x400, scoped, tag = 'input window, operand 2, single buffered']
    #allocation8 [shape = 'u8[1024]{0}', space=vmem, size = 0x400, scoped, tag = 'output window, operand 0, single buffered']
    %8 = vsyncpa [#allocation3], 0
    %s9 = scalar_lea.sflag [#allocation3], 1
    %10 = vsyncpa %s9, 0
    %11 = vsyncpa [#allocation6], 0
    %s12 = scalar_lea.sflag [#allocation6], 1
    %13 = vsyncpa %s12, 0
    %14 = vsyncpa [#allocation4], 0
    loop: start=0, step=1, limit=5
    $region2: #{ltrans_forward.1} parent=1 // loop_pre_header
      _
    $region3: #{ltrans_forward.1} parent=1 // loop_header
      %s16 = sphi 0, %s20
      %p17 = scmp.ge.s32.totalorder %s16, 5
      %s23 = sphi 0, %s35
      %s24 = sphi 0, %s31
      %s25 = sphi 0, %s23
      %s26 = sphi 0, %s24
      %s27 = sphi 0, %s25
      %s28 = sphi 0, %s26
      %s42 = sphi 0, %s44
      %s45 = sphi 0, %s42
      %s46 = sphi 0, %s45
      %s62 = sphi 0, %s46
      %s72 = sphi 0, %s74
      %s75 = sphi 0, %s72
      %s76 = sphi 0, %s75
      %s92 = sphi 0, %s76
      %s96 = sphi 0, %s96
      %s98 = sphi 0, %s96
      %s99 = sphi 0, %s98
      %s113 = sphi 0, %s99
      %s119 = sphi 0, %s121
      %s122 = sphi 0, %s119
      %s123 = sphi 0, %s122
      %s139 = sphi 0, %s123
    $region4: #{ltrans_forward.1} parent=1 // loop_header_branch
      %19 = sbr.rel (%p17) target = $region8
    $region5: #{ltrans_forward.1} parent=1 // loop_body
      %s21 = ssub.s32 %s16, 1
      %s22 = ssub.s32 %s16, 2
      %s29 = sadd.s32 1, %s24
      %p30 = scmp.ge.s32.totalorder %s29, 3
      %s31 = scalar_select %p30, 0, %s29
      %s32 = sadd.s32 1, %s23
      %s33 = scalar_select %p30, %s32, %s23
      %p34 = scmp.ge.s32.totalorder %s33, 1
      %s35 = scalar_select %p34, 0, %s33
      %s36 = smul.u32 %s23, 3
      %s37 = sadd.s32 %s36, %s24
      %s38 = smul.u32 %s35, 3
      %s39 = sadd.s32 %s38, %s31
      %s40 = ssub.s32 %s37, %s39
      %p41 = scmp.eq.s32.totalorder %s40, 0
      %s43 = sadd.s32 %s42, 1
      %s44 = scalar_select %p41, %s42, %s43
      %p47 = pneg %p41
      %p48 = scmp.eq.s32.totalorder %s16, 2
      %p49 = por %p47, %p48
      %p50 = scmp.ne.s32.totalorder %s42, %s45
      %p51 = scmp.eq.s32.totalorder %s16, 0
      %p52 = por %p50, %p51
      %p53 = scmp.ne.s32.totalorder %s42, %s45
      %p54 = scmp.eq.s32.totalorder %s21, 2
      %p55 = por %p53, %p54
      %p56 = scmp.ne.s32.totalorder %s45, %s46
      %p57 = scmp.eq.s32.totalorder %s21, 0
      %p58 = por %p56, %p57
      %p59 = scmp.ne.s32.totalorder %s45, %s46
      %p60 = scmp.eq.s32.totalorder %s22, 2
      %p61 = por %p59, %p60
      %p63 = scmp.ne.s32.totalorder %s46, %s62
      %p64 = scmp.eq.s32.totalorder %s22, 0
      %p65 = por %p63, %p64
      %s66 = smul.u32 %s23, 3
      %s67 = sadd.s32 %s66, %s24
      %s68 = smul.u32 %s35, 3
      %s69 = sadd.s32 %s68, %s31
      %s70 = ssub.s32 %s67, %s69
      %p71 = scmp.eq.s32.totalorder %s70, 0
      %s73 = sadd.s32 %s72, 1
      %s74 = scalar_select %p71, %s72, %s73
      %p77 = pneg %p71
      %p78 = scmp.eq.s32.totalorder %s16, 2
      %p79 = por %p77, %p78
      %p80 = scmp.ne.s32.totalorder %s72, %s75
      %p81 = scmp.eq.s32.totalorder %s16, 0
      %p82 = por %p80, %p81
      %p83 = scmp.ne.s32.totalorder %s72, %s75
      %p84 = scmp.eq.s32.totalorder %s21, 2
      %p85 = por %p83, %p84
      %p86 = scmp.ne.s32.totalorder %s75, %s76
      %p87 = scmp.eq.s32.totalorder %s21, 0
      %p88 = por %p86, %p87
      %p89 = scmp.ne.s32.totalorder %s75, %s76
      %p90 = scmp.eq.s32.totalorder %s22, 2
      %p91 = por %p89, %p90
      %p93 = scmp.ne.s32.totalorder %s76, %s92
      %p94 = scmp.eq.s32.totalorder %s22, 0
      %p95 = por %p93, %p94
      %s97 = sadd.s32 %s96, 1
      %p100 = scmp.eq.s32.totalorder %s16, 2
      %p101 = scmp.ne.s32.totalorder %s96, %s98
      %p102 = scmp.eq.s32.totalorder %s16, 0
      %p103 = por %p101, %p102
      %p104 = scmp.ne.s32.totalorder %s96, %s98
      %p105 = scmp.eq.s32.totalorder %s21, 2
      %p106 = por %p104, %p105
      %p107 = scmp.ne.s32.totalorder %s98, %s99
      %p108 = scmp.eq.s32.totalorder %s21, 0
      %p109 = por %p107, %p108
      %p110 = scmp.ne.s32.totalorder %s98, %s99
      %p111 = scmp.eq.s32.totalorder %s22, 2
      %p112 = por %p110, %p111
      %p114 = scmp.ne.s32.totalorder %s99, %s113
      %p115 = scmp.eq.s32.totalorder %s22, 0
      %p116 = por %p114, %p115
      %s117 = ssub.s32 %s23, %s35
      %p118 = scmp.eq.s32.totalorder %s117, 0
      %s120 = sadd.s32 %s119, 1
      %s121 = scalar_select %p118, %s119, %s120
      %p124 = pneg %p118
      %p125 = scmp.eq.s32.totalorder %s16, 2
      %p126 = por %p124, %p125
      %p127 = scmp.ne.s32.totalorder %s119, %s122
      %p128 = scmp.eq.s32.totalorder %s16, 0
      %p129 = por %p127, %p128
      %p130 = scmp.ne.s32.totalorder %s119, %s122
      %p131 = scmp.eq.s32.totalorder %s21, 2
      %p132 = por %p130, %p131
      %p133 = scmp.ne.s32.totalorder %s122, %s123
      %p134 = scmp.eq.s32.totalorder %s21, 0
      %p135 = por %p133, %p134
      %p136 = scmp.ne.s32.totalorder %s122, %s123
      %p137 = scmp.eq.s32.totalorder %s22, 2
      %p138 = por %p136, %p137
      %p140 = scmp.ne.s32.totalorder %s123, %s139
      %p141 = scmp.eq.s32.totalorder %s22, 0
      %p142 = por %p140, %p141
      %p143 = scmp.le.s32.totalorder 1, %s16
      %p144 = scmp.lt.s32.totalorder %s16, 4
      %p145 = pnand %p143, %p144
      %p146 = pneg %p145
      // Predicated region
      $region9: #{ltrans_forward.1} parent=5 // pred_check
        _
      $region10: #{ltrans_forward.1} parent=5 // pred_check_branch
        %148 = sbr.rel (%p145) target = $region12
      $region11: #{ltrans_forward.1} parent=5 // pred_region
        %s149 = ssub.s32 %s16, 1
        // Predicated region
        $region13: #{ltrans_forward.1} parent=11 // pred_check
          %p150 = pneg %p109
        $region14: #{ltrans_forward.1} parent=11 // pred_check_branch
          %152 = sbr.rel (%p150) target = $region16
        $region15: #{ltrans_forward.1} parent=11 // pred_region
          %154 = vsyncadd [#allocation6], 0
          %s156 = sshll.u32 %s2, 4
          %s157 = int_to_ptr.hbm [resolvable:$true] %s156
          %s158 = sshll.u32 [#allocation7], 4
          %s159 = int_to_ptr.vmem [resolvable:$true] %s158
          %161 = dma.hbm_to_vmem [thread:$0]  %s157, 16, %s159, [#allocation6]
        $region16: #{ltrans_forward.1} parent=11 // pred_fallthru
          _
      $region12: #{ltrans_forward.1} parent=5 // pred_fallthru
        _
      %p162 = scmp.lt.s32.totalorder %s16, 3
      // Predicated region
      $region17: #{ltrans_forward.1} parent=5 // pred_check
        %p163 = pneg %p162
      $region18: #{ltrans_forward.1} parent=5 // pred_check_branch
        %165 = sbr.rel (%p163) target = $region20
      $region19: #{ltrans_forward.1} parent=5 // pred_region
        // Predicated region
        $region21: #{ltrans_forward.1} parent=19 // pred_check
          %p166 = pneg %p52
        $region22: #{ltrans_forward.1} parent=19 // pred_check_branch
          %168 = sbr.rel (%p166) target = $region24
        $region23: #{ltrans_forward.1} parent=19 // pred_region
          %s169 = sand.u32 %s42, 1
          %s170 = scalar_lea.sflag [#allocation3], %s169
          %s171 = sand.u32 %s42, 1
          %s172 = smul.addr %s171, 300
          %s173 = scalar_lea.vmem [#allocation2], %s172
          %s174 = smul.u32 %s23, 3
          %s175 = sadd.s32 %s174, %s24
          %s176 = smul.u32 150, %s175
          %178 = vsyncadd %s170, 0
          %s179 = smul.addr %s176, 2
          %s180 = scalar_lea.hbm %s0, %s179
          %s182 = sshll.u32 %s180, 4
          %s183 = int_to_ptr.hbm [resolvable:$true] %s182
          %s184 = sshll.u32 %s173, 4
          %s185 = int_to_ptr.vmem [resolvable:$true] %s184
          %187 = dma.hbm_to_vmem [thread:$0]  %s183, 4800, %s185, %s170
        $region24: #{ltrans_forward.1} parent=19 // pred_fallthru
          _
        // Predicated region
        $region25: #{ltrans_forward.1} parent=19 // pred_check
          %p188 = pneg %p82
        $region26: #{ltrans_forward.1} parent=19 // pred_check_branch
          %190 = sbr.rel (%p188) target = $region28
        $region27: #{ltrans_forward.1} parent=19 // pred_region
          %s191 = sand.u32 %s16, 1
          %s192 = scalar_lea.sflag [#allocation6], %s191
          %s193 = sand.u32 %s72, 1
          %s194 = smul.addr %s193, 1200
          %s195 = scalar_lea.vmem [#allocation5], %s194
          %s196 = smul.u32 %s23, 3
          %s197 = sadd.s32 %s196, %s24
          %s198 = smul.u32 150, %s197
          %200 = vsyncadd %s192, 0
          %s201 = smul.addr %s198, 4
          %s202 = scalar_lea.hbm %s1, %s201
          %s203 = sshll.u32 %s202, 4
          %s204 = int_to_ptr.hbm [resolvable:$true] %s203
          %s205 = sshll.u32 %s195, 4
          %s206 = int_to_ptr.vmem [resolvable:$true] %s205
          %211 = dma.hbm_to_vmem [thread:$0]  %s204, 19200, %s206, %s192, 28800, 9600, 600
        $region28: #{ltrans_forward.1} parent=19 // pred_fallthru
          _
      $region20: #{ltrans_forward.1} parent=5 // pred_fallthru
        _
      %p212 = scmp.le.s32.totalorder 1, %s16
      %p213 = scmp.lt.s32.totalorder %s16, 4
      %p214 = pnand %p212, %p213
      %p215 = pneg %p214
      // Predicated region
      $region29: #{ltrans_forward.1} parent=5 // pred_check
        _
      $region30: #{ltrans_forward.1} parent=5 // pred_check_branch
        %217 = sbr.rel (%p214) target = $region32
      $region31: #{ltrans_forward.1} parent=5 // pred_region
        %s218 = ssub.s32 %s16, 1
        %s219 = sand.u32 %s45, 1
        %s220 = scalar_lea.sflag [#allocation3], %s219
        %s221 = sand.u32 %s45, 1
        %s222 = smul.addr %s221, 300
        %s223 = scalar_lea.vmem [#allocation2], %s222
        // Predicated region
        $region33: #{ltrans_forward.1} parent=31 // pred_check
          %p224 = pneg %p58
        $region34: #{ltrans_forward.1} parent=31 // pred_check_branch
          %226 = sbr.rel (%p224) target = $region36
        $region35: #{ltrans_forward.1} parent=31 // pred_region
          %228 = dma.done %s220, 4800
        $region36: #{ltrans_forward.1} parent=31 // pred_fallthru
          _
        %s229 = sand.u32 %s21, 1
        %s230 = scalar_lea.sflag [#allocation6], %s229
        %s231 = sand.u32 %s75, 1
        %s232 = smul.addr %s231, 1200
        %s233 = scalar_lea.vmem [#allocation5], %s232
        // Predicated region
        $region37: #{ltrans_forward.1} parent=31 // pred_check
          %p234 = pneg %p88
        $region38: #{ltrans_forward.1} parent=31 // pred_check_branch
          %236 = sbr.rel (%p234) target = $region40
        $region39: #{ltrans_forward.1} parent=31 // pred_region
          %238 = dma.done %s230, 19200
        $region40: #{ltrans_forward.1} parent=31 // pred_fallthru
          _
        // Predicated region
        $region41: #{ltrans_forward.1} parent=31 // pred_check
          %p239 = pneg %p109
        $region42: #{ltrans_forward.1} parent=31 // pred_check_branch
          %241 = sbr.rel (%p239) target = $region44
        $region43: #{ltrans_forward.1} parent=31 // pred_region
          %243 = dma.done [#allocation6], 16
        $region44: #{ltrans_forward.1} parent=31 // pred_fallthru
          _
        %s244 = sand.u32 %s45, 1
        %s245 = scalar_lea.sflag [#allocation3], %s244
        %s246 = sand.u32 %s45, 1
        %s247 = smul.addr %s246, 300
        %s248 = scalar_lea.vmem [#allocation2], %s247
        %p249 = pneg %p58
        %p250 = pneg %p55
        %s251 = sand.u32 %s21, 1
        %s252 = scalar_lea.sflag [#allocation6], %s251
        %s253 = sand.u32 %s75, 1
        %s254 = smul.addr %s253, 1200
        %s255 = scalar_lea.vmem [#allocation5], %s254
        %p256 = pneg %p88
        %p257 = pneg %p85
        %p258 = pneg %p109
        %p259 = pneg %p106
        %p260 = pneg %p135
        %p261 = pneg %p132
        %s262 = smul.u32 %s25, 3
        %s263 = sadd.s32 %s262, %s26
        %s264 = smul.u32 150, %s263
        %s265 = smul.u32 %s25, 3
        %s266 = sadd.s32 %s265, %s26
        %s267 = smul.u32 150, %s266
        %v269 = vld [vmem:[%s223] sm:$0xff]
        %v270 = vld [vmem:[%s223 + $0x8] sm:$0xff]
        %v271 = vld [vmem:[%s223 + $0x10] sm:$0xff]
        %v272 = vld [vmem:[%s223 + $0x18] sm:$0xff]
        %v273 = vld [vmem:[%s223 + $0x20] sm:$0xff]
        %v274 = vld [vmem:[%s223 + $0x28] sm:$0xff]
        %v275 = vld [vmem:[%s223 + $0x30] sm:$0xff]
        %v276 = vld [vmem:[%s223 + $0x38] sm:$0xff]
        %v277 = vld [vmem:[%s223 + $0x40] sm:$0xff]
        %v278 = vld [vmem:[%s223 + $0x48] sm:$0xff]
        %v279 = vld [vmem:[%s223 + $0x50] sm:$0xff]
        %v280 = vld [vmem:[%s223 + $0x58] sm:$0xff]
        %v281 = vld [vmem:[%s223 + $0x60] sm:$0xff]
        %v282 = vld [vmem:[%s223 + $0x68] sm:$0xff]
        %v283 = vld [vmem:[%s223 + $0x70] sm:$0xff]
        %v284 = vld [vmem:[%s223 + $0x78] sm:$0xff]
        %v285 = vld [vmem:[%s223 + $0x80] sm:$0xff]
        %v286 = vld [vmem:[%s223 + $0x88] sm:$0xff]
        %v287 = vld [vmem:[%s223 + $0x90] sm:$0xff]
        %v288 = vld [vmem:[%s223 + $0x98] sm:$0xff]
        %v289 = vld [vmem:[%s223 + $0xa0] sm:$0xff]
        %v290 = vld [vmem:[%s223 + $0xa8] sm:$0xff]
        %v291 = vld [vmem:[%s223 + $0xb0] sm:$0xff]
        %v292 = vld [vmem:[%s223 + $0xb8] sm:$0xff]
        %v293 = vld [vmem:[%s223 + $0xc0] sm:$0xff]
        %v294 = vld [vmem:[%s223 + $0xc8] sm:$0xff]
        %v295 = vld [vmem:[%s223 + $0xd0] sm:$0xff]
        %v296 = vld [vmem:[%s223 + $0xd8] sm:$0xff]
        %v297 = vld [vmem:[%s223 + $0xe0] sm:$0xff]
        %v298 = vld [vmem:[%s223 + $0xe8] sm:$0xff]
        %v299 = vld [vmem:[%s223 + $0xf0] sm:$0xff]
        %v300 = vld [vmem:[%s223 + $0xf8] sm:$0xff]
        %v301 = vld [vmem:[%s223 + $0x100] sm:$0xff]
        %v302 = vld [vmem:[%s223 + $0x108] sm:$0xff]
        %v303 = vld [vmem:[%s223 + $0x110] sm:$0xff]
        %v304 = vld [vmem:[%s223 + $0x118] sm:$0xff]
        %v305 = vld [vmem:[%s223 + $0x120] sm:$0xff]
        %v306 = vld [vmem:[%s223 + $0x128] sm:$0xf]
        %345 = vst [vmem:[#allocation1] ss:$4 sm:$0xff] %v269
        %s346 = scalar_lea.vmem [#allocation1], 32
        %347 = vst [vmem:[%s346] ss:$4 sm:$0xff] %v270
        %v348 = vld.sshfl [vmem:[#allocation1] sm:$0xff pattern:$0x73625140]
        %v349 = vld.sshfl [vmem:[#allocation1 + $0x8] sm:$0xff pattern:$0x73625140]
        %v350 = vld.sshfl [vmem:[#allocation1 + $0x10] sm:$0xff pattern:$0x73625140]
        %v351 = vld.sshfl [vmem:[#allocation1 + $0x18] sm:$0xff pattern:$0x73625140]
        %v352 = vld.sshfl [vmem:[#allocation1 + $0x20] sm:$0xff pattern:$0x73625140]
        %v353 = vld.sshfl [vmem:[#allocation1 + $0x28] sm:$0xff pattern:$0x73625140]
        %v354 = vld.sshfl [vmem:[#allocation1 + $0x30] sm:$0xff pattern:$0x73625140]
        %v355 = vld.sshfl [vmem:[#allocation1 + $0x38] sm:$0xff pattern:$0x73625140]
        %356 = vst [vmem:[#allocation1] ss:$4 sm:$0xff] %v271
        %357 = vst [vmem:[%s346] ss:$4 sm:$0xff] %v272
        %v358 = vld.sshfl [vmem:[#allocation1] sm:$0xff pattern:$0x73625140]
        %v359 = vld.sshfl [vmem:[#allocation1 + $0x8] sm:$0xff pattern:$0x73625140]
        %v360 = vld.sshfl [vmem:[#allocation1 + $0x10] sm:$0xff pattern:$0x73625140]
        %v361 = vld.sshfl [vmem:[#allocation1 + $0x18] sm:$0xff pattern:$0x73625140]
        %v362 = vld.sshfl [vmem:[#allocation1 + $0x20] sm:$0xff pattern:$0x73625140]
        %v363 = vld.sshfl [vmem:[#allocation1 + $0x28] sm:$0xff pattern:$0x73625140]
        %v364 = vld.sshfl [vmem:[#allocation1 + $0x30] sm:$0xff pattern:$0x73625140]
        %v365 = vld.sshfl [vmem:[#allocation1 + $0x38] sm:$0xff pattern:$0x73625140]
        %366 = vst [vmem:[#allocation1] ss:$4 sm:$0xff] %v273
        %367 = vst [vmem:[%s346] ss:$4 sm:$0xff] %v274
        %v368 = vld.sshfl [vmem:[#allocation1] sm:$0xff pattern:$0x73625140]
        %v369 = vld.sshfl [vmem:[#allocation1 + $0x8] sm:$0xff pattern:$0x73625140]
        %v370 = vld.sshfl [vmem:[#allocation1 + $0x10] sm:$0xff pattern:$0x73625140]
        %v371 = vld.sshfl [vmem:[#allocation1 + $0x18] sm:$0xff pattern:$0x73625140]
        %v372 = vld.sshfl [vmem:[#allocation1 + $0x20] sm:$0xff pattern:$0x73625140]
        %v373 = vld.sshfl [vmem:[#allocation1 + $0x28] sm:$0xff pattern:$0x73625140]
        %v374 = vld.sshfl [vmem:[#allocation1 + $0x30] sm:$0xff pattern:$0x73625140]
        %v375 = vld.sshfl [vmem:[#allocation1 + $0x38] sm:$0xff pattern:$0x73625140]
        %376 = vst [vmem:[#allocation1] ss:$4 sm:$0xff] %v275
        %377 = vst [vmem:[%s346] ss:$4 sm:$0xff] %v276
        %v378 = vld.sshfl [vmem:[#allocation1] sm:$0xff pattern:$0x73625140]
        %v379 = vld.sshfl [vmem:[#allocation1 + $0x8] sm:$0xff pattern:$0x73625140]
        %v380 = vld.sshfl [vmem:[#allocation1 + $0x10] sm:$0xff pattern:$0x73625140]
        %v381 = vld.sshfl [vmem:[#allocation1 + $0x18] sm:$0xff pattern:$0x73625140]
        %v382 = vld.sshfl [vmem:[#allocation1 + $0x20] sm:$0xff pattern:$0x73625140]
        %v383 = vld.sshfl [vmem:[#allocation1 + $0x28] sm:$0xff pattern:$0x73625140]
        %v384 = vld.sshfl [vmem:[#allocation1 + $0x30] sm:$0xff pattern:$0x73625140]
        %v385 = vld.sshfl [vmem:[#allocation1 + $0x38] sm:$0xff pattern:$0x73625140]
        %386 = vst [vmem:[#allocation1] ss:$4 sm:$0xff] %v277
        %387 = vst [vmem:[%s346] ss:$4 sm:$0xff] %v278
        %v388 = vld.sshfl [vmem:[#allocation1] sm:$0xff pattern:$0x73625140]
        %v389 = vld.sshfl [vmem:[#allocation1 + $0x8] sm:$0xff pattern:$0x73625140]
        %v390 = vld.sshfl [vmem:[#allocation1 + $0x10] sm:$0xff pattern:$0x73625140]
        %v391 = vld.sshfl [vmem:[#allocation1 + $0x18] sm:$0xff pattern:$0x73625140]
        %v392 = vld.sshfl [vmem:[#allocation1 + $0x20] sm:$0xff pattern:$0x73625140]
        %v393 = vld.sshfl [vmem:[#allocation1 + $0x28] sm:$0xff pattern:$0x73625140]
        %v394 = vld.sshfl [vmem:[#allocation1 + $0x30] sm:$0xff pattern:$0x73625140]
        %v395 = vld.sshfl [vmem:[#allocation1 + $0x38] sm:$0xff pattern:$0x73625140]
        %396 = vst [vmem:[#allocation1] ss:$4 sm:$0xff] %v279
        %397 = vst [vmem:[%s346] ss:$4 sm:$0xff] %v280
        %v398 = vld.sshfl [vmem:[#allocation1] sm:$0xff pattern:$0x73625140]
        %v399 = vld.sshfl [vmem:[#allocation1 + $0x8] sm:$0xff pattern:$0x73625140]
        %v400 = vld.sshfl [vmem:[#allocation1 + $0x10] sm:$0xff pattern:$0x73625140]
        %v401 = vld.sshfl [vmem:[#allocation1 + $0x18] sm:$0xff pattern:$0x73625140]
        %v402 = vld.sshfl [vmem:[#allocation1 + $0x20] sm:$0xff pattern:$0x73625140]
        %v403 = vld.sshfl [vmem:[#allocation1 + $0x28] sm:$0xff pattern:$0x73625140]
        %v404 = vld.sshfl [vmem:[#allocation1 + $0x30] sm:$0xff pattern:$0x73625140]
        %v405 = vld.sshfl [vmem:[#allocation1 + $0x38] sm:$0xff pattern:$0x73625140]
        %406 = vst [vmem:[#allocation1] ss:$4 sm:$0xff] %v281
        %407 = vst [vmem:[%s346] ss:$4 sm:$0xff] %v282
        %v408 = vld.sshfl [vmem:[#allocation1] sm:$0xff pattern:$0x73625140]
        %v409 = vld.sshfl [vmem:[#allocation1 + $0x8] sm:$0xff pattern:$0x73625140]
        %v410 = vld.sshfl [vmem:[#allocation1 + $0x10] sm:$0xff pattern:$0x73625140]
        %v411 = vld.sshfl [vmem:[#allocation1 + $0x18] sm:$0xff pattern:$0x73625140]
        %v412 = vld.sshfl [vmem:[#allocation1 + $0x20] sm:$0xff pattern:$0x73625140]
        %v413 = vld.sshfl [vmem:[#allocation1 + $0x28] sm:$0xff pattern:$0x73625140]
        %v414 = vld.sshfl [vmem:[#allocation1 + $0x30] sm:$0xff pattern:$0x73625140]
        %v415 = vld.sshfl [vmem:[#allocation1 + $0x38] sm:$0xff pattern:$0x73625140]
        %416 = vst [vmem:[#allocation1] ss:$4 sm:$0xff] %v283
        %417 = vst [vmem:[%s346] ss:$4 sm:$0xff] %v284
        %v418 = vld.sshfl [vmem:[#allocation1] sm:$0xff pattern:$0x73625140]
        %v419 = vld.sshfl [vmem:[#allocation1 + $0x8] sm:$0xff pattern:$0x73625140]
        %v420 = vld.sshfl [vmem:[#allocation1 + $0x10] sm:$0xff pattern:$0x73625140]
        %v421 = vld.sshfl [vmem:[#allocation1 + $0x18] sm:$0xff pattern:$0x73625140]
        %v422 = vld.sshfl [vmem:[#allocation1 + $0x20] sm:$0xff pattern:$0x73625140]
        %v423 = vld.sshfl [vmem:[#allocation1 + $0x28] sm:$0xff pattern:$0x73625140]
        %v424 = vld.sshfl [vmem:[#allocation1 + $0x30] sm:$0xff pattern:$0x73625140]
        %v425 = vld.sshfl [vmem:[#allocation1 + $0x38] sm:$0xff pattern:$0x73625140]
        %426 = vst [vmem:[#allocation1] ss:$4 sm:$0xff] %v285
        %427 = vst [vmem:[%s346] ss:$4 sm:$0xff] %v286
        %v428 = vld.sshfl [vmem:[#allocation1] sm:$0xff pattern:$0x73625140]
        %v429 = vld.sshfl [vmem:[#allocation1 + $0x8] sm:$0xff pattern:$0x73625140]
        %v430 = vld.sshfl [vmem:[#allocation1 + $0x10] sm:$0xff pattern:$0x73625140]
        %v431 = vld.sshfl [vmem:[#allocation1 + $0x18] sm:$0xff pattern:$0x73625140]
        %v432 = vld.sshfl [vmem:[#allocation1 + $0x20] sm:$0xff pattern:$0x73625140]
        %v433 = vld.sshfl [vmem:[#allocation1 + $0x28] sm:$0xff pattern:$0x73625140]
        %v434 = vld.sshfl [vmem:[#allocation1 + $0x30] sm:$0xff pattern:$0x73625140]
        %v435 = vld.sshfl [vmem:[#allocation1 + $0x38] sm:$0xff pattern:$0x73625140]
        %436 = vst [vmem:[#allocation1] ss:$4 sm:$0xff] %v287
        %437 = vst [vmem:[%s346] ss:$4 sm:$0xff] %v288
        %v438 = vld.sshfl [vmem:[#allocation1] sm:$0xff pattern:$0x73625140]
        %v439 = vld.sshfl [vmem:[#allocation1 + $0x8] sm:$0xff pattern:$0x73625140]
        %v440 = vld.sshfl [vmem:[#allocation1 + $0x10] sm:$0xff pattern:$0x73625140]
        %v441 = vld.sshfl [vmem:[#allocation1 + $0x18] sm:$0xff pattern:$0x73625140]
        %v442 = vld.sshfl [vmem:[#allocation1 + $0x20] sm:$0xff pattern:$0x73625140]
        %v443 = vld.sshfl [vmem:[#allocation1 + $0x28] sm:$0xff pattern:$0x73625140]
        %v444 = vld.sshfl [vmem:[#allocation1 + $0x30] sm:$0xff pattern:$0x73625140]
        %v445 = vld.sshfl [vmem:[#allocation1 + $0x38] sm:$0xff pattern:$0x73625140]
        %446 = vst [vmem:[#allocation1] ss:$4 sm:$0xff] %v289
        %447 = vst [vmem:[%s346] ss:$4 sm:$0xff] %v290
        %v448 = vld.sshfl [vmem:[#allocation1] sm:$0xff pattern:$0x73625140]
        %v449 = vld.sshfl [vmem:[#allocation1 + $0x8] sm:$0xff pattern:$0x73625140]
        %v450 = vld.sshfl [vmem:[#allocation1 + $0x10] sm:$0xff pattern:$0x73625140]
        %v451 = vld.sshfl [vmem:[#allocation1 + $0x18] sm:$0xff pattern:$0x73625140]
        %v452 = vld.sshfl [vmem:[#allocation1 + $0x20] sm:$0xff pattern:$0x73625140]
        %v453 = vld.sshfl [vmem:[#allocation1 + $0x28] sm:$0xff pattern:$0x73625140]
        %v454 = vld.sshfl [vmem:[#allocation1 + $0x30] sm:$0xff pattern:$0x73625140]
        %v455 = vld.sshfl [vmem:[#allocation1 + $0x38] sm:$0xff pattern:$0x73625140]
        %456 = vst [vmem:[#allocation1] ss:$4 sm:$0xff] %v291
        %457 = vst [vmem:[%s346] ss:$4 sm:$0xff] %v292
        %v458 = vld.sshfl [vmem:[#allocation1] sm:$0xff pattern:$0x73625140]
        %v459 = vld.sshfl [vmem:[#allocation1 + $0x8] sm:$0xff pattern:$0x73625140]
        %v460 = vld.sshfl [vmem:[#allocation1 + $0x10] sm:$0xff pattern:$0x73625140]
        %v461 = vld.sshfl [vmem:[#allocation1 + $0x18] sm:$0xff pattern:$0x73625140]
        %v462 = vld.sshfl [vmem:[#allocation1 + $0x20] sm:$0xff pattern:$0x73625140]
        %v463 = vld.sshfl [vmem:[#allocation1 + $0x28] sm:$0xff pattern:$0x73625140]
        %v464 = vld.sshfl [vmem:[#allocation1 + $0x30] sm:$0xff pattern:$0x73625140]
        %v465 = vld.sshfl [vmem:[#allocation1 + $0x38] sm:$0xff pattern:$0x73625140]
        %466 = vst [vmem:[#allocation1] ss:$4 sm:$0xff] %v293
        %467 = vst [vmem:[%s346] ss:$4 sm:$0xff] %v294
        %v468 = vld.sshfl [vmem:[#allocation1] sm:$0xff pattern:$0x73625140]
        %v469 = vld.sshfl [vmem:[#allocation1 + $0x8] sm:$0xff pattern:$0x73625140]
        %v470 = vld.sshfl [vmem:[#allocation1 + $0x10] sm:$0xff pattern:$0x73625140]
        %v471 = vld.sshfl [vmem:[#allocation1 + $0x18] sm:$0xff pattern:$0x73625140]
        %v472 = vld.sshfl [vmem:[#allocation1 + $0x20] sm:$0xff pattern:$0x73625140]
        %v473 = vld.sshfl [vmem:[#allocation1 + $0x28] sm:$0xff pattern:$0x73625140]
        %v474 = vld.sshfl [vmem:[#allocation1 + $0x30] sm:$0xff pattern:$0x73625140]
        %v475 = vld.sshfl [vmem:[#allocation1 + $0x38] sm:$0xff pattern:$0x73625140]
        %476 = vst [vmem:[#allocation1] ss:$4 sm:$0xff] %v295
        %477 = vst [vmem:[%s346] ss:$4 sm:$0xff] %v296
        %v478 = vld.sshfl [vmem:[#allocation1] sm:$0xff pattern:$0x73625140]
        %v479 = vld.sshfl [vmem:[#allocation1 + $0x8] sm:$0xff pattern:$0x73625140]
        %v480 = vld.sshfl [vmem:[#allocation1 + $0x10] sm:$0xff pattern:$0x73625140]
        %v481 = vld.sshfl [vmem:[#allocation1 + $0x18] sm:$0xff pattern:$0x73625140]
        %v482 = vld.sshfl [vmem:[#allocation1 + $0x20] sm:$0xff pattern:$0x73625140]
        %v483 = vld.sshfl [vmem:[#allocation1 + $0x28] sm:$0xff pattern:$0x73625140]
        %v484 = vld.sshfl [vmem:[#allocation1 + $0x30] sm:$0xff pattern:$0x73625140]
        %v485 = vld.sshfl [vmem:[#allocation1 + $0x38] sm:$0xff pattern:$0x73625140]
        %486 = vst [vmem:[#allocation1] ss:$4 sm:$0xff] %v297
        %487 = vst [vmem:[%s346] ss:$4 sm:$0xff] %v298
        %v488 = vld.sshfl [vmem:[#allocation1] sm:$0xff pattern:$0x73625140]
        %v489 = vld.sshfl [vmem:[#allocation1 + $0x8] sm:$0xff pattern:$0x73625140]
        %v490 = vld.sshfl [vmem:[#allocation1 + $0x10] sm:$0xff pattern:$0x73625140]
        %v491 = vld.sshfl [vmem:[#allocation1 + $0x18] sm:$0xff pattern:$0x73625140]
        %v492 = vld.sshfl [vmem:[#allocation1 + $0x20] sm:$0xff pattern:$0x73625140]
        %v493 = vld.sshfl [vmem:[#allocation1 + $0x28] sm:$0xff pattern:$0x73625140]
        %v494 = vld.sshfl [vmem:[#allocation1 + $0x30] sm:$0xff pattern:$0x73625140]
        %v495 = vld.sshfl [vmem:[#allocation1 + $0x38] sm:$0xff pattern:$0x73625140]
        %496 = vst [vmem:[#allocation1] ss:$4 sm:$0xff] %v299
        %497 = vst [vmem:[%s346] ss:$4 sm:$0xff] %v300
        %v498 = vld.sshfl [vmem:[#allocation1] sm:$0xff pattern:$0x73625140]
        %v499 = vld.sshfl [vmem:[#allocation1 + $0x8] sm:$0xff pattern:$0x73625140]
        %v500 = vld.sshfl [vmem:[#allocation1 + $0x10] sm:$0xff pattern:$0x73625140]
        %v501 = vld.sshfl [vmem:[#allocation1 + $0x18] sm:$0xff pattern:$0x73625140]
        %v502 = vld.sshfl [vmem:[#allocation1 + $0x20] sm:$0xff pattern:$0x73625140]
        %v503 = vld.sshfl [vmem:[#allocation1 + $0x28] sm:$0xff pattern:$0x73625140]
        %v504 = vld.sshfl [vmem:[#allocation1 + $0x30] sm:$0xff pattern:$0x73625140]
        %v505 = vld.sshfl [vmem:[#allocation1 + $0x38] sm:$0xff pattern:$0x73625140]
        %506 = vst [vmem:[#allocation1] ss:$4 sm:$0xff] %v301
        %507 = vst [vmem:[%s346] ss:$4 sm:$0xff] %v302
        %v508 = vld.sshfl [vmem:[#allocation1] sm:$0xff pattern:$0x73625140]
        %v509 = vld.sshfl [vmem:[#allocation1 + $0x8] sm:$0xff pattern:$0x73625140]
        %v510 = vld.sshfl [vmem:[#allocation1 + $0x10] sm:$0xff pattern:$0x73625140]
        %v511 = vld.sshfl [vmem:[#allocation1 + $0x18] sm:$0xff pattern:$0x73625140]
        %v512 = vld.sshfl [vmem:[#allocation1 + $0x20] sm:$0xff pattern:$0x73625140]
        %v513 = vld.sshfl [vmem:[#allocation1 + $0x28] sm:$0xff pattern:$0x73625140]
        %v514 = vld.sshfl [vmem:[#allocation1 + $0x30] sm:$0xff pattern:$0x73625140]
        %v515 = vld.sshfl [vmem:[#allocation1 + $0x38] sm:$0xff pattern:$0x73625140]
        %516 = vst [vmem:[#allocation1] ss:$4 sm:$0xff] %v303
        %517 = vst [vmem:[%s346] ss:$4 sm:$0xff] %v304
        %v518 = vld.sshfl [vmem:[#allocation1] sm:$0xff pattern:$0x73625140]
        %v519 = vld.sshfl [vmem:[#allocation1 + $0x8] sm:$0xff pattern:$0x73625140]
        %v520 = vld.sshfl [vmem:[#allocation1 + $0x10] sm:$0xff pattern:$0x73625140]
        %v521 = vld.sshfl [vmem:[#allocation1 + $0x18] sm:$0xff pattern:$0x73625140]
        %v522 = vld.sshfl [vmem:[#allocation1 + $0x20] sm:$0xff pattern:$0x73625140]
        %v523 = vld.sshfl [vmem:[#allocation1 + $0x28] sm:$0xff pattern:$0x73625140]
        %v524 = vld.sshfl [vmem:[#allocation1 + $0x30] sm:$0xff pattern:$0x73625140]
        %v525 = vld.sshfl [vmem:[#allocation1 + $0x38] sm:$0xff pattern:$0x73625140]
        %526 = vst [vmem:[#allocation1] ss:$4 sm:$0xff] %v305
        %527 = vst [vmem:[%s346] ss:$4 sm:$0xff] %v306
        %v528 = vld.sshfl [vmem:[#allocation1] sm:$0xff pattern:$0x73625140]
        %v529 = vld.sshfl [vmem:[#allocation1 + $0x8] sm:$0xff pattern:$0x73625140]
        %v530 = vld.sshfl [vmem:[#allocation1 + $0x10] sm:$0xff pattern:$0x73625140]
        %v531 = vld.sshfl [vmem:[#allocation1 + $0x18] sm:$0xff pattern:$0x73625140]
        %v532 = vld.sshfl [vmem:[#allocation1 + $0x20] sm:$0xff pattern:$0x73625140]
        %v533 = vld.sshfl [vmem:[#allocation1 + $0x28] sm:$0xff pattern:$0x73625140]
        %v684 = vpack.c.bf16 %v348, %v348
        %v685 = vpack.c.bf16 %v349, %v349
        %v686 = vpack.c.bf16 %v350, %v350
        %v687 = vpack.c.bf16 %v351, %v351
        %v688 = vpack.c.bf16 %v352, %v352
        %v689 = vpack.c.bf16 %v353, %v353
        %v690 = vpack.c.bf16 %v354, %v354
        %v691 = vpack.c.bf16 %v355, %v355
        %v692 = vpack.c.bf16 %v358, %v358
        %v693 = vpack.c.bf16 %v359, %v359
        %v694 = vpack.c.bf16 %v360, %v360
        %v695 = vpack.c.bf16 %v361, %v361
        %v696 = vpack.c.bf16 %v362, %v362
        %v697 = vpack.c.bf16 %v363, %v363
        %v698 = vpack.c.bf16 %v364, %v364
        %v699 = vpack.c.bf16 %v365, %v365
        %v700 = vpack.c.bf16 %v368, %v368
        %v701 = vpack.c.bf16 %v369, %v369
        %v702 = vpack.c.bf16 %v370, %v370
        %v703 = vpack.c.bf16 %v371, %v371
        %v704 = vpack.c.bf16 %v372, %v372
        %v705 = vpack.c.bf16 %v373, %v373
        %v706 = vpack.c.bf16 %v374, %v374
        %v707 = vpack.c.bf16 %v375, %v375
        %v708 = vpack.c.bf16 %v378, %v378
        %v709 = vpack.c.bf16 %v379, %v379
        %v710 = vpack.c.bf16 %v380, %v380
        %v711 = vpack.c.bf16 %v381, %v381
        %v712 = vpack.c.bf16 %v382, %v382
        %v713 = vpack.c.bf16 %v383, %v383
        %v714 = vpack.c.bf16 %v384, %v384
        %v715 = vpack.c.bf16 %v385, %v385
        %v716 = vpack.c.bf16 %v388, %v388
        %v717 = vpack.c.bf16 %v389, %v389
        %v718 = vpack.c.bf16 %v390, %v390
        %v719 = vpack.c.bf16 %v391, %v391
        %v720 = vpack.c.bf16 %v392, %v392
        %v721 = vpack.c.bf16 %v393, %v393
        %v722 = vpack.c.bf16 %v394, %v394
        %v723 = vpack.c.bf16 %v395, %v395
        %v724 = vpack.c.bf16 %v398, %v398
        %v725 = vpack.c.bf16 %v399, %v399
        %v726 = vpack.c.bf16 %v400, %v400
        %v727 = vpack.c.bf16 %v401, %v401
        %v728 = vpack.c.bf16 %v402, %v402
        %v729 = vpack.c.bf16 %v403, %v403
        %v730 = vpack.c.bf16 %v404, %v404
        %v731 = vpack.c.bf16 %v405, %v405
        %v732 = vpack.c.bf16 %v408, %v408
        %v733 = vpack.c.bf16 %v409, %v409
        %v734 = vpack.c.bf16 %v410, %v410
        %v735 = vpack.c.bf16 %v411, %v411
        %v736 = vpack.c.bf16 %v412, %v412
        %v737 = vpack.c.bf16 %v413, %v413
        %v738 = vpack.c.bf16 %v414, %v414
        %v739 = vpack.c.bf16 %v415, %v415
        %v740 = vpack.c.bf16 %v418, %v418
        %v741 = vpack.c.bf16 %v419, %v419
        %v742 = vpack.c.bf16 %v420, %v420
        %v743 = vpack.c.bf16 %v421, %v421
        %v744 = vpack.c.bf16 %v422, %v422
        %v745 = vpack.c.bf16 %v423, %v423
        %v746 = vpack.c.bf16 %v424, %v424
        %v747 = vpack.c.bf16 %v425, %v425
        %v748 = vpack.c.bf16 %v428, %v428
        %v749 = vpack.c.bf16 %v429, %v429
        %v750 = vpack.c.bf16 %v430, %v430
        %v751 = vpack.c.bf16 %v431, %v431
        %v752 = vpack.c.bf16 %v432, %v432
        %v753 = vpack.c.bf16 %v433, %v433
        %v754 = vpack.c.bf16 %v434, %v434
        %v755 = vpack.c.bf16 %v435, %v435
        %v756 = vpack.c.bf16 %v438, %v438
        %v757 = vpack.c.bf16 %v439, %v439
        %v758 = vpack.c.bf16 %v440, %v440
        %v759 = vpack.c.bf16 %v441, %v441
        %v760 = vpack.c.bf16 %v442, %v442
        %v761 = vpack.c.bf16 %v443, %v443
        %v762 = vpack.c.bf16 %v444, %v444
        %v763 = vpack.c.bf16 %v445, %v445
        %v764 = vpack.c.bf16 %v448, %v448
        %v765 = vpack.c.bf16 %v449, %v449
        %v766 = vpack.c.bf16 %v450, %v450
        %v767 = vpack.c.bf16 %v451, %v451
        %v768 = vpack.c.bf16 %v452, %v452
        %v769 = vpack.c.bf16 %v453, %v453
        %v770 = vpack.c.bf16 %v454, %v454
        %v771 = vpack.c.bf16 %v455, %v455
        %v772 = vpack.c.bf16 %v458, %v458
        %v773 = vpack.c.bf16 %v459, %v459
        %v774 = vpack.c.bf16 %v460, %v460
        %v775 = vpack.c.bf16 %v461, %v461
        %v776 = vpack.c.bf16 %v462, %v462
        %v777 = vpack.c.bf16 %v463, %v463
        %v778 = vpack.c.bf16 %v464, %v464
        %v779 = vpack.c.bf16 %v465, %v465
        %v780 = vpack.c.bf16 %v468, %v468
        %v781 = vpack.c.bf16 %v469, %v469
        %v782 = vpack.c.bf16 %v470, %v470
        %v783 = vpack.c.bf16 %v471, %v471
        %v784 = vpack.c.bf16 %v472, %v472
        %v785 = vpack.c.bf16 %v473, %v473
        %v786 = vpack.c.bf16 %v474, %v474
        %v787 = vpack.c.bf16 %v475, %v475
        %v788 = vpack.c.bf16 %v478, %v478
        %v789 = vpack.c.bf16 %v479, %v479
        %v790 = vpack.c.bf16 %v480, %v480
        %v791 = vpack.c.bf16 %v481, %v481
        %v792 = vpack.c.bf16 %v482, %v482
        %v793 = vpack.c.bf16 %v483, %v483
        %v794 = vpack.c.bf16 %v484, %v484
        %v795 = vpack.c.bf16 %v485, %v485
        %v796 = vpack.c.bf16 %v488, %v488
        %v797 = vpack.c.bf16 %v489, %v489
        %v798 = vpack.c.bf16 %v490, %v490
        %v799 = vpack.c.bf16 %v491, %v491
        %v800 = vpack.c.bf16 %v492, %v492
        %v801 = vpack.c.bf16 %v493, %v493
        %v802 = vpack.c.bf16 %v494, %v494
        %v803 = vpack.c.bf16 %v495, %v495
        %v804 = vpack.c.bf16 %v498, %v498
        %v805 = vpack.c.bf16 %v499, %v499
        %v806 = vpack.c.bf16 %v500, %v500
        %v807 = vpack.c.bf16 %v501, %v501
        %v808 = vpack.c.bf16 %v502, %v502
        %v809 = vpack.c.bf16 %v503, %v503
        %v810 = vpack.c.bf16 %v504, %v504
        %v811 = vpack.c.bf16 %v505, %v505
        %v812 = vpack.c.bf16 %v508, %v508
        %v813 = vpack.c.bf16 %v509, %v509
        %v814 = vpack.c.bf16 %v510, %v510
        %v815 = vpack.c.bf16 %v511, %v511
        %v816 = vpack.c.bf16 %v512, %v512
        %v817 = vpack.c.bf16 %v513, %v513
        %v818 = vpack.c.bf16 %v514, %v514
        %v819 = vpack.c.bf16 %v515, %v515
        %v820 = vpack.c.bf16 %v518, %v518
        %v821 = vpack.c.bf16 %v519, %v519
        %v822 = vpack.c.bf16 %v520, %v520
        %v823 = vpack.c.bf16 %v521, %v521
        %v824 = vpack.c.bf16 %v522, %v522
        %v825 = vpack.c.bf16 %v523, %v523
        %v826 = vpack.c.bf16 %v524, %v524
        %v827 = vpack.c.bf16 %v525, %v525
        %v828 = vpack.c.bf16 %v528, %v528
        %v829 = vpack.c.bf16 %v529, %v529
        %v830 = vpack.c.bf16 %v530, %v530
        %v831 = vpack.c.bf16 %v531, %v531
        %v832 = vpack.c.bf16 %v532, %v532
        %v833 = vpack.c.bf16 %v533, %v533
        %v834 = vld [vmem:[%s233] sm:$0xff]
        %v835 = vld [vmem:[%s233 + $0x8] sm:$0xff]
        %v836 = vld [vmem:[%s233 + $0x10] sm:$0xff]
        %v837 = vld [vmem:[%s233 + $0x18] sm:$0xff]
        %v838 = vld [vmem:[%s233 + $0x20] sm:$0xff]
        %v839 = vld [vmem:[%s233 + $0x28] sm:$0xff]
        %v840 = vld [vmem:[%s233 + $0x30] sm:$0xff]
        %v841 = vld [vmem:[%s233 + $0x38] sm:$0xff]
        %v842 = vld [vmem:[%s233 + $0x40] sm:$0xff]
        %v843 = vld [vmem:[%s233 + $0x48] sm:$0xff]
        %v844 = vld [vmem:[%s233 + $0x50] sm:$0xff]
        %v845 = vld [vmem:[%s233 + $0x58] sm:$0xff]
        %v846 = vld [vmem:[%s233 + $0x60] sm:$0xff]
        %v847 = vld [vmem:[%s233 + $0x68] sm:$0xff]
        %v848 = vld [vmem:[%s233 + $0x70] sm:$0xff]
        %v849 = vld [vmem:[%s233 + $0x78] sm:$0xff]
        %v850 = vld [vmem:[%s233 + $0x80] sm:$0xff]
        %v851 = vld [vmem:[%s233 + $0x88] sm:$0xff]
        %v852 = vld [vmem:[%s233 + $0x90] sm:$0xff]
        %v853 = vld [vmem:[%s233 + $0x98] sm:$0xff]
        %v854 = vld [vmem:[%s233 + $0xa0] sm:$0xff]
        %v855 = vld [vmem:[%s233 + $0xa8] sm:$0xff]
        %v856 = vld [vmem:[%s233 + $0xb0] sm:$0xff]
        %v857 = vld [vmem:[%s233 + $0xb8] sm:$0xff]
        %v858 = vld [vmem:[%s233 + $0xc0] sm:$0xff]
        %v859 = vld [vmem:[%s233 + $0xc8] sm:$0xff]
        %v860 = vld [vmem:[%s233 + $0xd0] sm:$0xff]
        %v861 = vld [vmem:[%s233 + $0xd8] sm:$0xff]
        %v862 = vld [vmem:[%s233 + $0xe0] sm:$0xff]
        %v863 = vld [vmem:[%s233 + $0xe8] sm:$0xff]
        %v864 = vld [vmem:[%s233 + $0xf0] sm:$0xff]
        %v865 = vld [vmem:[%s233 + $0xf8] sm:$0xff]
        %v866 = vld [vmem:[%s233 + $0x100] sm:$0xff]
        %v867 = vld [vmem:[%s233 + $0x108] sm:$0xff]
        %v868 = vld [vmem:[%s233 + $0x110] sm:$0xff]
        %v869 = vld [vmem:[%s233 + $0x118] sm:$0xff]
        %v870 = vld [vmem:[%s233 + $0x120] sm:$0xff]
        %v871 = vld [vmem:[%s233 + $0x128] sm:$0xff]
        %v872 = vld [vmem:[%s233 + $0x130] sm:$0xff]
        %v873 = vld [vmem:[%s233 + $0x138] sm:$0xff]
        %v874 = vld [vmem:[%s233 + $0x140] sm:$0xff]
        %v875 = vld [vmem:[%s233 + $0x148] sm:$0xff]
        %v876 = vld [vmem:[%s233 + $0x150] sm:$0xff]
        %v877 = vld [vmem:[%s233 + $0x158] sm:$0xff]
        %v878 = vld [vmem:[%s233 + $0x160] sm:$0xff]
        %v879 = vld [vmem:[%s233 + $0x168] sm:$0xff]
        %v880 = vld [vmem:[%s233 + $0x170] sm:$0xff]
        %v881 = vld [vmem:[%s233 + $0x178] sm:$0xff]
        %v882 = vld [vmem:[%s233 + $0x180] sm:$0xff]
        %v883 = vld [vmem:[%s233 + $0x188] sm:$0xff]
        %v884 = vld [vmem:[%s233 + $0x190] sm:$0xff]
        %v885 = vld [vmem:[%s233 + $0x198] sm:$0xff]
        %v886 = vld [vmem:[%s233 + $0x1a0] sm:$0xff]
        %v887 = vld [vmem:[%s233 + $0x1a8] sm:$0xff]
        %v888 = vld [vmem:[%s233 + $0x1b0] sm:$0xff]
        %v889 = vld [vmem:[%s233 + $0x1b8] sm:$0xff]
        %v890 = vld [vmem:[%s233 + $0x1c0] sm:$0xff]
        %v891 = vld [vmem:[%s233 + $0x1c8] sm:$0xff]
        %v892 = vld [vmem:[%s233 + $0x1d0] sm:$0xff]
        %v893 = vld [vmem:[%s233 + $0x1d8] sm:$0xff]
        %v894 = vld [vmem:[%s233 + $0x1e0] sm:$0xff]
        %v895 = vld [vmem:[%s233 + $0x1e8] sm:$0xff]
        %v896 = vld [vmem:[%s233 + $0x1f0] sm:$0xff]
        %v897 = vld [vmem:[%s233 + $0x1f8] sm:$0xff]
        %v898 = vld [vmem:[%s233 + $0x200] sm:$0xff]
        %v899 = vld [vmem:[%s233 + $0x208] sm:$0xff]
        %v900 = vld [vmem:[%s233 + $0x210] sm:$0xff]
        %v901 = vld [vmem:[%s233 + $0x218] sm:$0xff]
        %v902 = vld [vmem:[%s233 + $0x220] sm:$0xff]
        %v903 = vld [vmem:[%s233 + $0x228] sm:$0xff]
        %v904 = vld [vmem:[%s233 + $0x230] sm:$0xff]
        %v905 = vld [vmem:[%s233 + $0x238] sm:$0xff]
        %v906 = vld [vmem:[%s233 + $0x240] sm:$0xff]
        %v907 = vld [vmem:[%s233 + $0x248] sm:$0xff]
        %v908 = vld [vmem:[%s233 + $0x250] sm:$0xff]
        %v909 = vld [vmem:[%s233 + $0x258] sm:$0x11]
        %v910 = vld [vmem:[%s233 + $0x260] sm:$0x11]
        %v911 = vld [vmem:[%s233 + $0x268] sm:$0x11]
        %v912 = vld [vmem:[%s233 + $0x270] sm:$0x11]
        %v913 = vld [vmem:[%s233 + $0x278] sm:$0x11]
        %v914 = vld [vmem:[%s233 + $0x280] sm:$0x11]
        %v915 = vld [vmem:[%s233 + $0x288] sm:$0x11]
        %v916 = vld [vmem:[%s233 + $0x290] sm:$0x11]
        %v917 = vld [vmem:[%s233 + $0x298] sm:$0x11]
        %v918 = vld [vmem:[%s233 + $0x2a0] sm:$0x11]
        %v919 = vld [vmem:[%s233 + $0x2a8] sm:$0x11]
        %v920 = vld [vmem:[%s233 + $0x2b0] sm:$0x11]
        %v921 = vld [vmem:[%s233 + $0x2b8] sm:$0x11]
        %v922 = vld [vmem:[%s233 + $0x2c0] sm:$0x11]
        %v923 = vld [vmem:[%s233 + $0x2c8] sm:$0x11]
        %v924 = vld [vmem:[%s233 + $0x2d0] sm:$0x11]
        %v925 = vld [vmem:[%s233 + $0x2d8] sm:$0x11]
        %v926 = vld [vmem:[%s233 + $0x2e0] sm:$0x11]
        %v927 = vld [vmem:[%s233 + $0x2e8] sm:$0x11]
        %v928 = vld [vmem:[%s233 + $0x2f0] sm:$0x11]
        %v929 = vld [vmem:[%s233 + $0x2f8] sm:$0x11]
        %v930 = vld [vmem:[%s233 + $0x300] sm:$0x11]
        %v931 = vld [vmem:[%s233 + $0x308] sm:$0x11]
        %v932 = vld [vmem:[%s233 + $0x310] sm:$0x11]
        %v933 = vld [vmem:[%s233 + $0x318] sm:$0x11]
        %v934 = vld [vmem:[%s233 + $0x320] sm:$0x11]
        %v935 = vld [vmem:[%s233 + $0x328] sm:$0x11]
        %v936 = vld [vmem:[%s233 + $0x330] sm:$0x11]
        %v937 = vld [vmem:[%s233 + $0x338] sm:$0x11]
        %v938 = vld [vmem:[%s233 + $0x340] sm:$0x11]
        %v939 = vld [vmem:[%s233 + $0x348] sm:$0x11]
        %v940 = vld [vmem:[%s233 + $0x350] sm:$0x11]
        %v941 = vld [vmem:[%s233 + $0x358] sm:$0x11]
        %v942 = vld [vmem:[%s233 + $0x360] sm:$0x11]
        %v943 = vld [vmem:[%s233 + $0x368] sm:$0x11]
        %v944 = vld [vmem:[%s233 + $0x370] sm:$0x11]
        %v945 = vld [vmem:[%s233 + $0x378] sm:$0x11]
        %v946 = vld [vmem:[%s233 + $0x380] sm:$0x11]
        %v947 = vld [vmem:[%s233 + $0x388] sm:$0x11]
        %v948 = vld [vmem:[%s233 + $0x390] sm:$0x11]
        %v949 = vld [vmem:[%s233 + $0x398] sm:$0x11]
        %v950 = vld [vmem:[%s233 + $0x3a0] sm:$0x11]
        %v951 = vld [vmem:[%s233 + $0x3a8] sm:$0x11]
        %v952 = vld [vmem:[%s233 + $0x3b0] sm:$0x11]
        %v953 = vld [vmem:[%s233 + $0x3b8] sm:$0x11]
        %v954 = vld [vmem:[%s233 + $0x3c0] sm:$0x11]
        %v955 = vld [vmem:[%s233 + $0x3c8] sm:$0x11]
        %v956 = vld [vmem:[%s233 + $0x3d0] sm:$0x11]
        %v957 = vld [vmem:[%s233 + $0x3d8] sm:$0x11]
        %v958 = vld [vmem:[%s233 + $0x3e0] sm:$0x11]
        %v959 = vld [vmem:[%s233 + $0x3e8] sm:$0x11]
        %v960 = vld [vmem:[%s233 + $0x3f0] sm:$0x11]
        %v961 = vld [vmem:[%s233 + $0x3f8] sm:$0x11]
        %v962 = vld [vmem:[%s233 + $0x400] sm:$0x11]
        %v963 = vld [vmem:[%s233 + $0x408] sm:$0x11]
        %v964 = vld [vmem:[%s233 + $0x410] sm:$0x11]
        %v965 = vld [vmem:[%s233 + $0x418] sm:$0x11]
        %v966 = vld [vmem:[%s233 + $0x420] sm:$0x11]
        %v967 = vld [vmem:[%s233 + $0x428] sm:$0x11]
        %v968 = vld [vmem:[%s233 + $0x430] sm:$0x11]
        %v969 = vld [vmem:[%s233 + $0x438] sm:$0x11]
        %v970 = vld [vmem:[%s233 + $0x440] sm:$0x11]
        %v971 = vld [vmem:[%s233 + $0x448] sm:$0x11]
        %v972 = vld [vmem:[%s233 + $0x450] sm:$0x11]
        %v973 = vld [vmem:[%s233 + $0x458] sm:$0x11]
        %v974 = vld [vmem:[%s233 + $0x460] sm:$0x11]
        %v975 = vld [vmem:[%s233 + $0x468] sm:$0x11]
        %v976 = vld [vmem:[%s233 + $0x470] sm:$0x11]
        %v977 = vld [vmem:[%s233 + $0x478] sm:$0x11]
        %v978 = vld [vmem:[%s233 + $0x480] sm:$0x11]
        %v979 = vld [vmem:[%s233 + $0x488] sm:$0x11]
        %v980 = vld [vmem:[%s233 + $0x490] sm:$0x11]
        %v981 = vld [vmem:[%s233 + $0x498] sm:$0x11]
        %v982 = vld [vmem:[%s233 + $0x4a0] sm:$0x11]
        %v983 = vld [vmem:[%s233 + $0x4a8] sm:$0x11]
        %v1134 = vunpack.c.l.b16 %v834
        %v1135 = vunpack.c.h.b16 %v834
        %v1136 = vunpack.c.l.b16 %v835
        %v1137 = vunpack.c.h.b16 %v835
        %v1138 = vunpack.c.l.b16 %v836
        %v1139 = vunpack.c.h.b16 %v836
        %v1140 = vunpack.c.l.b16 %v837
        %v1141 = vunpack.c.h.b16 %v837
        %v1142 = vunpack.c.l.b16 %v838
        %v1143 = vunpack.c.h.b16 %v838
        %v1144 = vunpack.c.l.b16 %v839
        %v1145 = vunpack.c.h.b16 %v839
        %v1146 = vunpack.c.l.b16 %v840
        %v1147 = vunpack.c.h.b16 %v840
        %v1148 = vunpack.c.l.b16 %v841
        %v1149 = vunpack.c.h.b16 %v841
        %v1150 = vunpack.c.l.b16 %v842
        %v1151 = vunpack.c.h.b16 %v842
        %v1152 = vunpack.c.l.b16 %v843
        %v1153 = vunpack.c.h.b16 %v843
        %v1154 = vunpack.c.l.b16 %v844
        %v1155 = vunpack.c.h.b16 %v844
        %v1156 = vunpack.c.l.b16 %v845
        %v1157 = vunpack.c.h.b16 %v845
        %v1158 = vunpack.c.l.b16 %v846
        %v1159 = vunpack.c.h.b16 %v846
        %v1160 = vunpack.c.l.b16 %v847
        %v1161 = vunpack.c.h.b16 %v847
        %v1162 = vunpack.c.l.b16 %v848
        %v1163 = vunpack.c.h.b16 %v848
        %v1164 = vunpack.c.l.b16 %v849
        %v1165 = vunpack.c.h.b16 %v849
        %v1166 = vunpack.c.l.b16 %v850
        %v1167 = vunpack.c.h.b16 %v850
        %v1168 = vunpack.c.l.b16 %v851
        %v1169 = vunpack.c.h.b16 %v851
        %v1170 = vunpack.c.l.b16 %v852
        %v1171 = vunpack.c.h.b16 %v852
        %v1172 = vunpack.c.l.b16 %v853
        %v1173 = vunpack.c.h.b16 %v853
        %v1174 = vunpack.c.l.b16 %v854
        %v1175 = vunpack.c.h.b16 %v854
        %v1176 = vunpack.c.l.b16 %v855
        %v1177 = vunpack.c.h.b16 %v855
        %v1178 = vunpack.c.l.b16 %v856
        %v1179 = vunpack.c.h.b16 %v856
        %v1180 = vunpack.c.l.b16 %v857
        %v1181 = vunpack.c.h.b16 %v857
        %v1182 = vunpack.c.l.b16 %v858
        %v1183 = vunpack.c.h.b16 %v858
        %v1184 = vunpack.c.l.b16 %v859
        %v1185 = vunpack.c.h.b16 %v859
        %v1186 = vunpack.c.l.b16 %v860
        %v1187 = vunpack.c.h.b16 %v860
        %v1188 = vunpack.c.l.b16 %v861
        %v1189 = vunpack.c.h.b16 %v861
        %v1190 = vunpack.c.l.b16 %v862
        %v1191 = vunpack.c.h.b16 %v862
        %v1192 = vunpack.c.l.b16 %v863
        %v1193 = vunpack.c.h.b16 %v863
        %v1194 = vunpack.c.l.b16 %v864
        %v1195 = vunpack.c.h.b16 %v864
        %v1196 = vunpack.c.l.b16 %v865
        %v1197 = vunpack.c.h.b16 %v865
        %v1198 = vunpack.c.l.b16 %v866
        %v1199 = vunpack.c.h.b16 %v866
        %v1200 = vunpack.c.l.b16 %v867
        %v1201 = vunpack.c.h.b16 %v867
        %v1202 = vunpack.c.l.b16 %v868
        %v1203 = vunpack.c.h.b16 %v868
        %v1204 = vunpack.c.l.b16 %v869
        %v1205 = vunpack.c.h.b16 %v869
        %v1206 = vunpack.c.l.b16 %v870
        %v1207 = vunpack.c.h.b16 %v870
        %v1208 = vunpack.c.l.b16 %v871
        %v1209 = vunpack.c.h.b16 %v871
        %v1210 = vunpack.c.l.b16 %v872
        %v1211 = vunpack.c.h.b16 %v872
        %v1212 = vunpack.c.l.b16 %v873
        %v1213 = vunpack.c.h.b16 %v873
        %v1214 = vunpack.c.l.b16 %v874
        %v1215 = vunpack.c.h.b16 %v874
        %v1216 = vunpack.c.l.b16 %v875
        %v1217 = vunpack.c.h.b16 %v875
        %v1218 = vunpack.c.l.b16 %v876
        %v1219 = vunpack.c.h.b16 %v876
        %v1220 = vunpack.c.l.b16 %v877
        %v1221 = vunpack.c.h.b16 %v877
        %v1222 = vunpack.c.l.b16 %v878
        %v1223 = vunpack.c.h.b16 %v878
        %v1224 = vunpack.c.l.b16 %v879
        %v1225 = vunpack.c.h.b16 %v879
        %v1226 = vunpack.c.l.b16 %v880
        %v1227 = vunpack.c.h.b16 %v880
        %v1228 = vunpack.c.l.b16 %v881
        %v1229 = vunpack.c.h.b16 %v881
        %v1230 = vunpack.c.l.b16 %v882
        %v1231 = vunpack.c.h.b16 %v882
        %v1232 = vunpack.c.l.b16 %v883
        %v1233 = vunpack.c.h.b16 %v883
        %v1234 = vunpack.c.l.b16 %v884
        %v1235 = vunpack.c.h.b16 %v884
        %v1236 = vunpack.c.l.b16 %v885
        %v1237 = vunpack.c.h.b16 %v885
        %v1238 = vunpack.c.l.b16 %v886
        %v1239 = vunpack.c.h.b16 %v886
        %v1240 = vunpack.c.l.b16 %v887
        %v1241 = vunpack.c.h.b16 %v887
        %v1242 = vunpack.c.l.b16 %v888
        %v1243 = vunpack.c.h.b16 %v888
        %v1244 = vunpack.c.l.b16 %v889
        %v1245 = vunpack.c.h.b16 %v889
        %v1246 = vunpack.c.l.b16 %v890
        %v1247 = vunpack.c.h.b16 %v890
        %v1248 = vunpack.c.l.b16 %v891
        %v1249 = vunpack.c.h.b16 %v891
        %v1250 = vunpack.c.l.b16 %v892
        %v1251 = vunpack.c.h.b16 %v892
        %v1252 = vunpack.c.l.b16 %v893
        %v1253 = vunpack.c.h.b16 %v893
        %v1254 = vunpack.c.l.b16 %v894
        %v1255 = vunpack.c.h.b16 %v894
        %v1256 = vunpack.c.l.b16 %v895
        %v1257 = vunpack.c.h.b16 %v895
        %v1258 = vunpack.c.l.b16 %v896
        %v1259 = vunpack.c.h.b16 %v896
        %v1260 = vunpack.c.l.b16 %v897
        %v1261 = vunpack.c.h.b16 %v897
        %v1262 = vunpack.c.l.b16 %v898
        %v1263 = vunpack.c.h.b16 %v898
        %v1264 = vunpack.c.l.b16 %v899
        %v1265 = vunpack.c.h.b16 %v899
        %v1266 = vunpack.c.l.b16 %v900
        %v1267 = vunpack.c.h.b16 %v900
        %v1268 = vunpack.c.l.b16 %v901
        %v1269 = vunpack.c.h.b16 %v901
        %v1270 = vunpack.c.l.b16 %v902
        %v1271 = vunpack.c.h.b16 %v902
        %v1272 = vunpack.c.l.b16 %v903
        %v1273 = vunpack.c.h.b16 %v903
        %v1274 = vunpack.c.l.b16 %v904
        %v1275 = vunpack.c.h.b16 %v904
        %v1276 = vunpack.c.l.b16 %v905
        %v1277 = vunpack.c.h.b16 %v905
        %v1278 = vunpack.c.l.b16 %v906
        %v1279 = vunpack.c.h.b16 %v906
        %v1280 = vunpack.c.l.b16 %v907
        %v1281 = vunpack.c.h.b16 %v907
        %v1282 = vunpack.c.l.b16 %v908
        %v1283 = vunpack.c.h.b16 %v908
        %v1284 = vunpack.c.l.b16 %v909
        %v1285 = vunpack.c.h.b16 %v909
        %v1286 = vunpack.c.l.b16 %v910
        %v1287 = vunpack.c.h.b16 %v910
        %v1288 = vunpack.c.l.b16 %v911
        %v1289 = vunpack.c.h.b16 %v911
        %v1290 = vunpack.c.l.b16 %v912
        %v1291 = vunpack.c.h.b16 %v912
        %v1292 = vunpack.c.l.b16 %v913
        %v1293 = vunpack.c.h.b16 %v913
        %v1294 = vunpack.c.l.b16 %v914
        %v1295 = vunpack.c.h.b16 %v914
        %v1296 = vunpack.c.l.b16 %v915
        %v1297 = vunpack.c.h.b16 %v915
        %v1298 = vunpack.c.l.b16 %v916
        %v1299 = vunpack.c.h.b16 %v916
        %v1300 = vunpack.c.l.b16 %v917
        %v1301 = vunpack.c.h.b16 %v917
        %v1302 = vunpack.c.l.b16 %v918
        %v1303 = vunpack.c.h.b16 %v918
        %v1304 = vunpack.c.l.b16 %v919
        %v1305 = vunpack.c.h.b16 %v919
        %v1306 = vunpack.c.l.b16 %v920
        %v1307 = vunpack.c.h.b16 %v920
        %v1308 = vunpack.c.l.b16 %v921
        %v1309 = vunpack.c.h.b16 %v921
        %v1310 = vunpack.c.l.b16 %v922
        %v1311 = vunpack.c.h.b16 %v922
        %v1312 = vunpack.c.l.b16 %v923
        %v1313 = vunpack.c.h.b16 %v923
        %v1314 = vunpack.c.l.b16 %v924
        %v1315 = vunpack.c.h.b16 %v924
        %v1316 = vunpack.c.l.b16 %v925
        %v1317 = vunpack.c.h.b16 %v925
        %v1318 = vunpack.c.l.b16 %v926
        %v1319 = vunpack.c.h.b16 %v926
        %v1320 = vunpack.c.l.b16 %v927
        %v1321 = vunpack.c.h.b16 %v927
        %v1322 = vunpack.c.l.b16 %v928
        %v1323 = vunpack.c.h.b16 %v928
        %v1324 = vunpack.c.l.b16 %v929
        %v1325 = vunpack.c.h.b16 %v929
        %v1326 = vunpack.c.l.b16 %v930
        %v1327 = vunpack.c.h.b16 %v930
        %v1328 = vunpack.c.l.b16 %v931
        %v1329 = vunpack.c.h.b16 %v931
        %v1330 = vunpack.c.l.b16 %v932
        %v1331 = vunpack.c.h.b16 %v932
        %v1332 = vunpack.c.l.b16 %v933
        %v1333 = vunpack.c.h.b16 %v933
        %v1334 = vunpack.c.l.b16 %v934
        %v1335 = vunpack.c.h.b16 %v934
        %v1336 = vunpack.c.l.b16 %v935
        %v1337 = vunpack.c.h.b16 %v935
        %v1338 = vunpack.c.l.b16 %v936
        %v1339 = vunpack.c.h.b16 %v936
        %v1340 = vunpack.c.l.b16 %v937
        %v1341 = vunpack.c.h.b16 %v937
        %v1342 = vunpack.c.l.b16 %v938
        %v1343 = vunpack.c.h.b16 %v938
        %v1344 = vunpack.c.l.b16 %v939
        %v1345 = vunpack.c.h.b16 %v939
        %v1346 = vunpack.c.l.b16 %v940
        %v1347 = vunpack.c.h.b16 %v940
        %v1348 = vunpack.c.l.b16 %v941
        %v1349 = vunpack.c.h.b16 %v941
        %v1350 = vunpack.c.l.b16 %v942
        %v1351 = vunpack.c.h.b16 %v942
        %v1352 = vunpack.c.l.b16 %v943
        %v1353 = vunpack.c.h.b16 %v943
        %v1354 = vunpack.c.l.b16 %v944
        %v1355 = vunpack.c.h.b16 %v944
        %v1356 = vunpack.c.l.b16 %v945
        %v1357 = vunpack.c.h.b16 %v945
        %v1358 = vunpack.c.l.b16 %v946
        %v1359 = vunpack.c.h.b16 %v946
        %v1360 = vunpack.c.l.b16 %v947
        %v1361 = vunpack.c.h.b16 %v947
        %v1362 = vunpack.c.l.b16 %v948
        %v1363 = vunpack.c.h.b16 %v948
        %v1364 = vunpack.c.l.b16 %v949
        %v1365 = vunpack.c.h.b16 %v949
        %v1366 = vunpack.c.l.b16 %v950
        %v1367 = vunpack.c.h.b16 %v950
        %v1368 = vunpack.c.l.b16 %v951
        %v1369 = vunpack.c.h.b16 %v951
        %v1370 = vunpack.c.l.b16 %v952
        %v1371 = vunpack.c.h.b16 %v952
        %v1372 = vunpack.c.l.b16 %v953
        %v1373 = vunpack.c.h.b16 %v953
        %v1374 = vunpack.c.l.b16 %v954
        %v1375 = vunpack.c.h.b16 %v954
        %v1376 = vunpack.c.l.b16 %v955
        %v1377 = vunpack.c.h.b16 %v955
        %v1378 = vunpack.c.l.b16 %v956
        %v1379 = vunpack.c.h.b16 %v956
        %v1380 = vunpack.c.l.b16 %v957
        %v1381 = vunpack.c.h.b16 %v957
        %v1382 = vunpack.c.l.b16 %v958
        %v1383 = vunpack.c.h.b16 %v958
        %v1384 = vunpack.c.l.b16 %v959
        %v1385 = vunpack.c.h.b16 %v959
        %v1386 = vunpack.c.l.b16 %v960
        %v1387 = vunpack.c.h.b16 %v960
        %v1388 = vunpack.c.l.b16 %v961
        %v1389 = vunpack.c.h.b16 %v961
        %v1390 = vunpack.c.l.b16 %v962
        %v1391 = vunpack.c.h.b16 %v962
        %v1392 = vunpack.c.l.b16 %v963
        %v1393 = vunpack.c.h.b16 %v963
        %v1394 = vunpack.c.l.b16 %v964
        %v1395 = vunpack.c.h.b16 %v964
        %v1396 = vunpack.c.l.b16 %v965
        %v1397 = vunpack.c.h.b16 %v965
        %v1398 = vunpack.c.l.b16 %v966
        %v1399 = vunpack.c.h.b16 %v966
        %v1400 = vunpack.c.l.b16 %v967
        %v1401 = vunpack.c.h.b16 %v967
        %v1402 = vunpack.c.l.b16 %v968
        %v1403 = vunpack.c.h.b16 %v968
        %v1404 = vunpack.c.l.b16 %v969
        %v1405 = vunpack.c.h.b16 %v969
        %v1406 = vunpack.c.l.b16 %v970
        %v1407 = vunpack.c.h.b16 %v970
        %v1408 = vunpack.c.l.b16 %v971
        %v1409 = vunpack.c.h.b16 %v971
        %v1410 = vunpack.c.l.b16 %v972
        %v1411 = vunpack.c.h.b16 %v972
        %v1412 = vunpack.c.l.b16 %v973
        %v1413 = vunpack.c.h.b16 %v973
        %v1414 = vunpack.c.l.b16 %v974
        %v1415 = vunpack.c.h.b16 %v974
        %v1416 = vunpack.c.l.b16 %v975
        %v1417 = vunpack.c.h.b16 %v975
        %v1418 = vunpack.c.l.b16 %v976
        %v1419 = vunpack.c.h.b16 %v976
        %v1420 = vunpack.c.l.b16 %v977
        %v1421 = vunpack.c.h.b16 %v977
        %v1422 = vunpack.c.l.b16 %v978
        %v1423 = vunpack.c.h.b16 %v978
        %v1424 = vunpack.c.l.b16 %v979
        %v1425 = vunpack.c.h.b16 %v979
        %v1426 = vunpack.c.l.b16 %v980
        %v1427 = vunpack.c.h.b16 %v980
        %v1428 = vunpack.c.l.b16 %v981
        %v1429 = vunpack.c.h.b16 %v981
        %v1430 = vunpack.c.l.b16 %v982
        %v1431 = vunpack.c.h.b16 %v982
        %v1432 = vunpack.c.l.b16 %v983
        %v1433 = vunpack.c.h.b16 %v983
        %v1434 = vpack.c.b16 %v1284, %v1134
        %v1435 = vpack.c.b16 %v1285, %v1135
        %v1436 = vpack.c.b16 %v1286, %v1136
        %v1437 = vpack.c.b16 %v1287, %v1137
        %v1438 = vpack.c.b16 %v1288, %v1138
        %v1439 = vpack.c.b16 %v1289, %v1139
        %v1440 = vpack.c.b16 %v1290, %v1140
        %v1441 = vpack.c.b16 %v1291, %v1141
        %v1442 = vpack.c.b16 %v1292, %v1142
        %v1443 = vpack.c.b16 %v1293, %v1143
        %v1444 = vpack.c.b16 %v1294, %v1144
        %v1445 = vpack.c.b16 %v1295, %v1145
        %v1446 = vpack.c.b16 %v1296, %v1146
        %v1447 = vpack.c.b16 %v1297, %v1147
        %v1448 = vpack.c.b16 %v1298, %v1148
        %v1449 = vpack.c.b16 %v1299, %v1149
        %v1450 = vpack.c.b16 %v1300, %v1150
        %v1451 = vpack.c.b16 %v1301, %v1151
        %v1452 = vpack.c.b16 %v1302, %v1152
        %v1453 = vpack.c.b16 %v1303, %v1153
        %v1454 = vpack.c.b16 %v1304, %v1154
        %v1455 = vpack.c.b16 %v1305, %v1155
        %v1456 = vpack.c.b16 %v1306, %v1156
        %v1457 = vpack.c.b16 %v1307, %v1157
        %v1458 = vpack.c.b16 %v1308, %v1158
        %v1459 = vpack.c.b16 %v1309, %v1159
        %v1460 = vpack.c.b16 %v1310, %v1160
        %v1461 = vpack.c.b16 %v1311, %v1161
        %v1462 = vpack.c.b16 %v1312, %v1162
        %v1463 = vpack.c.b16 %v1313, %v1163
        %v1464 = vpack.c.b16 %v1314, %v1164
        %v1465 = vpack.c.b16 %v1315, %v1165
        %v1466 = vpack.c.b16 %v1316, %v1166
        %v1467 = vpack.c.b16 %v1317, %v1167
        %v1468 = vpack.c.b16 %v1318, %v1168
        %v1469 = vpack.c.b16 %v1319, %v1169
        %v1470 = vpack.c.b16 %v1320, %v1170
        %v1471 = vpack.c.b16 %v1321, %v1171
        %v1472 = vpack.c.b16 %v1322, %v1172
        %v1473 = vpack.c.b16 %v1323, %v1173
        %v1474 = vpack.c.b16 %v1324, %v1174
        %v1475 = vpack.c.b16 %v1325, %v1175
        %v1476 = vpack.c.b16 %v1326, %v1176
        %v1477 = vpack.c.b16 %v1327, %v1177
        %v1478 = vpack.c.b16 %v1328, %v1178
        %v1479 = vpack.c.b16 %v1329, %v1179
        %v1480 = vpack.c.b16 %v1330, %v1180
        %v1481 = vpack.c.b16 %v1331, %v1181
        %v1482 = vpack.c.b16 %v1332, %v1182
        %v1483 = vpack.c.b16 %v1333, %v1183
        %v1484 = vpack.c.b16 %v1334, %v1184
        %v1485 = vpack.c.b16 %v1335, %v1185
        %v1486 = vpack.c.b16 %v1336, %v1186
        %v1487 = vpack.c.b16 %v1337, %v1187
        %v1488 = vpack.c.b16 %v1338, %v1188
        %v1489 = vpack.c.b16 %v1339, %v1189
        %v1490 = vpack.c.b16 %v1340, %v1190
        %v1491 = vpack.c.b16 %v1341, %v1191
        %v1492 = vpack.c.b16 %v1342, %v1192
        %v1493 = vpack.c.b16 %v1343, %v1193
        %v1494 = vpack.c.b16 %v1344, %v1194
        %v1495 = vpack.c.b16 %v1345, %v1195
        %v1496 = vpack.c.b16 %v1346, %v1196
        %v1497 = vpack.c.b16 %v1347, %v1197
        %v1498 = vpack.c.b16 %v1348, %v1198
        %v1499 = vpack.c.b16 %v1349, %v1199
        %v1500 = vpack.c.b16 %v1350, %v1200
        %v1501 = vpack.c.b16 %v1351, %v1201
        %v1502 = vpack.c.b16 %v1352, %v1202
        %v1503 = vpack.c.b16 %v1353, %v1203
        %v1504 = vpack.c.b16 %v1354, %v1204
        %v1505 = vpack.c.b16 %v1355, %v1205
        %v1506 = vpack.c.b16 %v1356, %v1206
        %v1507 = vpack.c.b16 %v1357, %v1207
        %v1508 = vpack.c.b16 %v1358, %v1208
        %v1509 = vpack.c.b16 %v1359, %v1209
        %v1510 = vpack.c.b16 %v1360, %v1210
        %v1511 = vpack.c.b16 %v1361, %v1211
        %v1512 = vpack.c.b16 %v1362, %v1212
        %v1513 = vpack.c.b16 %v1363, %v1213
        %v1514 = vpack.c.b16 %v1364, %v1214
        %v1515 = vpack.c.b16 %v1365, %v1215
        %v1516 = vpack.c.b16 %v1366, %v1216
        %v1517 = vpack.c.b16 %v1367, %v1217
        %v1518 = vpack.c.b16 %v1368, %v1218
        %v1519 = vpack.c.b16 %v1369, %v1219
        %v1520 = vpack.c.b16 %v1370, %v1220
        %v1521 = vpack.c.b16 %v1371, %v1221
        %v1522 = vpack.c.b16 %v1372, %v1222
        %v1523 = vpack.c.b16 %v1373, %v1223
        %v1524 = vpack.c.b16 %v1374, %v1224
        %v1525 = vpack.c.b16 %v1375, %v1225
        %v1526 = vpack.c.b16 %v1376, %v1226
        %v1527 = vpack.c.b16 %v1377, %v1227
        %v1528 = vpack.c.b16 %v1378, %v1228
        %v1529 = vpack.c.b16 %v1379, %v1229
        %v1530 = vpack.c.b16 %v1380, %v1230
        %v1531 = vpack.c.b16 %v1381, %v1231
        %v1532 = vpack.c.b16 %v1382, %v1232
        %v1533 = vpack.c.b16 %v1383, %v1233
        %v1534 = vpack.c.b16 %v1384, %v1234
        %v1535 = vpack.c.b16 %v1385, %v1235
        %v1536 = vpack.c.b16 %v1386, %v1236
        %v1537 = vpack.c.b16 %v1387, %v1237
        %v1538 = vpack.c.b16 %v1388, %v1238
        %v1539 = vpack.c.b16 %v1389, %v1239
        %v1540 = vpack.c.b16 %v1390, %v1240
        %v1541 = vpack.c.b16 %v1391, %v1241
        %v1542 = vpack.c.b16 %v1392, %v1242
        %v1543 = vpack.c.b16 %v1393, %v1243
        %v1544 = vpack.c.b16 %v1394, %v1244
        %v1545 = vpack.c.b16 %v1395, %v1245
        %v1546 = vpack.c.b16 %v1396, %v1246
        %v1547 = vpack.c.b16 %v1397, %v1247
        %v1548 = vpack.c.b16 %v1398, %v1248
        %v1549 = vpack.c.b16 %v1399, %v1249
        %v1550 = vpack.c.b16 %v1400, %v1250
        %v1551 = vpack.c.b16 %v1401, %v1251
        %v1552 = vpack.c.b16 %v1402, %v1252
        %v1553 = vpack.c.b16 %v1403, %v1253
        %v1554 = vpack.c.b16 %v1404, %v1254
        %v1555 = vpack.c.b16 %v1405, %v1255
        %v1556 = vpack.c.b16 %v1406, %v1256
        %v1557 = vpack.c.b16 %v1407, %v1257
        %v1558 = vpack.c.b16 %v1408, %v1258
        %v1559 = vpack.c.b16 %v1409, %v1259
        %v1560 = vpack.c.b16 %v1410, %v1260
        %v1561 = vpack.c.b16 %v1411, %v1261
        %v1562 = vpack.c.b16 %v1412, %v1262
        %v1563 = vpack.c.b16 %v1413, %v1263
        %v1564 = vpack.c.b16 %v1414, %v1264
        %v1565 = vpack.c.b16 %v1415, %v1265
        %v1566 = vpack.c.b16 %v1416, %v1266
        %v1567 = vpack.c.b16 %v1417, %v1267
        %v1568 = vpack.c.b16 %v1418, %v1268
        %v1569 = vpack.c.b16 %v1419, %v1269
        %v1570 = vpack.c.b16 %v1420, %v1270
        %v1571 = vpack.c.b16 %v1421, %v1271
        %v1572 = vpack.c.b16 %v1422, %v1272
        %v1573 = vpack.c.b16 %v1423, %v1273
        %v1574 = vpack.c.b16 %v1424, %v1274
        %v1575 = vpack.c.b16 %v1425, %v1275
        %v1576 = vpack.c.b16 %v1426, %v1276
        %v1577 = vpack.c.b16 %v1427, %v1277
        %v1578 = vpack.c.b16 %v1428, %v1278
        %v1579 = vpack.c.b16 %v1429, %v1279
        %v1580 = vpack.c.b16 %v1430, %v1280
        %v1581 = vpack.c.b16 %v1431, %v1281
        %v1582 = vpack.c.b16 %v1432, %v1282
        %v1583 = vpack.c.b16 %v1433, %v1283
        %1734 = vmatpush.bf16.xpose.msra.mxu0 0
        %1735 = vmatpush.bf16.xpose.msra.mxu0 0
        %1736 = vmatpush.bf16.xpose.msra.mxu0 0
        %1737 = vmatpush.bf16.xpose.msra.mxu0 0
        %1738 = vmatpush.bf16.xpose.msra.mxu0 0
        %1739 = vmatpush.bf16.xpose.msra.mxu0 0
        %1740 = vmatpush.bf16.xpose.msra.mxu0 0
        %1741 = vmatpush.bf16.xpose.msra.mxu0 %v1434
        %1742 = vmatmul.bf16.gmra.mxu0 %v684
        %v1743 = vpop.f32.mrf.mxu0
        %v1744 = vadd.f32 0.0, %v1743
        %v1745 = vpop.f32.mrf.mxu0
        %1746 = vdwg.mxu0
        %1747 = vmatpush.bf16.xpose.msra.mxu0 0
        %1748 = vmatpush.bf16.xpose.msra.mxu0 0
        %1749 = vmatpush.bf16.xpose.msra.mxu0 0
        %1750 = vmatpush.bf16.xpose.msra.mxu0 0
        %1751 = vmatpush.bf16.xpose.msra.mxu0 0
        %1752 = vmatpush.bf16.xpose.msra.mxu0 0
        %1753 = vmatpush.bf16.xpose.msra.mxu0 0
        %1754 = vmatpush.bf16.xpose.msra.mxu0 %v1435
        %1755 = vmatmul.bf16.gmra.mxu0 %v685
        %v1756 = vpop.f32.mrf.mxu0
        %v1757 = vadd.f32 %v1744, %v1756
        %v1758 = vpop.f32.mrf.mxu0
        %1759 = vdwg.mxu0
        %1760 = vmatpush.bf16.xpose.msra.mxu0 0
        %1761 = vmatpush.bf16.xpose.msra.mxu0 0
        %1762 = vmatpush.bf16.xpose.msra.mxu0 0
        %1763 = vmatpush.bf16.xpose.msra.mxu0 0
        %1764 = vmatpush.bf16.xpose.msra.mxu0 0
        %1765 = vmatpush.bf16.xpose.msra.mxu0 0
        %1766 = vmatpush.bf16.xpose.msra.mxu0 0
        %1767 = vmatpush.bf16.xpose.msra.mxu0 %v1436
        %1768 = vmatmul.bf16.gmra.mxu0 %v686
        %v1769 = vpop.f32.mrf.mxu0
        %v1770 = vadd.f32 %v1757, %v1769
        %v1771 = vpop.f32.mrf.mxu0
        %1772 = vdwg.mxu0
        %1773 = vmatpush.bf16.xpose.msra.mxu0 0
        %1774 = vmatpush.bf16.xpose.msra.mxu0 0
        %1775 = vmatpush.bf16.xpose.msra.mxu0 0
        %1776 = vmatpush.bf16.xpose.msra.mxu0 0
        %1777 = vmatpush.bf16.xpose.msra.mxu0 0
        %1778 = vmatpush.bf16.xpose.msra.mxu0 0
        %1779 = vmatpush.bf16.xpose.msra.mxu0 0
        %1780 = vmatpush.bf16.xpose.msra.mxu0 %v1437
        %1781 = vmatmul.bf16.gmra.mxu0 %v687
        %v1782 = vpop.f32.mrf.mxu0
        %v1783 = vadd.f32 %v1770, %v1782
        %v1784 = vpop.f32.mrf.mxu0
        %1785 = vdwg.mxu0
        %1786 = vmatpush.bf16.xpose.msra.mxu0 0
        %1787 = vmatpush.bf16.xpose.msra.mxu0 0
        %1788 = vmatpush.bf16.xpose.msra.mxu0 0
        %1789 = vmatpush.bf16.xpose.msra.mxu0 0
        %1790 = vmatpush.bf16.xpose.msra.mxu0 0
        %1791 = vmatpush.bf16.xpose.msra.mxu0 0
        %1792 = vmatpush.bf16.xpose.msra.mxu0 0
        %1793 = vmatpush.bf16.xpose.msra.mxu0 %v1438
        %1794 = vmatmul.bf16.gmra.mxu0 %v688
        %v1795 = vpop.f32.mrf.mxu0
        %v1796 = vadd.f32 %v1783, %v1795
        %v1797 = vpop.f32.mrf.mxu0
        %1798 = vdwg.mxu0
        %1799 = vmatpush.bf16.xpose.msra.mxu0 0
        %1800 = vmatpush.bf16.xpose.msra.mxu0 0
        %1801 = vmatpush.bf16.xpose.msra.mxu0 0
        %1802 = vmatpush.bf16.xpose.msra.mxu0 0
        %1803 = vmatpush.bf16.xpose.msra.mxu0 0
        %1804 = vmatpush.bf16.xpose.msra.mxu0 0
        %1805 = vmatpush.bf16.xpose.msra.mxu0 0
        %1806 = vmatpush.bf16.xpose.msra.mxu0 %v1439
        %1807 = vmatmul.bf16.gmra.mxu0 %v689
        %v1808 = vpop.f32.mrf.mxu0
        %v1809 = vadd.f32 %v1796, %v1808
        %v1810 = vpop.f32.mrf.mxu0
        %1811 = vdwg.mxu0
        %1812 = vmatpush.bf16.xpose.msra.mxu0 0
        %1813 = vmatpush.bf16.xpose.msra.mxu0 0
        %1814 = vmatpush.bf16.xpose.msra.mxu0 0
        %1815 = vmatpush.bf16.xpose.msra.mxu0 0
        %1816 = vmatpush.bf16.xpose.msra.mxu0 0
        %1817 = vmatpush.bf16.xpose.msra.mxu0 0
        %1818 = vmatpush.bf16.xpose.msra.mxu0 0
        %1819 = vmatpush.bf16.xpose.msra.mxu0 %v1440
        %1820 = vmatmul.bf16.gmra.mxu0 %v690
        %v1821 = vpop.f32.mrf.mxu0
        %v1822 = vadd.f32 %v1809, %v1821
        %v1823 = vpop.f32.mrf.mxu0
        %1824 = vdwg.mxu0
        %1825 = vmatpush.bf16.xpose.msra.mxu0 0
        %1826 = vmatpush.bf16.xpose.msra.mxu0 0
        %1827 = vmatpush.bf16.xpose.msra.mxu0 0
        %1828 = vmatpush.bf16.xpose.msra.mxu0 0
        %1829 = vmatpush.bf16.xpose.msra.mxu0 0
        %1830 = vmatpush.bf16.xpose.msra.mxu0 0
        %1831 = vmatpush.bf16.xpose.msra.mxu0 0
        %1832 = vmatpush.bf16.xpose.msra.mxu0 %v1441
        %1833 = vmatmul.bf16.gmra.mxu0 %v691
        %v1834 = vpop.f32.mrf.mxu0
        %v1835 = vadd.f32 %v1822, %v1834
        %v1836 = vpop.f32.mrf.mxu0
        %1837 = vdwg.mxu0
        %1838 = vmatpush.bf16.xpose.msra.mxu0 0
        %1839 = vmatpush.bf16.xpose.msra.mxu0 0
        %1840 = vmatpush.bf16.xpose.msra.mxu0 0
        %1841 = vmatpush.bf16.xpose.msra.mxu0 0
        %1842 = vmatpush.bf16.xpose.msra.mxu0 0
        %1843 = vmatpush.bf16.xpose.msra.mxu0 0
        %1844 = vmatpush.bf16.xpose.msra.mxu0 0
        %1845 = vmatpush.bf16.xpose.msra.mxu0 %v1442
        %1846 = vmatmul.bf16.gmra.mxu0 %v692
        %v1847 = vpop.f32.mrf.mxu0
        %v1848 = vadd.f32 %v1835, %v1847
        %v1849 = vpop.f32.mrf.mxu0
        %1850 = vdwg.mxu0
        %1851 = vmatpush.bf16.xpose.msra.mxu0 0
        %1852 = vmatpush.bf16.xpose.msra.mxu0 0
        %1853 = vmatpush.bf16.xpose.msra.mxu0 0
        %1854 = vmatpush.bf16.xpose.msra.mxu0 0
        %1855 = vmatpush.bf16.xpose.msra.mxu0 0
        %1856 = vmatpush.bf16.xpose.msra.mxu0 0
        %1857 = vmatpush.bf16.xpose.msra.mxu0 0
        %1858 = vmatpush.bf16.xpose.msra.mxu0 %v1443
        %1859 = vmatmul.bf16.gmra.mxu0 %v693
        %v1860 = vpop.f32.mrf.mxu0
        %v1861 = vadd.f32 %v1848, %v1860
        %v1862 = vpop.f32.mrf.mxu0
        %1863 = vdwg.mxu0
        %1864 = vmatpush.bf16.xpose.msra.mxu0 0
        %1865 = vmatpush.bf16.xpose.msra.mxu0 0
        %1866 = vmatpush.bf16.xpose.msra.mxu0 0
        %1867 = vmatpush.bf16.xpose.msra.mxu0 0
        %1868 = vmatpush.bf16.xpose.msra.mxu0 0
        %1869 = vmatpush.bf16.xpose.msra.mxu0 0
        %1870 = vmatpush.bf16.xpose.msra.mxu0 0
        %1871 = vmatpush.bf16.xpose.msra.mxu0 %v1444
        %1872 = vmatmul.bf16.gmra.mxu0 %v694
        %v1873 = vpop.f32.mrf.mxu0
        %v1874 = vadd.f32 %v1861, %v1873
        %v1875 = vpop.f32.mrf.mxu0
        %1876 = vdwg.mxu0
        %1877 = vmatpush.bf16.xpose.msra.mxu0 0
        %1878 = vmatpush.bf16.xpose.msra.mxu0 0
        %1879 = vmatpush.bf16.xpose.msra.mxu0 0
        %1880 = vmatpush.bf16.xpose.msra.mxu0 0
        %1881 = vmatpush.bf16.xpose.msra.mxu0 0
        %1882 = vmatpush.bf16.xpose.msra.mxu0 0
        %1883 = vmatpush.bf16.xpose.msra.mxu0 0
        %1884 = vmatpush.bf16.xpose.msra.mxu0 %v1445
        %1885 = vmatmul.bf16.gmra.mxu0 %v695
        %v1886 = vpop.f32.mrf.mxu0
        %v1887 = vadd.f32 %v1874, %v1886
        %v1888 = vpop.f32.mrf.mxu0
        %1889 = vdwg.mxu0
        %1890 = vmatpush.bf16.xpose.msra.mxu0 0
        %1891 = vmatpush.bf16.xpose.msra.mxu0 0
        %1892 = vmatpush.bf16.xpose.msra.mxu0 0
        %1893 = vmatpush.bf16.xpose.msra.mxu0 0
        %1894 = vmatpush.bf16.xpose.msra.mxu0 0
        %1895 = vmatpush.bf16.xpose.msra.mxu0 0
        %1896 = vmatpush.bf16.xpose.msra.mxu0 0
        %1897 = vmatpush.bf16.xpose.msra.mxu0 %v1446
        %1898 = vmatmul.bf16.gmra.mxu0 %v696
        %v1899 = vpop.f32.mrf.mxu0
        %v1900 = vadd.f32 %v1887, %v1899
        %v1901 = vpop.f32.mrf.mxu0
        %1902 = vdwg.mxu0
        %1903 = vmatpush.bf16.xpose.msra.mxu0 0
        %1904 = vmatpush.bf16.xpose.msra.mxu0 0
        %1905 = vmatpush.bf16.xpose.msra.mxu0 0
        %1906 = vmatpush.bf16.xpose.msra.mxu0 0
        %1907 = vmatpush.bf16.xpose.msra.mxu0 0
        %1908 = vmatpush.bf16.xpose.msra.mxu0 0
        %1909 = vmatpush.bf16.xpose.msra.mxu0 0
        %1910 = vmatpush.bf16.xpose.msra.mxu0 %v1447
        %1911 = vmatmul.bf16.gmra.mxu0 %v697
        %v1912 = vpop.f32.mrf.mxu0
        %v1913 = vadd.f32 %v1900, %v1912
        %v1914 = vpop.f32.mrf.mxu0
        %1915 = vdwg.mxu0
        %1916 = vmatpush.bf16.xpose.msra.mxu0 0
        %1917 = vmatpush.bf16.xpose.msra.mxu0 0
        %1918 = vmatpush.bf16.xpose.msra.mxu0 0
        %1919 = vmatpush.bf16.xpose.msra.mxu0 0
        %1920 = vmatpush.bf16.xpose.msra.mxu0 0
        %1921 = vmatpush.bf16.xpose.msra.mxu0 0
        %1922 = vmatpush.bf16.xpose.msra.mxu0 0
        %1923 = vmatpush.bf16.xpose.msra.mxu0 %v1448
        %1924 = vmatmul.bf16.gmra.mxu0 %v698
        %v1925 = vpop.f32.mrf.mxu0
        %v1926 = vadd.f32 %v1913, %v1925
        %v1927 = vpop.f32.mrf.mxu0
        %1928 = vdwg.mxu0
        %1929 = vmatpush.bf16.xpose.msra.mxu0 0
        %1930 = vmatpush.bf16.xpose.msra.mxu0 0
        %1931 = vmatpush.bf16.xpose.msra.mxu0 0
        %1932 = vmatpush.bf16.xpose.msra.mxu0 0
        %1933 = vmatpush.bf16.xpose.msra.mxu0 0
        %1934 = vmatpush.bf16.xpose.msra.mxu0 0
        %1935 = vmatpush.bf16.xpose.msra.mxu0 0
        %1936 = vmatpush.bf16.xpose.msra.mxu0 %v1449
        %1937 = vmatmul.bf16.gmra.mxu0 %v699
        %v1938 = vpop.f32.mrf.mxu0
        %v1939 = vadd.f32 %v1926, %v1938
        %v1940 = vpop.f32.mrf.mxu0
        %1941 = vdwg.mxu0
        %1942 = vmatpush.bf16.xpose.msra.mxu0 0
        %1943 = vmatpush.bf16.xpose.msra.mxu0 0
        %1944 = vmatpush.bf16.xpose.msra.mxu0 0
        %1945 = vmatpush.bf16.xpose.msra.mxu0 0
        %1946 = vmatpush.bf16.xpose.msra.mxu0 0
        %1947 = vmatpush.bf16.xpose.msra.mxu0 0
        %1948 = vmatpush.bf16.xpose.msra.mxu0 0
        %1949 = vmatpush.bf16.xpose.msra.mxu0 %v1450
        %1950 = vmatmul.bf16.gmra.mxu0 %v700
        %v1951 = vpop.f32.mrf.mxu0
        %v1952 = vadd.f32 %v1939, %v1951
        %v1953 = vpop.f32.mrf.mxu0
        %1954 = vdwg.mxu0
        %1955 = vmatpush.bf16.xpose.msra.mxu0 0
        %1956 = vmatpush.bf16.xpose.msra.mxu0 0
        %1957 = vmatpush.bf16.xpose.msra.mxu0 0
        %1958 = vmatpush.bf16.xpose.msra.mxu0 0
        %1959 = vmatpush.bf16.xpose.msra.mxu0 0
        %1960 = vmatpush.bf16.xpose.msra.mxu0 0
        %1961 = vmatpush.bf16.xpose.msra.mxu0 0
        %1962 = vmatpush.bf16.xpose.msra.mxu0 %v1451
        %1963 = vmatmul.bf16.gmra.mxu0 %v701
        %v1964 = vpop.f32.mrf.mxu0
        %v1965 = vadd.f32 %v1952, %v1964
        %v1966 = vpop.f32.mrf.mxu0
        %1967 = vdwg.mxu0
        %1968 = vmatpush.bf16.xpose.msra.mxu0 0
        %1969 = vmatpush.bf16.xpose.msra.mxu0 0
        %1970 = vmatpush.bf16.xpose.msra.mxu0 0
        %1971 = vmatpush.bf16.xpose.msra.mxu0 0
        %1972 = vmatpush.bf16.xpose.msra.mxu0 0
        %1973 = vmatpush.bf16.xpose.msra.mxu0 0
        %1974 = vmatpush.bf16.xpose.msra.mxu0 0
        %1975 = vmatpush.bf16.xpose.msra.mxu0 %v1452
        %1976 = vmatmul.bf16.gmra.mxu0 %v702
        %v1977 = vpop.f32.mrf.mxu0
        %v1978 = vadd.f32 %v1965, %v1977
        %v1979 = vpop.f32.mrf.mxu0
        %1980 = vdwg.mxu0
        %1981 = vmatpush.bf16.xpose.msra.mxu0 0
        %1982 = vmatpush.bf16.xpose.msra.mxu0 0
        %1983 = vmatpush.bf16.xpose.msra.mxu0 0
        %1984 = vmatpush.bf16.xpose.msra.mxu0 0
        %1985 = vmatpush.bf16.xpose.msra.mxu0 0
        %1986 = vmatpush.bf16.xpose.msra.mxu0 0
        %1987 = vmatpush.bf16.xpose.msra.mxu0 0
        %1988 = vmatpush.bf16.xpose.msra.mxu0 %v1453
        %1989 = vmatmul.bf16.gmra.mxu0 %v703
        %v1990 = vpop.f32.mrf.mxu0
        %v1991 = vadd.f32 %v1978, %v1990
        %v1992 = vpop.f32.mrf.mxu0
        %1993 = vdwg.mxu0
        %1994 = vmatpush.bf16.xpose.msra.mxu0 0
        %1995 = vmatpush.bf16.xpose.msra.mxu0 0
        %1996 = vmatpush.bf16.xpose.msra.mxu0 0
        %1997 = vmatpush.bf16.xpose.msra.mxu0 0
        %1998 = vmatpush.bf16.xpose.msra.mxu0 0
        %1999 = vmatpush.bf16.xpose.msra.mxu0 0
        %2000 = vmatpush.bf16.xpose.msra.mxu0 0
        %2001 = vmatpush.bf16.xpose.msra.mxu0 %v1454
        %2002 = vmatmul.bf16.gmra.mxu0 %v704
        %v2003 = vpop.f32.mrf.mxu0
        %v2004 = vadd.f32 %v1991, %v2003
        %v2005 = vpop.f32.mrf.mxu0
        %2006 = vdwg.mxu0
        %2007 = vmatpush.bf16.xpose.msra.mxu0 0
        %2008 = vmatpush.bf16.xpose.msra.mxu0 0
        %2009 = vmatpush.bf16.xpose.msra.mxu0 0
        %2010 = vmatpush.bf16.xpose.msra.mxu0 0
        %2011 = vmatpush.bf16.xpose.msra.mxu0 0
        %2012 = vmatpush.bf16.xpose.msra.mxu0 0
        %2013 = vmatpush.bf16.xpose.msra.mxu0 0
        %2014 = vmatpush.bf16.xpose.msra.mxu0 %v1455
        %2015 = vmatmul.bf16.gmra.mxu0 %v705
        %v2016 = vpop.f32.mrf.mxu0
        %v2017 = vadd.f32 %v2004, %v2016
        %v2018 = vpop.f32.mrf.mxu0
        %2019 = vdwg.mxu0
        %2020 = vmatpush.bf16.xpose.msra.mxu0 0
        %2021 = vmatpush.bf16.xpose.msra.mxu0 0
        %2022 = vmatpush.bf16.xpose.msra.mxu0 0
        %2023 = vmatpush.bf16.xpose.msra.mxu0 0
        %2024 = vmatpush.bf16.xpose.msra.mxu0 0
        %2025 = vmatpush.bf16.xpose.msra.mxu0 0
        %2026 = vmatpush.bf16.xpose.msra.mxu0 0
        %2027 = vmatpush.bf16.xpose.msra.mxu0 %v1456
        %2028 = vmatmul.bf16.gmra.mxu0 %v706
        %v2029 = vpop.f32.mrf.mxu0
        %v2030 = vadd.f32 %v2017, %v2029
        %v2031 = vpop.f32.mrf.mxu0
        %2032 = vdwg.mxu0
        %2033 = vmatpush.bf16.xpose.msra.mxu0 0
        %2034 = vmatpush.bf16.xpose.msra.mxu0 0
        %2035 = vmatpush.bf16.xpose.msra.mxu0 0
        %2036 = vmatpush.bf16.xpose.msra.mxu0 0
        %2037 = vmatpush.bf16.xpose.msra.mxu0 0
        %2038 = vmatpush.bf16.xpose.msra.mxu0 0
        %2039 = vmatpush.bf16.xpose.msra.mxu0 0
        %2040 = vmatpush.bf16.xpose.msra.mxu0 %v1457
        %2041 = vmatmul.bf16.gmra.mxu0 %v707
        %v2042 = vpop.f32.mrf.mxu0
        %v2043 = vadd.f32 %v2030, %v2042
        %v2044 = vpop.f32.mrf.mxu0
        %2045 = vdwg.mxu0
        %2046 = vmatpush.bf16.xpose.msra.mxu0 0
        %2047 = vmatpush.bf16.xpose.msra.mxu0 0
        %2048 = vmatpush.bf16.xpose.msra.mxu0 0
        %2049 = vmatpush.bf16.xpose.msra.mxu0 0
        %2050 = vmatpush.bf16.xpose.msra.mxu0 0
        %2051 = vmatpush.bf16.xpose.msra.mxu0 0
        %2052 = vmatpush.bf16.xpose.msra.mxu0 0
        %2053 = vmatpush.bf16.xpose.msra.mxu0 %v1458
        %2054 = vmatmul.bf16.gmra.mxu0 %v708
        %v2055 = vpop.f32.mrf.mxu0
        %v2056 = vadd.f32 %v2043, %v2055
        %v2057 = vpop.f32.mrf.mxu0
        %2058 = vdwg.mxu0
        %2059 = vmatpush.bf16.xpose.msra.mxu0 0
        %2060 = vmatpush.bf16.xpose.msra.mxu0 0
        %2061 = vmatpush.bf16.xpose.msra.mxu0 0
        %2062 = vmatpush.bf16.xpose.msra.mxu0 0
        %2063 = vmatpush.bf16.xpose.msra.mxu0 0
        %2064 = vmatpush.bf16.xpose.msra.mxu0 0
        %2065 = vmatpush.bf16.xpose.msra.mxu0 0
        %2066 = vmatpush.bf16.xpose.msra.mxu0 %v1459
        %2067 = vmatmul.bf16.gmra.mxu0 %v709
        %v2068 = vpop.f32.mrf.mxu0
        %v2069 = vadd.f32 %v2056, %v2068
        %v2070 = vpop.f32.mrf.mxu0
        %2071 = vdwg.mxu0
        %2072 = vmatpush.bf16.xpose.msra.mxu0 0
        %2073 = vmatpush.bf16.xpose.msra.mxu0 0
        %2074 = vmatpush.bf16.xpose.msra.mxu0 0
        %2075 = vmatpush.bf16.xpose.msra.mxu0 0
        %2076 = vmatpush.bf16.xpose.msra.mxu0 0
        %2077 = vmatpush.bf16.xpose.msra.mxu0 0
        %2078 = vmatpush.bf16.xpose.msra.mxu0 0
        %2079 = vmatpush.bf16.xpose.msra.mxu0 %v1460
        %2080 = vmatmul.bf16.gmra.mxu0 %v710
        %v2081 = vpop.f32.mrf.mxu0
        %v2082 = vadd.f32 %v2069, %v2081
        %v2083 = vpop.f32.mrf.mxu0
        %2084 = vdwg.mxu0
        %2085 = vmatpush.bf16.xpose.msra.mxu0 0
        %2086 = vmatpush.bf16.xpose.msra.mxu0 0
        %2087 = vmatpush.bf16.xpose.msra.mxu0 0
        %2088 = vmatpush.bf16.xpose.msra.mxu0 0
        %2089 = vmatpush.bf16.xpose.msra.mxu0 0
        %2090 = vmatpush.bf16.xpose.msra.mxu0 0
        %2091 = vmatpush.bf16.xpose.msra.mxu0 0
        %2092 = vmatpush.bf16.xpose.msra.mxu0 %v1461
        %2093 = vmatmul.bf16.gmra.mxu0 %v711
        %v2094 = vpop.f32.mrf.mxu0
        %v2095 = vadd.f32 %v2082, %v2094
        %v2096 = vpop.f32.mrf.mxu0
        %2097 = vdwg.mxu0
        %2098 = vmatpush.bf16.xpose.msra.mxu0 0
        %2099 = vmatpush.bf16.xpose.msra.mxu0 0
        %2100 = vmatpush.bf16.xpose.msra.mxu0 0
        %2101 = vmatpush.bf16.xpose.msra.mxu0 0
        %2102 = vmatpush.bf16.xpose.msra.mxu0 0
        %2103 = vmatpush.bf16.xpose.msra.mxu0 0
        %2104 = vmatpush.bf16.xpose.msra.mxu0 0
        %2105 = vmatpush.bf16.xpose.msra.mxu0 %v1462
        %2106 = vmatmul.bf16.gmra.mxu0 %v712
        %v2107 = vpop.f32.mrf.mxu0
        %v2108 = vadd.f32 %v2095, %v2107
        %v2109 = vpop.f32.mrf.mxu0
        %2110 = vdwg.mxu0
        %2111 = vmatpush.bf16.xpose.msra.mxu0 0
        %2112 = vmatpush.bf16.xpose.msra.mxu0 0
        %2113 = vmatpush.bf16.xpose.msra.mxu0 0
        %2114 = vmatpush.bf16.xpose.msra.mxu0 0
        %2115 = vmatpush.bf16.xpose.msra.mxu0 0
        %2116 = vmatpush.bf16.xpose.msra.mxu0 0
        %2117 = vmatpush.bf16.xpose.msra.mxu0 0
        %2118 = vmatpush.bf16.xpose.msra.mxu0 %v1463
        %2119 = vmatmul.bf16.gmra.mxu0 %v713
        %v2120 = vpop.f32.mrf.mxu0
        %v2121 = vadd.f32 %v2108, %v2120
        %v2122 = vpop.f32.mrf.mxu0
        %2123 = vdwg.mxu0
        %2124 = vmatpush.bf16.xpose.msra.mxu0 0
        %2125 = vmatpush.bf16.xpose.msra.mxu0 0
        %2126 = vmatpush.bf16.xpose.msra.mxu0 0
        %2127 = vmatpush.bf16.xpose.msra.mxu0 0
        %2128 = vmatpush.bf16.xpose.msra.mxu0 0
        %2129 = vmatpush.bf16.xpose.msra.mxu0 0
        %2130 = vmatpush.bf16.xpose.msra.mxu0 0
        %2131 = vmatpush.bf16.xpose.msra.mxu0 %v1464
        %2132 = vmatmul.bf16.gmra.mxu0 %v714
        %v2133 = vpop.f32.mrf.mxu0
        %v2134 = vadd.f32 %v2121, %v2133
        %v2135 = vpop.f32.mrf.mxu0
        %2136 = vdwg.mxu0
        %2137 = vmatpush.bf16.xpose.msra.mxu0 0
        %2138 = vmatpush.bf16.xpose.msra.mxu0 0
        %2139 = vmatpush.bf16.xpose.msra.mxu0 0
        %2140 = vmatpush.bf16.xpose.msra.mxu0 0
        %2141 = vmatpush.bf16.xpose.msra.mxu0 0
        %2142 = vmatpush.bf16.xpose.msra.mxu0 0
        %2143 = vmatpush.bf16.xpose.msra.mxu0 0
        %2144 = vmatpush.bf16.xpose.msra.mxu0 %v1465
        %2145 = vmatmul.bf16.gmra.mxu0 %v715
        %v2146 = vpop.f32.mrf.mxu0
        %v2147 = vadd.f32 %v2134, %v2146
        %v2148 = vpop.f32.mrf.mxu0
        %2149 = vdwg.mxu0
        %2150 = vmatpush.bf16.xpose.msra.mxu0 0
        %2151 = vmatpush.bf16.xpose.msra.mxu0 0
        %2152 = vmatpush.bf16.xpose.msra.mxu0 0
        %2153 = vmatpush.bf16.xpose.msra.mxu0 0
        %2154 = vmatpush.bf16.xpose.msra.mxu0 0
        %2155 = vmatpush.bf16.xpose.msra.mxu0 0
        %2156 = vmatpush.bf16.xpose.msra.mxu0 0
        %2157 = vmatpush.bf16.xpose.msra.mxu0 %v1466
        %2158 = vmatmul.bf16.gmra.mxu0 %v716
        %v2159 = vpop.f32.mrf.mxu0
        %v2160 = vadd.f32 %v2147, %v2159
        %v2161 = vpop.f32.mrf.mxu0
        %2162 = vdwg.mxu0
        %2163 = vmatpush.bf16.xpose.msra.mxu0 0
        %2164 = vmatpush.bf16.xpose.msra.mxu0 0
        %2165 = vmatpush.bf16.xpose.msra.mxu0 0
        %2166 = vmatpush.bf16.xpose.msra.mxu0 0
        %2167 = vmatpush.bf16.xpose.msra.mxu0 0
        %2168 = vmatpush.bf16.xpose.msra.mxu0 0
        %2169 = vmatpush.bf16.xpose.msra.mxu0 0
        %2170 = vmatpush.bf16.xpose.msra.mxu0 %v1467
        %2171 = vmatmul.bf16.gmra.mxu0 %v717
        %v2172 = vpop.f32.mrf.mxu0
        %v2173 = vadd.f32 %v2160, %v2172
        %v2174 = vpop.f32.mrf.mxu0
        %2175 = vdwg.mxu0
        %2176 = vmatpush.bf16.xpose.msra.mxu0 0
        %2177 = vmatpush.bf16.xpose.msra.mxu0 0
        %2178 = vmatpush.bf16.xpose.msra.mxu0 0
        %2179 = vmatpush.bf16.xpose.msra.mxu0 0
        %2180 = vmatpush.bf16.xpose.msra.mxu0 0
        %2181 = vmatpush.bf16.xpose.msra.mxu0 0
        %2182 = vmatpush.bf16.xpose.msra.mxu0 0
        %2183 = vmatpush.bf16.xpose.msra.mxu0 %v1468
        %2184 = vmatmul.bf16.gmra.mxu0 %v718
        %v2185 = vpop.f32.mrf.mxu0
        %v2186 = vadd.f32 %v2173, %v2185
        %v2187 = vpop.f32.mrf.mxu0
        %2188 = vdwg.mxu0
        %2189 = vmatpush.bf16.xpose.msra.mxu0 0
        %2190 = vmatpush.bf16.xpose.msra.mxu0 0
        %2191 = vmatpush.bf16.xpose.msra.mxu0 0
        %2192 = vmatpush.bf16.xpose.msra.mxu0 0
        %2193 = vmatpush.bf16.xpose.msra.mxu0 0
        %2194 = vmatpush.bf16.xpose.msra.mxu0 0
        %2195 = vmatpush.bf16.xpose.msra.mxu0 0
        %2196 = vmatpush.bf16.xpose.msra.mxu0 %v1469
        %2197 = vmatmul.bf16.gmra.mxu0 %v719
        %v2198 = vpop.f32.mrf.mxu0
        %v2199 = vadd.f32 %v2186, %v2198
        %v2200 = vpop.f32.mrf.mxu0
        %2201 = vdwg.mxu0
        %2202 = vmatpush.bf16.xpose.msra.mxu0 0
        %2203 = vmatpush.bf16.xpose.msra.mxu0 0
        %2204 = vmatpush.bf16.xpose.msra.mxu0 0
        %2205 = vmatpush.bf16.xpose.msra.mxu0 0
        %2206 = vmatpush.bf16.xpose.msra.mxu0 0
        %2207 = vmatpush.bf16.xpose.msra.mxu0 0
        %2208 = vmatpush.bf16.xpose.msra.mxu0 0
        %2209 = vmatpush.bf16.xpose.msra.mxu0 %v1470
        %2210 = vmatmul.bf16.gmra.mxu0 %v720
        %v2211 = vpop.f32.mrf.mxu0
        %v2212 = vadd.f32 %v2199, %v2211
        %v2213 = vpop.f32.mrf.mxu0
        %2214 = vdwg.mxu0
        %2215 = vmatpush.bf16.xpose.msra.mxu0 0
        %2216 = vmatpush.bf16.xpose.msra.mxu0 0
        %2217 = vmatpush.bf16.xpose.msra.mxu0 0
        %2218 = vmatpush.bf16.xpose.msra.mxu0 0
        %2219 = vmatpush.bf16.xpose.msra.mxu0 0
        %2220 = vmatpush.bf16.xpose.msra.mxu0 0
        %2221 = vmatpush.bf16.xpose.msra.mxu0 0
        %2222 = vmatpush.bf16.xpose.msra.mxu0 %v1471
        %2223 = vmatmul.bf16.gmra.mxu0 %v721
        %v2224 = vpop.f32.mrf.mxu0
        %v2225 = vadd.f32 %v2212, %v2224
        %v2226 = vpop.f32.mrf.mxu0
        %2227 = vdwg.mxu0
        %2228 = vmatpush.bf16.xpose.msra.mxu0 0
        %2229 = vmatpush.bf16.xpose.msra.mxu0 0
        %2230 = vmatpush.bf16.xpose.msra.mxu0 0
        %2231 = vmatpush.bf16.xpose.msra.mxu0 0
        %2232 = vmatpush.bf16.xpose.msra.mxu0 0
        %2233 = vmatpush.bf16.xpose.msra.mxu0 0
        %2234 = vmatpush.bf16.xpose.msra.mxu0 0
        %2235 = vmatpush.bf16.xpose.msra.mxu0 %v1472
        %2236 = vmatmul.bf16.gmra.mxu0 %v722
        %v2237 = vpop.f32.mrf.mxu0
        %v2238 = vadd.f32 %v2225, %v2237
        %v2239 = vpop.f32.mrf.mxu0
        %2240 = vdwg.mxu0
        %2241 = vmatpush.bf16.xpose.msra.mxu0 0
        %2242 = vmatpush.bf16.xpose.msra.mxu0 0
        %2243 = vmatpush.bf16.xpose.msra.mxu0 0
        %2244 = vmatpush.bf16.xpose.msra.mxu0 0
        %2245 = vmatpush.bf16.xpose.msra.mxu0 0
        %2246 = vmatpush.bf16.xpose.msra.mxu0 0
        %2247 = vmatpush.bf16.xpose.msra.mxu0 0
        %2248 = vmatpush.bf16.xpose.msra.mxu0 %v1473
        %2249 = vmatmul.bf16.gmra.mxu0 %v723
        %v2250 = vpop.f32.mrf.mxu0
        %v2251 = vadd.f32 %v2238, %v2250
        %v2252 = vpop.f32.mrf.mxu0
        %2253 = vdwg.mxu0
        %2254 = vmatpush.bf16.xpose.msra.mxu0 0
        %2255 = vmatpush.bf16.xpose.msra.mxu0 0
        %2256 = vmatpush.bf16.xpose.msra.mxu0 0
        %2257 = vmatpush.bf16.xpose.msra.mxu0 0
        %2258 = vmatpush.bf16.xpose.msra.mxu0 0
        %2259 = vmatpush.bf16.xpose.msra.mxu0 0
        %2260 = vmatpush.bf16.xpose.msra.mxu0 0
        %2261 = vmatpush.bf16.xpose.msra.mxu0 %v1474
        %2262 = vmatmul.bf16.gmra.mxu0 %v724
        %v2263 = vpop.f32.mrf.mxu0
        %v2264 = vadd.f32 %v2251, %v2263
        %v2265 = vpop.f32.mrf.mxu0
        %2266 = vdwg.mxu0
        %2267 = vmatpush.bf16.xpose.msra.mxu0 0
        %2268 = vmatpush.bf16.xpose.msra.mxu0 0
        %2269 = vmatpush.bf16.xpose.msra.mxu0 0
        %2270 = vmatpush.bf16.xpose.msra.mxu0 0
        %2271 = vmatpush.bf16.xpose.msra.mxu0 0
        %2272 = vmatpush.bf16.xpose.msra.mxu0 0
        %2273 = vmatpush.bf16.xpose.msra.mxu0 0
        %2274 = vmatpush.bf16.xpose.msra.mxu0 %v1475
        %2275 = vmatmul.bf16.gmra.mxu0 %v725
        %v2276 = vpop.f32.mrf.mxu0
        %v2277 = vadd.f32 %v2264, %v2276
        %v2278 = vpop.f32.mrf.mxu0
        %2279 = vdwg.mxu0
        %2280 = vmatpush.bf16.xpose.msra.mxu0 0
        %2281 = vmatpush.bf16.xpose.msra.mxu0 0
        %2282 = vmatpush.bf16.xpose.msra.mxu0 0
        %2283 = vmatpush.bf16.xpose.msra.mxu0 0
        %2284 = vmatpush.bf16.xpose.msra.mxu0 0
        %2285 = vmatpush.bf16.xpose.msra.mxu0 0
        %2286 = vmatpush.bf16.xpose.msra.mxu0 0
        %2287 = vmatpush.bf16.xpose.msra.mxu0 %v1476
        %2288 = vmatmul.bf16.gmra.mxu0 %v726
        %v2289 = vpop.f32.mrf.mxu0
        %v2290 = vadd.f32 %v2277, %v2289
        %v2291 = vpop.f32.mrf.mxu0
        %2292 = vdwg.mxu0
        %2293 = vmatpush.bf16.xpose.msra.mxu0 0
        %2294 = vmatpush.bf16.xpose.msra.mxu0 0
        %2295 = vmatpush.bf16.xpose.msra.mxu0 0
        %2296 = vmatpush.bf16.xpose.msra.mxu0 0
        %2297 = vmatpush.bf16.xpose.msra.mxu0 0
        %2298 = vmatpush.bf16.xpose.msra.mxu0 0
        %2299 = vmatpush.bf16.xpose.msra.mxu0 0
        %2300 = vmatpush.bf16.xpose.msra.mxu0 %v1477
        %2301 = vmatmul.bf16.gmra.mxu0 %v727
        %v2302 = vpop.f32.mrf.mxu0
        %v2303 = vadd.f32 %v2290, %v2302
        %v2304 = vpop.f32.mrf.mxu0
        %2305 = vdwg.mxu0
        %2306 = vmatpush.bf16.xpose.msra.mxu0 0
        %2307 = vmatpush.bf16.xpose.msra.mxu0 0
        %2308 = vmatpush.bf16.xpose.msra.mxu0 0
        %2309 = vmatpush.bf16.xpose.msra.mxu0 0
        %2310 = vmatpush.bf16.xpose.msra.mxu0 0
        %2311 = vmatpush.bf16.xpose.msra.mxu0 0
        %2312 = vmatpush.bf16.xpose.msra.mxu0 0
        %2313 = vmatpush.bf16.xpose.msra.mxu0 %v1478
        %2314 = vmatmul.bf16.gmra.mxu0 %v728
        %v2315 = vpop.f32.mrf.mxu0
        %v2316 = vadd.f32 %v2303, %v2315
        %v2317 = vpop.f32.mrf.mxu0
        %2318 = vdwg.mxu0
        %2319 = vmatpush.bf16.xpose.msra.mxu0 0
        %2320 = vmatpush.bf16.xpose.msra.mxu0 0
        %2321 = vmatpush.bf16.xpose.msra.mxu0 0
        %2322 = vmatpush.bf16.xpose.msra.mxu0 0
        %2323 = vmatpush.bf16.xpose.msra.mxu0 0
        %2324 = vmatpush.bf16.xpose.msra.mxu0 0
        %2325 = vmatpush.bf16.xpose.msra.mxu0 0
        %2326 = vmatpush.bf16.xpose.msra.mxu0 %v1479
        %2327 = vmatmul.bf16.gmra.mxu0 %v729
        %v2328 = vpop.f32.mrf.mxu0
        %v2329 = vadd.f32 %v2316, %v2328
        %v2330 = vpop.f32.mrf.mxu0
        %2331 = vdwg.mxu0
        %2332 = vmatpush.bf16.xpose.msra.mxu0 0
        %2333 = vmatpush.bf16.xpose.msra.mxu0 0
        %2334 = vmatpush.bf16.xpose.msra.mxu0 0
        %2335 = vmatpush.bf16.xpose.msra.mxu0 0
        %2336 = vmatpush.bf16.xpose.msra.mxu0 0
        %2337 = vmatpush.bf16.xpose.msra.mxu0 0
        %2338 = vmatpush.bf16.xpose.msra.mxu0 0
        %2339 = vmatpush.bf16.xpose.msra.mxu0 %v1480
        %2340 = vmatmul.bf16.gmra.mxu0 %v730
        %v2341 = vpop.f32.mrf.mxu0
        %v2342 = vadd.f32 %v2329, %v2341
        %v2343 = vpop.f32.mrf.mxu0
        %2344 = vdwg.mxu0
        %2345 = vmatpush.bf16.xpose.msra.mxu0 0
        %2346 = vmatpush.bf16.xpose.msra.mxu0 0
        %2347 = vmatpush.bf16.xpose.msra.mxu0 0
        %2348 = vmatpush.bf16.xpose.msra.mxu0 0
        %2349 = vmatpush.bf16.xpose.msra.mxu0 0
        %2350 = vmatpush.bf16.xpose.msra.mxu0 0
        %2351 = vmatpush.bf16.xpose.msra.mxu0 0
        %2352 = vmatpush.bf16.xpose.msra.mxu0 %v1481
        %2353 = vmatmul.bf16.gmra.mxu0 %v731
        %v2354 = vpop.f32.mrf.mxu0
        %v2355 = vadd.f32 %v2342, %v2354
        %v2356 = vpop.f32.mrf.mxu0
        %2357 = vdwg.mxu0
        %2358 = vmatpush.bf16.xpose.msra.mxu0 0
        %2359 = vmatpush.bf16.xpose.msra.mxu0 0
        %2360 = vmatpush.bf16.xpose.msra.mxu0 0
        %2361 = vmatpush.bf16.xpose.msra.mxu0 0
        %2362 = vmatpush.bf16.xpose.msra.mxu0 0
        %2363 = vmatpush.bf16.xpose.msra.mxu0 0
        %2364 = vmatpush.bf16.xpose.msra.mxu0 0
        %2365 = vmatpush.bf16.xpose.msra.mxu0 %v1482
        %2366 = vmatmul.bf16.gmra.mxu0 %v732
        %v2367 = vpop.f32.mrf.mxu0
        %v2368 = vadd.f32 %v2355, %v2367
        %v2369 = vpop.f32.mrf.mxu0
        %2370 = vdwg.mxu0
        %2371 = vmatpush.bf16.xpose.msra.mxu0 0
        %2372 = vmatpush.bf16.xpose.msra.mxu0 0
        %2373 = vmatpush.bf16.xpose.msra.mxu0 0
        %2374 = vmatpush.bf16.xpose.msra.mxu0 0
        %2375 = vmatpush.bf16.xpose.msra.mxu0 0
        %2376 = vmatpush.bf16.xpose.msra.mxu0 0
        %2377 = vmatpush.bf16.xpose.msra.mxu0 0
        %2378 = vmatpush.bf16.xpose.msra.mxu0 %v1483
        %2379 = vmatmul.bf16.gmra.mxu0 %v733
        %v2380 = vpop.f32.mrf.mxu0
        %v2381 = vadd.f32 %v2368, %v2380
        %v2382 = vpop.f32.mrf.mxu0
        %2383 = vdwg.mxu0
        %2384 = vmatpush.bf16.xpose.msra.mxu0 0
        %2385 = vmatpush.bf16.xpose.msra.mxu0 0
        %2386 = vmatpush.bf16.xpose.msra.mxu0 0
        %2387 = vmatpush.bf16.xpose.msra.mxu0 0
        %2388 = vmatpush.bf16.xpose.msra.mxu0 0
        %2389 = vmatpush.bf16.xpose.msra.mxu0 0
        %2390 = vmatpush.bf16.xpose.msra.mxu0 0
        %2391 = vmatpush.bf16.xpose.msra.mxu0 %v1484
        %2392 = vmatmul.bf16.gmra.mxu0 %v734
        %v2393 = vpop.f32.mrf.mxu0
        %v2394 = vadd.f32 %v2381, %v2393
        %v2395 = vpop.f32.mrf.mxu0
        %2396 = vdwg.mxu0
        %2397 = vmatpush.bf16.xpose.msra.mxu0 0
        %2398 = vmatpush.bf16.xpose.msra.mxu0 0
        %2399 = vmatpush.bf16.xpose.msra.mxu0 0
        %2400 = vmatpush.bf16.xpose.msra.mxu0 0
        %2401 = vmatpush.bf16.xpose.msra.mxu0 0
        %2402 = vmatpush.bf16.xpose.msra.mxu0 0
        %2403 = vmatpush.bf16.xpose.msra.mxu0 0
        %2404 = vmatpush.bf16.xpose.msra.mxu0 %v1485
        %2405 = vmatmul.bf16.gmra.mxu0 %v735
        %v2406 = vpop.f32.mrf.mxu0
        %v2407 = vadd.f32 %v2394, %v2406
        %v2408 = vpop.f32.mrf.mxu0
        %2409 = vdwg.mxu0
        %2410 = vmatpush.bf16.xpose.msra.mxu0 0
        %2411 = vmatpush.bf16.xpose.msra.mxu0 0
        %2412 = vmatpush.bf16.xpose.msra.mxu0 0
        %2413 = vmatpush.bf16.xpose.msra.mxu0 0
        %2414 = vmatpush.bf16.xpose.msra.mxu0 0
        %2415 = vmatpush.bf16.xpose.msra.mxu0 0
        %2416 = vmatpush.bf16.xpose.msra.mxu0 0
        %2417 = vmatpush.bf16.xpose.msra.mxu0 %v1486
        %2418 = vmatmul.bf16.gmra.mxu0 %v736
        %v2419 = vpop.f32.mrf.mxu0
        %v2420 = vadd.f32 %v2407, %v2419
        %v2421 = vpop.f32.mrf.mxu0
        %2422 = vdwg.mxu0
        %2423 = vmatpush.bf16.xpose.msra.mxu0 0
        %2424 = vmatpush.bf16.xpose.msra.mxu0 0
        %2425 = vmatpush.bf16.xpose.msra.mxu0 0
        %2426 = vmatpush.bf16.xpose.msra.mxu0 0
        %2427 = vmatpush.bf16.xpose.msra.mxu0 0
        %2428 = vmatpush.bf16.xpose.msra.mxu0 0
        %2429 = vmatpush.bf16.xpose.msra.mxu0 0
        %2430 = vmatpush.bf16.xpose.msra.mxu0 %v1487
        %2431 = vmatmul.bf16.gmra.mxu0 %v737
        %v2432 = vpop.f32.mrf.mxu0
        %v2433 = vadd.f32 %v2420, %v2432
        %v2434 = vpop.f32.mrf.mxu0
        %2435 = vdwg.mxu0
        %2436 = vmatpush.bf16.xpose.msra.mxu0 0
        %2437 = vmatpush.bf16.xpose.msra.mxu0 0
        %2438 = vmatpush.bf16.xpose.msra.mxu0 0
        %2439 = vmatpush.bf16.xpose.msra.mxu0 0
        %2440 = vmatpush.bf16.xpose.msra.mxu0 0
        %2441 = vmatpush.bf16.xpose.msra.mxu0 0
        %2442 = vmatpush.bf16.xpose.msra.mxu0 0
        %2443 = vmatpush.bf16.xpose.msra.mxu0 %v1488
        %2444 = vmatmul.bf16.gmra.mxu0 %v738
        %v2445 = vpop.f32.mrf.mxu0
        %v2446 = vadd.f32 %v2433, %v2445
        %v2447 = vpop.f32.mrf.mxu0
        %2448 = vdwg.mxu0
        %2449 = vmatpush.bf16.xpose.msra.mxu0 0
        %2450 = vmatpush.bf16.xpose.msra.mxu0 0
        %2451 = vmatpush.bf16.xpose.msra.mxu0 0
        %2452 = vmatpush.bf16.xpose.msra.mxu0 0
        %2453 = vmatpush.bf16.xpose.msra.mxu0 0
        %2454 = vmatpush.bf16.xpose.msra.mxu0 0
        %2455 = vmatpush.bf16.xpose.msra.mxu0 0
        %2456 = vmatpush.bf16.xpose.msra.mxu0 %v1489
        %2457 = vmatmul.bf16.gmra.mxu0 %v739
        %v2458 = vpop.f32.mrf.mxu0
        %v2459 = vadd.f32 %v2446, %v2458
        %v2460 = vpop.f32.mrf.mxu0
        %2461 = vdwg.mxu0
        %2462 = vmatpush.bf16.xpose.msra.mxu0 0
        %2463 = vmatpush.bf16.xpose.msra.mxu0 0
        %2464 = vmatpush.bf16.xpose.msra.mxu0 0
        %2465 = vmatpush.bf16.xpose.msra.mxu0 0
        %2466 = vmatpush.bf16.xpose.msra.mxu0 0
        %2467 = vmatpush.bf16.xpose.msra.mxu0 0
        %2468 = vmatpush.bf16.xpose.msra.mxu0 0
        %2469 = vmatpush.bf16.xpose.msra.mxu0 %v1490
        %2470 = vmatmul.bf16.gmra.mxu0 %v740
        %v2471 = vpop.f32.mrf.mxu0
        %v2472 = vadd.f32 %v2459, %v2471
        %v2473 = vpop.f32.mrf.mxu0
        %2474 = vdwg.mxu0
        %2475 = vmatpush.bf16.xpose.msra.mxu0 0
        %2476 = vmatpush.bf16.xpose.msra.mxu0 0
        %2477 = vmatpush.bf16.xpose.msra.mxu0 0
        %2478 = vmatpush.bf16.xpose.msra.mxu0 0
        %2479 = vmatpush.bf16.xpose.msra.mxu0 0
        %2480 = vmatpush.bf16.xpose.msra.mxu0 0
        %2481 = vmatpush.bf16.xpose.msra.mxu0 0
        %2482 = vmatpush.bf16.xpose.msra.mxu0 %v1491
        %2483 = vmatmul.bf16.gmra.mxu0 %v741
        %v2484 = vpop.f32.mrf.mxu0
        %v2485 = vadd.f32 %v2472, %v2484
        %v2486 = vpop.f32.mrf.mxu0
        %2487 = vdwg.mxu0
        %2488 = vmatpush.bf16.xpose.msra.mxu0 0
        %2489 = vmatpush.bf16.xpose.msra.mxu0 0
        %2490 = vmatpush.bf16.xpose.msra.mxu0 0
        %2491 = vmatpush.bf16.xpose.msra.mxu0 0
        %2492 = vmatpush.bf16.xpose.msra.mxu0 0
        %2493 = vmatpush.bf16.xpose.msra.mxu0 0
        %2494 = vmatpush.bf16.xpose.msra.mxu0 0
        %2495 = vmatpush.bf16.xpose.msra.mxu0 %v1492
        %2496 = vmatmul.bf16.gmra.mxu0 %v742
        %v2497 = vpop.f32.mrf.mxu0
        %v2498 = vadd.f32 %v2485, %v2497
        %v2499 = vpop.f32.mrf.mxu0
        %2500 = vdwg.mxu0
        %2501 = vmatpush.bf16.xpose.msra.mxu0 0
        %2502 = vmatpush.bf16.xpose.msra.mxu0 0
        %2503 = vmatpush.bf16.xpose.msra.mxu0 0
        %2504 = vmatpush.bf16.xpose.msra.mxu0 0
        %2505 = vmatpush.bf16.xpose.msra.mxu0 0
        %2506 = vmatpush.bf16.xpose.msra.mxu0 0
        %2507 = vmatpush.bf16.xpose.msra.mxu0 0
        %2508 = vmatpush.bf16.xpose.msra.mxu0 %v1493
        %2509 = vmatmul.bf16.gmra.mxu0 %v743
        %v2510 = vpop.f32.mrf.mxu0
        %v2511 = vadd.f32 %v2498, %v2510
        %v2512 = vpop.f32.mrf.mxu0
        %2513 = vdwg.mxu0
        %2514 = vmatpush.bf16.xpose.msra.mxu0 0
        %2515 = vmatpush.bf16.xpose.msra.mxu0 0
        %2516 = vmatpush.bf16.xpose.msra.mxu0 0
        %2517 = vmatpush.bf16.xpose.msra.mxu0 0
        %2518 = vmatpush.bf16.xpose.msra.mxu0 0
        %2519 = vmatpush.bf16.xpose.msra.mxu0 0
        %2520 = vmatpush.bf16.xpose.msra.mxu0 0
        %2521 = vmatpush.bf16.xpose.msra.mxu0 %v1494
        %2522 = vmatmul.bf16.gmra.mxu0 %v744
        %v2523 = vpop.f32.mrf.mxu0
        %v2524 = vadd.f32 %v2511, %v2523
        %v2525 = vpop.f32.mrf.mxu0
        %2526 = vdwg.mxu0
        %2527 = vmatpush.bf16.xpose.msra.mxu0 0
        %2528 = vmatpush.bf16.xpose.msra.mxu0 0
        %2529 = vmatpush.bf16.xpose.msra.mxu0 0
        %2530 = vmatpush.bf16.xpose.msra.mxu0 0
        %2531 = vmatpush.bf16.xpose.msra.mxu0 0
        %2532 = vmatpush.bf16.xpose.msra.mxu0 0
        %2533 = vmatpush.bf16.xpose.msra.mxu0 0
        %2534 = vmatpush.bf16.xpose.msra.mxu0 %v1495
        %2535 = vmatmul.bf16.gmra.mxu0 %v745
        %v2536 = vpop.f32.mrf.mxu0
        %v2537 = vadd.f32 %v2524, %v2536
        %v2538 = vpop.f32.mrf.mxu0
        %2539 = vdwg.mxu0
        %2540 = vmatpush.bf16.xpose.msra.mxu0 0
        %2541 = vmatpush.bf16.xpose.msra.mxu0 0
        %2542 = vmatpush.bf16.xpose.msra.mxu0 0
        %2543 = vmatpush.bf16.xpose.msra.mxu0 0
        %2544 = vmatpush.bf16.xpose.msra.mxu0 0
        %2545 = vmatpush.bf16.xpose.msra.mxu0 0
        %2546 = vmatpush.bf16.xpose.msra.mxu0 0
        %2547 = vmatpush.bf16.xpose.msra.mxu0 %v1496
        %2548 = vmatmul.bf16.gmra.mxu0 %v746
        %v2549 = vpop.f32.mrf.mxu0
        %v2550 = vadd.f32 %v2537, %v2549
        %v2551 = vpop.f32.mrf.mxu0
        %2552 = vdwg.mxu0
        %2553 = vmatpush.bf16.xpose.msra.mxu0 0
        %2554 = vmatpush.bf16.xpose.msra.mxu0 0
        %2555 = vmatpush.bf16.xpose.msra.mxu0 0
        %2556 = vmatpush.bf16.xpose.msra.mxu0 0
        %2557 = vmatpush.bf16.xpose.msra.mxu0 0
        %2558 = vmatpush.bf16.xpose.msra.mxu0 0
        %2559 = vmatpush.bf16.xpose.msra.mxu0 0
        %2560 = vmatpush.bf16.xpose.msra.mxu0 %v1497
        %2561 = vmatmul.bf16.gmra.mxu0 %v747
        %v2562 = vpop.f32.mrf.mxu0
        %v2563 = vadd.f32 %v2550, %v2562
        %v2564 = vpop.f32.mrf.mxu0
        %2565 = vdwg.mxu0
        %2566 = vmatpush.bf16.xpose.msra.mxu0 0
        %2567 = vmatpush.bf16.xpose.msra.mxu0 0
        %2568 = vmatpush.bf16.xpose.msra.mxu0 0
        %2569 = vmatpush.bf16.xpose.msra.mxu0 0
        %2570 = vmatpush.bf16.xpose.msra.mxu0 0
        %2571 = vmatpush.bf16.xpose.msra.mxu0 0
        %2572 = vmatpush.bf16.xpose.msra.mxu0 0
        %2573 = vmatpush.bf16.xpose.msra.mxu0 %v1498
        %2574 = vmatmul.bf16.gmra.mxu0 %v748
        %v2575 = vpop.f32.mrf.mxu0
        %v2576 = vadd.f32 %v2563, %v2575
        %v2577 = vpop.f32.mrf.mxu0
        %2578 = vdwg.mxu0
        %2579 = vmatpush.bf16.xpose.msra.mxu0 0
        %2580 = vmatpush.bf16.xpose.msra.mxu0 0
        %2581 = vmatpush.bf16.xpose.msra.mxu0 0
        %2582 = vmatpush.bf16.xpose.msra.mxu0 0
        %2583 = vmatpush.bf16.xpose.msra.mxu0 0
        %2584 = vmatpush.bf16.xpose.msra.mxu0 0
        %2585 = vmatpush.bf16.xpose.msra.mxu0 0
        %2586 = vmatpush.bf16.xpose.msra.mxu0 %v1499
        %2587 = vmatmul.bf16.gmra.mxu0 %v749
        %v2588 = vpop.f32.mrf.mxu0
        %v2589 = vadd.f32 %v2576, %v2588
        %v2590 = vpop.f32.mrf.mxu0
        %2591 = vdwg.mxu0
        %2592 = vmatpush.bf16.xpose.msra.mxu0 0
        %2593 = vmatpush.bf16.xpose.msra.mxu0 0
        %2594 = vmatpush.bf16.xpose.msra.mxu0 0
        %2595 = vmatpush.bf16.xpose.msra.mxu0 0
        %2596 = vmatpush.bf16.xpose.msra.mxu0 0
        %2597 = vmatpush.bf16.xpose.msra.mxu0 0
        %2598 = vmatpush.bf16.xpose.msra.mxu0 0
        %2599 = vmatpush.bf16.xpose.msra.mxu0 %v1500
        %2600 = vmatmul.bf16.gmra.mxu0 %v750
        %v2601 = vpop.f32.mrf.mxu0
        %v2602 = vadd.f32 %v2589, %v2601
        %v2603 = vpop.f32.mrf.mxu0
        %2604 = vdwg.mxu0
        %2605 = vmatpush.bf16.xpose.msra.mxu0 0
        %2606 = vmatpush.bf16.xpose.msra.mxu0 0
        %2607 = vmatpush.bf16.xpose.msra.mxu0 0
        %2608 = vmatpush.bf16.xpose.msra.mxu0 0
        %2609 = vmatpush.bf16.xpose.msra.mxu0 0
        %2610 = vmatpush.bf16.xpose.msra.mxu0 0
        %2611 = vmatpush.bf16.xpose.msra.mxu0 0
        %2612 = vmatpush.bf16.xpose.msra.mxu0 %v1501
        %2613 = vmatmul.bf16.gmra.mxu0 %v751
        %v2614 = vpop.f32.mrf.mxu0
        %v2615 = vadd.f32 %v2602, %v2614
        %v2616 = vpop.f32.mrf.mxu0
        %2617 = vdwg.mxu0
        %2618 = vmatpush.bf16.xpose.msra.mxu0 0
        %2619 = vmatpush.bf16.xpose.msra.mxu0 0
        %2620 = vmatpush.bf16.xpose.msra.mxu0 0
        %2621 = vmatpush.bf16.xpose.msra.mxu0 0
        %2622 = vmatpush.bf16.xpose.msra.mxu0 0
        %2623 = vmatpush.bf16.xpose.msra.mxu0 0
        %2624 = vmatpush.bf16.xpose.msra.mxu0 0
        %2625 = vmatpush.bf16.xpose.msra.mxu0 %v1502
        %2626 = vmatmul.bf16.gmra.mxu0 %v752
        %v2627 = vpop.f32.mrf.mxu0
        %v2628 = vadd.f32 %v2615, %v2627
        %v2629 = vpop.f32.mrf.mxu0
        %2630 = vdwg.mxu0
        %2631 = vmatpush.bf16.xpose.msra.mxu0 0
        %2632 = vmatpush.bf16.xpose.msra.mxu0 0
        %2633 = vmatpush.bf16.xpose.msra.mxu0 0
        %2634 = vmatpush.bf16.xpose.msra.mxu0 0
        %2635 = vmatpush.bf16.xpose.msra.mxu0 0
        %2636 = vmatpush.bf16.xpose.msra.mxu0 0
        %2637 = vmatpush.bf16.xpose.msra.mxu0 0
        %2638 = vmatpush.bf16.xpose.msra.mxu0 %v1503
        %2639 = vmatmul.bf16.gmra.mxu0 %v753
        %v2640 = vpop.f32.mrf.mxu0
        %v2641 = vadd.f32 %v2628, %v2640
        %v2642 = vpop.f32.mrf.mxu0
        %2643 = vdwg.mxu0
        %2644 = vmatpush.bf16.xpose.msra.mxu0 0
        %2645 = vmatpush.bf16.xpose.msra.mxu0 0
        %2646 = vmatpush.bf16.xpose.msra.mxu0 0
        %2647 = vmatpush.bf16.xpose.msra.mxu0 0
        %2648 = vmatpush.bf16.xpose.msra.mxu0 0
        %2649 = vmatpush.bf16.xpose.msra.mxu0 0
        %2650 = vmatpush.bf16.xpose.msra.mxu0 0
        %2651 = vmatpush.bf16.xpose.msra.mxu0 %v1504
        %2652 = vmatmul.bf16.gmra.mxu0 %v754
        %v2653 = vpop.f32.mrf.mxu0
        %v2654 = vadd.f32 %v2641, %v2653
        %v2655 = vpop.f32.mrf.mxu0
        %2656 = vdwg.mxu0
        %2657 = vmatpush.bf16.xpose.msra.mxu0 0
        %2658 = vmatpush.bf16.xpose.msra.mxu0 0
        %2659 = vmatpush.bf16.xpose.msra.mxu0 0
        %2660 = vmatpush.bf16.xpose.msra.mxu0 0
        %2661 = vmatpush.bf16.xpose.msra.mxu0 0
        %2662 = vmatpush.bf16.xpose.msra.mxu0 0
        %2663 = vmatpush.bf16.xpose.msra.mxu0 0
        %2664 = vmatpush.bf16.xpose.msra.mxu0 %v1505
        %2665 = vmatmul.bf16.gmra.mxu0 %v755
        %v2666 = vpop.f32.mrf.mxu0
        %v2667 = vadd.f32 %v2654, %v2666
        %v2668 = vpop.f32.mrf.mxu0
        %2669 = vdwg.mxu0
        %2670 = vmatpush.bf16.xpose.msra.mxu0 0
        %2671 = vmatpush.bf16.xpose.msra.mxu0 0
        %2672 = vmatpush.bf16.xpose.msra.mxu0 0
        %2673 = vmatpush.bf16.xpose.msra.mxu0 0
        %2674 = vmatpush.bf16.xpose.msra.mxu0 0
        %2675 = vmatpush.bf16.xpose.msra.mxu0 0
        %2676 = vmatpush.bf16.xpose.msra.mxu0 0
        %2677 = vmatpush.bf16.xpose.msra.mxu0 %v1506
        %2678 = vmatmul.bf16.gmra.mxu0 %v756
        %v2679 = vpop.f32.mrf.mxu0
        %v2680 = vadd.f32 %v2667, %v2679
        %v2681 = vpop.f32.mrf.mxu0
        %2682 = vdwg.mxu0
        %2683 = vmatpush.bf16.xpose.msra.mxu0 0
        %2684 = vmatpush.bf16.xpose.msra.mxu0 0
        %2685 = vmatpush.bf16.xpose.msra.mxu0 0
        %2686 = vmatpush.bf16.xpose.msra.mxu0 0
        %2687 = vmatpush.bf16.xpose.msra.mxu0 0
        %2688 = vmatpush.bf16.xpose.msra.mxu0 0
        %2689 = vmatpush.bf16.xpose.msra.mxu0 0
        %2690 = vmatpush.bf16.xpose.msra.mxu0 %v1507
        %2691 = vmatmul.bf16.gmra.mxu0 %v757
        %v2692 = vpop.f32.mrf.mxu0
        %v2693 = vadd.f32 %v2680, %v2692
        %v2694 = vpop.f32.mrf.mxu0
        %2695 = vdwg.mxu0
        %2696 = vmatpush.bf16.xpose.msra.mxu0 0
        %2697 = vmatpush.bf16.xpose.msra.mxu0 0
        %2698 = vmatpush.bf16.xpose.msra.mxu0 0
        %2699 = vmatpush.bf16.xpose.msra.mxu0 0
        %2700 = vmatpush.bf16.xpose.msra.mxu0 0
        %2701 = vmatpush.bf16.xpose.msra.mxu0 0
        %2702 = vmatpush.bf16.xpose.msra.mxu0 0
        %2703 = vmatpush.bf16.xpose.msra.mxu0 %v1508
        %2704 = vmatmul.bf16.gmra.mxu0 %v758
        %v2705 = vpop.f32.mrf.mxu0
        %v2706 = vadd.f32 %v2693, %v2705
        %v2707 = vpop.f32.mrf.mxu0
        %2708 = vdwg.mxu0
        %2709 = vmatpush.bf16.xpose.msra.mxu0 0
        %2710 = vmatpush.bf16.xpose.msra.mxu0 0
        %2711 = vmatpush.bf16.xpose.msra.mxu0 0
        %2712 = vmatpush.bf16.xpose.msra.mxu0 0
        %2713 = vmatpush.bf16.xpose.msra.mxu0 0
        %2714 = vmatpush.bf16.xpose.msra.mxu0 0
        %2715 = vmatpush.bf16.xpose.msra.mxu0 0
        %2716 = vmatpush.bf16.xpose.msra.mxu0 %v1509
        %2717 = vmatmul.bf16.gmra.mxu0 %v759
        %v2718 = vpop.f32.mrf.mxu0
        %v2719 = vadd.f32 %v2706, %v2718
        %v2720 = vpop.f32.mrf.mxu0
        %2721 = vdwg.mxu0
        %2722 = vmatpush.bf16.xpose.msra.mxu0 0
        %2723 = vmatpush.bf16.xpose.msra.mxu0 0
        %2724 = vmatpush.bf16.xpose.msra.mxu0 0
        %2725 = vmatpush.bf16.xpose.msra.mxu0 0
        %2726 = vmatpush.bf16.xpose.msra.mxu0 0
        %2727 = vmatpush.bf16.xpose.msra.mxu0 0
        %2728 = vmatpush.bf16.xpose.msra.mxu0 0
        %2729 = vmatpush.bf16.xpose.msra.mxu0 %v1510
        %2730 = vmatmul.bf16.gmra.mxu0 %v760
        %v2731 = vpop.f32.mrf.mxu0
        %v2732 = vadd.f32 %v2719, %v2731
        %v2733 = vpop.f32.mrf.mxu0
        %2734 = vdwg.mxu0
        %2735 = vmatpush.bf16.xpose.msra.mxu0 0
        %2736 = vmatpush.bf16.xpose.msra.mxu0 0
        %2737 = vmatpush.bf16.xpose.msra.mxu0 0
        %2738 = vmatpush.bf16.xpose.msra.mxu0 0
        %2739 = vmatpush.bf16.xpose.msra.mxu0 0
        %2740 = vmatpush.bf16.xpose.msra.mxu0 0
        %2741 = vmatpush.bf16.xpose.msra.mxu0 0
        %2742 = vmatpush.bf16.xpose.msra.mxu0 %v1511
        %2743 = vmatmul.bf16.gmra.mxu0 %v761
        %v2744 = vpop.f32.mrf.mxu0
        %v2745 = vadd.f32 %v2732, %v2744
        %v2746 = vpop.f32.mrf.mxu0
        %2747 = vdwg.mxu0
        %2748 = vmatpush.bf16.xpose.msra.mxu0 0
        %2749 = vmatpush.bf16.xpose.msra.mxu0 0
        %2750 = vmatpush.bf16.xpose.msra.mxu0 0
        %2751 = vmatpush.bf16.xpose.msra.mxu0 0
        %2752 = vmatpush.bf16.xpose.msra.mxu0 0
        %2753 = vmatpush.bf16.xpose.msra.mxu0 0
        %2754 = vmatpush.bf16.xpose.msra.mxu0 0
        %2755 = vmatpush.bf16.xpose.msra.mxu0 %v1512
        %2756 = vmatmul.bf16.gmra.mxu0 %v762
        %v2757 = vpop.f32.mrf.mxu0
        %v2758 = vadd.f32 %v2745, %v2757
        %v2759 = vpop.f32.mrf.mxu0
        %2760 = vdwg.mxu0
        %2761 = vmatpush.bf16.xpose.msra.mxu0 0
        %2762 = vmatpush.bf16.xpose.msra.mxu0 0
        %2763 = vmatpush.bf16.xpose.msra.mxu0 0
        %2764 = vmatpush.bf16.xpose.msra.mxu0 0
        %2765 = vmatpush.bf16.xpose.msra.mxu0 0
        %2766 = vmatpush.bf16.xpose.msra.mxu0 0
        %2767 = vmatpush.bf16.xpose.msra.mxu0 0
        %2768 = vmatpush.bf16.xpose.msra.mxu0 %v1513
        %2769 = vmatmul.bf16.gmra.mxu0 %v763
        %v2770 = vpop.f32.mrf.mxu0
        %v2771 = vadd.f32 %v2758, %v2770
        %v2772 = vpop.f32.mrf.mxu0
        %2773 = vdwg.mxu0
        %2774 = vmatpush.bf16.xpose.msra.mxu0 0
        %2775 = vmatpush.bf16.xpose.msra.mxu0 0
        %2776 = vmatpush.bf16.xpose.msra.mxu0 0
        %2777 = vmatpush.bf16.xpose.msra.mxu0 0
        %2778 = vmatpush.bf16.xpose.msra.mxu0 0
        %2779 = vmatpush.bf16.xpose.msra.mxu0 0
        %2780 = vmatpush.bf16.xpose.msra.mxu0 0
        %2781 = vmatpush.bf16.xpose.msra.mxu0 %v1514
        %2782 = vmatmul.bf16.gmra.mxu0 %v764
        %v2783 = vpop.f32.mrf.mxu0
        %v2784 = vadd.f32 %v2771, %v2783
        %v2785 = vpop.f32.mrf.mxu0
        %2786 = vdwg.mxu0
        %2787 = vmatpush.bf16.xpose.msra.mxu0 0
        %2788 = vmatpush.bf16.xpose.msra.mxu0 0
        %2789 = vmatpush.bf16.xpose.msra.mxu0 0
        %2790 = vmatpush.bf16.xpose.msra.mxu0 0
        %2791 = vmatpush.bf16.xpose.msra.mxu0 0
        %2792 = vmatpush.bf16.xpose.msra.mxu0 0
        %2793 = vmatpush.bf16.xpose.msra.mxu0 0
        %2794 = vmatpush.bf16.xpose.msra.mxu0 %v1515
        %2795 = vmatmul.bf16.gmra.mxu0 %v765
        %v2796 = vpop.f32.mrf.mxu0
        %v2797 = vadd.f32 %v2784, %v2796
        %v2798 = vpop.f32.mrf.mxu0
        %2799 = vdwg.mxu0
        %2800 = vmatpush.bf16.xpose.msra.mxu0 0
        %2801 = vmatpush.bf16.xpose.msra.mxu0 0
        %2802 = vmatpush.bf16.xpose.msra.mxu0 0
        %2803 = vmatpush.bf16.xpose.msra.mxu0 0
        %2804 = vmatpush.bf16.xpose.msra.mxu0 0
        %2805 = vmatpush.bf16.xpose.msra.mxu0 0
        %2806 = vmatpush.bf16.xpose.msra.mxu0 0
        %2807 = vmatpush.bf16.xpose.msra.mxu0 %v1516
        %2808 = vmatmul.bf16.gmra.mxu0 %v766
        %v2809 = vpop.f32.mrf.mxu0
        %v2810 = vadd.f32 %v2797, %v2809
        %v2811 = vpop.f32.mrf.mxu0
        %2812 = vdwg.mxu0
        %2813 = vmatpush.bf16.xpose.msra.mxu0 0
        %2814 = vmatpush.bf16.xpose.msra.mxu0 0
        %2815 = vmatpush.bf16.xpose.msra.mxu0 0
        %2816 = vmatpush.bf16.xpose.msra.mxu0 0
        %2817 = vmatpush.bf16.xpose.msra.mxu0 0
        %2818 = vmatpush.bf16.xpose.msra.mxu0 0
        %2819 = vmatpush.bf16.xpose.msra.mxu0 0
        %2820 = vmatpush.bf16.xpose.msra.mxu0 %v1517
        %2821 = vmatmul.bf16.gmra.mxu0 %v767
        %v2822 = vpop.f32.mrf.mxu0
        %v2823 = vadd.f32 %v2810, %v2822
        %v2824 = vpop.f32.mrf.mxu0
        %2825 = vdwg.mxu0
        %2826 = vmatpush.bf16.xpose.msra.mxu0 0
        %2827 = vmatpush.bf16.xpose.msra.mxu0 0
        %2828 = vmatpush.bf16.xpose.msra.mxu0 0
        %2829 = vmatpush.bf16.xpose.msra.mxu0 0
        %2830 = vmatpush.bf16.xpose.msra.mxu0 0
        %2831 = vmatpush.bf16.xpose.msra.mxu0 0
        %2832 = vmatpush.bf16.xpose.msra.mxu0 0
        %2833 = vmatpush.bf16.xpose.msra.mxu0 %v1518
        %2834 = vmatmul.bf16.gmra.mxu0 %v768
        %v2835 = vpop.f32.mrf.mxu0
        %v2836 = vadd.f32 %v2823, %v2835
        %v2837 = vpop.f32.mrf.mxu0
        %2838 = vdwg.mxu0
        %2839 = vmatpush.bf16.xpose.msra.mxu0 0
        %2840 = vmatpush.bf16.xpose.msra.mxu0 0
        %2841 = vmatpush.bf16.xpose.msra.mxu0 0
        %2842 = vmatpush.bf16.xpose.msra.mxu0 0
        %2843 = vmatpush.bf16.xpose.msra.mxu0 0
        %2844 = vmatpush.bf16.xpose.msra.mxu0 0
        %2845 = vmatpush.bf16.xpose.msra.mxu0 0
        %2846 = vmatpush.bf16.xpose.msra.mxu0 %v1519
        %2847 = vmatmul.bf16.gmra.mxu0 %v769
        %v2848 = vpop.f32.mrf.mxu0
        %v2849 = vadd.f32 %v2836, %v2848
        %v2850 = vpop.f32.mrf.mxu0
        %2851 = vdwg.mxu0
        %2852 = vmatpush.bf16.xpose.msra.mxu0 0
        %2853 = vmatpush.bf16.xpose.msra.mxu0 0
        %2854 = vmatpush.bf16.xpose.msra.mxu0 0
        %2855 = vmatpush.bf16.xpose.msra.mxu0 0
        %2856 = vmatpush.bf16.xpose.msra.mxu0 0
        %2857 = vmatpush.bf16.xpose.msra.mxu0 0
        %2858 = vmatpush.bf16.xpose.msra.mxu0 0
        %2859 = vmatpush.bf16.xpose.msra.mxu0 %v1520
        %2860 = vmatmul.bf16.gmra.mxu0 %v770
        %v2861 = vpop.f32.mrf.mxu0
        %v2862 = vadd.f32 %v2849, %v2861
        %v2863 = vpop.f32.mrf.mxu0
        %2864 = vdwg.mxu0
        %2865 = vmatpush.bf16.xpose.msra.mxu0 0
        %2866 = vmatpush.bf16.xpose.msra.mxu0 0
        %2867 = vmatpush.bf16.xpose.msra.mxu0 0
        %2868 = vmatpush.bf16.xpose.msra.mxu0 0
        %2869 = vmatpush.bf16.xpose.msra.mxu0 0
        %2870 = vmatpush.bf16.xpose.msra.mxu0 0
        %2871 = vmatpush.bf16.xpose.msra.mxu0 0
        %2872 = vmatpush.bf16.xpose.msra.mxu0 %v1521
        %2873 = vmatmul.bf16.gmra.mxu0 %v771
        %v2874 = vpop.f32.mrf.mxu0
        %v2875 = vadd.f32 %v2862, %v2874
        %v2876 = vpop.f32.mrf.mxu0
        %2877 = vdwg.mxu0
        %2878 = vmatpush.bf16.xpose.msra.mxu0 0
        %2879 = vmatpush.bf16.xpose.msra.mxu0 0
        %2880 = vmatpush.bf16.xpose.msra.mxu0 0
        %2881 = vmatpush.bf16.xpose.msra.mxu0 0
        %2882 = vmatpush.bf16.xpose.msra.mxu0 0
        %2883 = vmatpush.bf16.xpose.msra.mxu0 0
        %2884 = vmatpush.bf16.xpose.msra.mxu0 0
        %2885 = vmatpush.bf16.xpose.msra.mxu0 %v1522
        %2886 = vmatmul.bf16.gmra.mxu0 %v772
        %v2887 = vpop.f32.mrf.mxu0
        %v2888 = vadd.f32 %v2875, %v2887
        %v2889 = vpop.f32.mrf.mxu0
        %2890 = vdwg.mxu0
        %2891 = vmatpush.bf16.xpose.msra.mxu0 0
        %2892 = vmatpush.bf16.xpose.msra.mxu0 0
        %2893 = vmatpush.bf16.xpose.msra.mxu0 0
        %2894 = vmatpush.bf16.xpose.msra.mxu0 0
        %2895 = vmatpush.bf16.xpose.msra.mxu0 0
        %2896 = vmatpush.bf16.xpose.msra.mxu0 0
        %2897 = vmatpush.bf16.xpose.msra.mxu0 0
        %2898 = vmatpush.bf16.xpose.msra.mxu0 %v1523
        %2899 = vmatmul.bf16.gmra.mxu0 %v773
        %v2900 = vpop.f32.mrf.mxu0
        %v2901 = vadd.f32 %v2888, %v2900
        %v2902 = vpop.f32.mrf.mxu0
        %2903 = vdwg.mxu0
        %2904 = vmatpush.bf16.xpose.msra.mxu0 0
        %2905 = vmatpush.bf16.xpose.msra.mxu0 0
        %2906 = vmatpush.bf16.xpose.msra.mxu0 0
        %2907 = vmatpush.bf16.xpose.msra.mxu0 0
        %2908 = vmatpush.bf16.xpose.msra.mxu0 0
        %2909 = vmatpush.bf16.xpose.msra.mxu0 0
        %2910 = vmatpush.bf16.xpose.msra.mxu0 0
        %2911 = vmatpush.bf16.xpose.msra.mxu0 %v1524
        %2912 = vmatmul.bf16.gmra.mxu0 %v774
        %v2913 = vpop.f32.mrf.mxu0
        %v2914 = vadd.f32 %v2901, %v2913
        %v2915 = vpop.f32.mrf.mxu0
        %2916 = vdwg.mxu0
        %2917 = vmatpush.bf16.xpose.msra.mxu0 0
        %2918 = vmatpush.bf16.xpose.msra.mxu0 0
        %2919 = vmatpush.bf16.xpose.msra.mxu0 0
        %2920 = vmatpush.bf16.xpose.msra.mxu0 0
        %2921 = vmatpush.bf16.xpose.msra.mxu0 0
        %2922 = vmatpush.bf16.xpose.msra.mxu0 0
        %2923 = vmatpush.bf16.xpose.msra.mxu0 0
        %2924 = vmatpush.bf16.xpose.msra.mxu0 %v1525
        %2925 = vmatmul.bf16.gmra.mxu0 %v775
        %v2926 = vpop.f32.mrf.mxu0
        %v2927 = vadd.f32 %v2914, %v2926
        %v2928 = vpop.f32.mrf.mxu0
        %2929 = vdwg.mxu0
        %2930 = vmatpush.bf16.xpose.msra.mxu0 0
        %2931 = vmatpush.bf16.xpose.msra.mxu0 0
        %2932 = vmatpush.bf16.xpose.msra.mxu0 0
        %2933 = vmatpush.bf16.xpose.msra.mxu0 0
        %2934 = vmatpush.bf16.xpose.msra.mxu0 0
        %2935 = vmatpush.bf16.xpose.msra.mxu0 0
        %2936 = vmatpush.bf16.xpose.msra.mxu0 0
        %2937 = vmatpush.bf16.xpose.msra.mxu0 %v1526
        %2938 = vmatmul.bf16.gmra.mxu0 %v776
        %v2939 = vpop.f32.mrf.mxu0
        %v2940 = vadd.f32 %v2927, %v2939
        %v2941 = vpop.f32.mrf.mxu0
        %2942 = vdwg.mxu0
        %2943 = vmatpush.bf16.xpose.msra.mxu0 0
        %2944 = vmatpush.bf16.xpose.msra.mxu0 0
        %2945 = vmatpush.bf16.xpose.msra.mxu0 0
        %2946 = vmatpush.bf16.xpose.msra.mxu0 0
        %2947 = vmatpush.bf16.xpose.msra.mxu0 0
        %2948 = vmatpush.bf16.xpose.msra.mxu0 0
        %2949 = vmatpush.bf16.xpose.msra.mxu0 0
        %2950 = vmatpush.bf16.xpose.msra.mxu0 %v1527
        %2951 = vmatmul.bf16.gmra.mxu0 %v777
        %v2952 = vpop.f32.mrf.mxu0
        %v2953 = vadd.f32 %v2940, %v2952
        %v2954 = vpop.f32.mrf.mxu0
        %2955 = vdwg.mxu0
        %2956 = vmatpush.bf16.xpose.msra.mxu0 0
        %2957 = vmatpush.bf16.xpose.msra.mxu0 0
        %2958 = vmatpush.bf16.xpose.msra.mxu0 0
        %2959 = vmatpush.bf16.xpose.msra.mxu0 0
        %2960 = vmatpush.bf16.xpose.msra.mxu0 0
        %2961 = vmatpush.bf16.xpose.msra.mxu0 0
        %2962 = vmatpush.bf16.xpose.msra.mxu0 0
        %2963 = vmatpush.bf16.xpose.msra.mxu0 %v1528
        %2964 = vmatmul.bf16.gmra.mxu0 %v778
        %v2965 = vpop.f32.mrf.mxu0
        %v2966 = vadd.f32 %v2953, %v2965
        %v2967 = vpop.f32.mrf.mxu0
        %2968 = vdwg.mxu0
        %2969 = vmatpush.bf16.xpose.msra.mxu0 0
        %2970 = vmatpush.bf16.xpose.msra.mxu0 0
        %2971 = vmatpush.bf16.xpose.msra.mxu0 0
        %2972 = vmatpush.bf16.xpose.msra.mxu0 0
        %2973 = vmatpush.bf16.xpose.msra.mxu0 0
        %2974 = vmatpush.bf16.xpose.msra.mxu0 0
        %2975 = vmatpush.bf16.xpose.msra.mxu0 0
        %2976 = vmatpush.bf16.xpose.msra.mxu0 %v1529
        %2977 = vmatmul.bf16.gmra.mxu0 %v779
        %v2978 = vpop.f32.mrf.mxu0
        %v2979 = vadd.f32 %v2966, %v2978
        %v2980 = vpop.f32.mrf.mxu0
        %2981 = vdwg.mxu0
        %2982 = vmatpush.bf16.xpose.msra.mxu0 0
        %2983 = vmatpush.bf16.xpose.msra.mxu0 0
        %2984 = vmatpush.bf16.xpose.msra.mxu0 0
        %2985 = vmatpush.bf16.xpose.msra.mxu0 0
        %2986 = vmatpush.bf16.xpose.msra.mxu0 0
        %2987 = vmatpush.bf16.xpose.msra.mxu0 0
        %2988 = vmatpush.bf16.xpose.msra.mxu0 0
        %2989 = vmatpush.bf16.xpose.msra.mxu0 %v1530
        %2990 = vmatmul.bf16.gmra.mxu0 %v780
        %v2991 = vpop.f32.mrf.mxu0
        %v2992 = vadd.f32 %v2979, %v2991
        %v2993 = vpop.f32.mrf.mxu0
        %2994 = vdwg.mxu0
        %2995 = vmatpush.bf16.xpose.msra.mxu0 0
        %2996 = vmatpush.bf16.xpose.msra.mxu0 0
        %2997 = vmatpush.bf16.xpose.msra.mxu0 0
        %2998 = vmatpush.bf16.xpose.msra.mxu0 0
        %2999 = vmatpush.bf16.xpose.msra.mxu0 0
        %3000 = vmatpush.bf16.xpose.msra.mxu0 0
        %3001 = vmatpush.bf16.xpose.msra.mxu0 0
        %3002 = vmatpush.bf16.xpose.msra.mxu0 %v1531
        %3003 = vmatmul.bf16.gmra.mxu0 %v781
        %v3004 = vpop.f32.mrf.mxu0
        %v3005 = vadd.f32 %v2992, %v3004
        %v3006 = vpop.f32.mrf.mxu0
        %3007 = vdwg.mxu0
        %3008 = vmatpush.bf16.xpose.msra.mxu0 0
        %3009 = vmatpush.bf16.xpose.msra.mxu0 0
        %3010 = vmatpush.bf16.xpose.msra.mxu0 0
        %3011 = vmatpush.bf16.xpose.msra.mxu0 0
        %3012 = vmatpush.bf16.xpose.msra.mxu0 0
        %3013 = vmatpush.bf16.xpose.msra.mxu0 0
        %3014 = vmatpush.bf16.xpose.msra.mxu0 0
        %3015 = vmatpush.bf16.xpose.msra.mxu0 %v1532
        %3016 = vmatmul.bf16.gmra.mxu0 %v782
        %v3017 = vpop.f32.mrf.mxu0
        %v3018 = vadd.f32 %v3005, %v3017
        %v3019 = vpop.f32.mrf.mxu0
        %3020 = vdwg.mxu0
        %3021 = vmatpush.bf16.xpose.msra.mxu0 0
        %3022 = vmatpush.bf16.xpose.msra.mxu0 0
        %3023 = vmatpush.bf16.xpose.msra.mxu0 0
        %3024 = vmatpush.bf16.xpose.msra.mxu0 0
        %3025 = vmatpush.bf16.xpose.msra.mxu0 0
        %3026 = vmatpush.bf16.xpose.msra.mxu0 0
        %3027 = vmatpush.bf16.xpose.msra.mxu0 0
        %3028 = vmatpush.bf16.xpose.msra.mxu0 %v1533
        %3029 = vmatmul.bf16.gmra.mxu0 %v783
        %v3030 = vpop.f32.mrf.mxu0
        %v3031 = vadd.f32 %v3018, %v3030
        %v3032 = vpop.f32.mrf.mxu0
        %3033 = vdwg.mxu0
        %3034 = vmatpush.bf16.xpose.msra.mxu0 0
        %3035 = vmatpush.bf16.xpose.msra.mxu0 0
        %3036 = vmatpush.bf16.xpose.msra.mxu0 0
        %3037 = vmatpush.bf16.xpose.msra.mxu0 0
        %3038 = vmatpush.bf16.xpose.msra.mxu0 0
        %3039 = vmatpush.bf16.xpose.msra.mxu0 0
        %3040 = vmatpush.bf16.xpose.msra.mxu0 0
        %3041 = vmatpush.bf16.xpose.msra.mxu0 %v1534
        %3042 = vmatmul.bf16.gmra.mxu0 %v784
        %v3043 = vpop.f32.mrf.mxu0
        %v3044 = vadd.f32 %v3031, %v3043
        %v3045 = vpop.f32.mrf.mxu0
        %3046 = vdwg.mxu0
        %3047 = vmatpush.bf16.xpose.msra.mxu0 0
        %3048 = vmatpush.bf16.xpose.msra.mxu0 0
        %3049 = vmatpush.bf16.xpose.msra.mxu0 0
        %3050 = vmatpush.bf16.xpose.msra.mxu0 0
        %3051 = vmatpush.bf16.xpose.msra.mxu0 0
        %3052 = vmatpush.bf16.xpose.msra.mxu0 0
        %3053 = vmatpush.bf16.xpose.msra.mxu0 0
        %3054 = vmatpush.bf16.xpose.msra.mxu0 %v1535
        %3055 = vmatmul.bf16.gmra.mxu0 %v785
        %v3056 = vpop.f32.mrf.mxu0
        %v3057 = vadd.f32 %v3044, %v3056
        %v3058 = vpop.f32.mrf.mxu0
        %3059 = vdwg.mxu0
        %3060 = vmatpush.bf16.xpose.msra.mxu0 0
        %3061 = vmatpush.bf16.xpose.msra.mxu0 0
        %3062 = vmatpush.bf16.xpose.msra.mxu0 0
        %3063 = vmatpush.bf16.xpose.msra.mxu0 0
        %3064 = vmatpush.bf16.xpose.msra.mxu0 0
        %3065 = vmatpush.bf16.xpose.msra.mxu0 0
        %3066 = vmatpush.bf16.xpose.msra.mxu0 0
        %3067 = vmatpush.bf16.xpose.msra.mxu0 %v1536
        %3068 = vmatmul.bf16.gmra.mxu0 %v786
        %v3069 = vpop.f32.mrf.mxu0
        %v3070 = vadd.f32 %v3057, %v3069
        %v3071 = vpop.f32.mrf.mxu0
        %3072 = vdwg.mxu0
        %3073 = vmatpush.bf16.xpose.msra.mxu0 0
        %3074 = vmatpush.bf16.xpose.msra.mxu0 0
        %3075 = vmatpush.bf16.xpose.msra.mxu0 0
        %3076 = vmatpush.bf16.xpose.msra.mxu0 0
        %3077 = vmatpush.bf16.xpose.msra.mxu0 0
        %3078 = vmatpush.bf16.xpose.msra.mxu0 0
        %3079 = vmatpush.bf16.xpose.msra.mxu0 0
        %3080 = vmatpush.bf16.xpose.msra.mxu0 %v1537
        %3081 = vmatmul.bf16.gmra.mxu0 %v787
        %v3082 = vpop.f32.mrf.mxu0
        %v3083 = vadd.f32 %v3070, %v3082
        %v3084 = vpop.f32.mrf.mxu0
        %3085 = vdwg.mxu0
        %3086 = vmatpush.bf16.xpose.msra.mxu0 0
        %3087 = vmatpush.bf16.xpose.msra.mxu0 0
        %3088 = vmatpush.bf16.xpose.msra.mxu0 0
        %3089 = vmatpush.bf16.xpose.msra.mxu0 0
        %3090 = vmatpush.bf16.xpose.msra.mxu0 0
        %3091 = vmatpush.bf16.xpose.msra.mxu0 0
        %3092 = vmatpush.bf16.xpose.msra.mxu0 0
        %3093 = vmatpush.bf16.xpose.msra.mxu0 %v1538
        %3094 = vmatmul.bf16.gmra.mxu0 %v788
        %v3095 = vpop.f32.mrf.mxu0
        %v3096 = vadd.f32 %v3083, %v3095
        %v3097 = vpop.f32.mrf.mxu0
        %3098 = vdwg.mxu0
        %3099 = vmatpush.bf16.xpose.msra.mxu0 0
        %3100 = vmatpush.bf16.xpose.msra.mxu0 0
        %3101 = vmatpush.bf16.xpose.msra.mxu0 0
        %3102 = vmatpush.bf16.xpose.msra.mxu0 0
        %3103 = vmatpush.bf16.xpose.msra.mxu0 0
        %3104 = vmatpush.bf16.xpose.msra.mxu0 0
        %3105 = vmatpush.bf16.xpose.msra.mxu0 0
        %3106 = vmatpush.bf16.xpose.msra.mxu0 %v1539
        %3107 = vmatmul.bf16.gmra.mxu0 %v789
        %v3108 = vpop.f32.mrf.mxu0
        %v3109 = vadd.f32 %v3096, %v3108
        %v3110 = vpop.f32.mrf.mxu0
        %3111 = vdwg.mxu0
        %3112 = vmatpush.bf16.xpose.msra.mxu0 0
        %3113 = vmatpush.bf16.xpose.msra.mxu0 0
        %3114 = vmatpush.bf16.xpose.msra.mxu0 0
        %3115 = vmatpush.bf16.xpose.msra.mxu0 0
        %3116 = vmatpush.bf16.xpose.msra.mxu0 0
        %3117 = vmatpush.bf16.xpose.msra.mxu0 0
        %3118 = vmatpush.bf16.xpose.msra.mxu0 0
        %3119 = vmatpush.bf16.xpose.msra.mxu0 %v1540
        %3120 = vmatmul.bf16.gmra.mxu0 %v790
        %v3121 = vpop.f32.mrf.mxu0
        %v3122 = vadd.f32 %v3109, %v3121
        %v3123 = vpop.f32.mrf.mxu0
        %3124 = vdwg.mxu0
        %3125 = vmatpush.bf16.xpose.msra.mxu0 0
        %3126 = vmatpush.bf16.xpose.msra.mxu0 0
        %3127 = vmatpush.bf16.xpose.msra.mxu0 0
        %3128 = vmatpush.bf16.xpose.msra.mxu0 0
        %3129 = vmatpush.bf16.xpose.msra.mxu0 0
        %3130 = vmatpush.bf16.xpose.msra.mxu0 0
        %3131 = vmatpush.bf16.xpose.msra.mxu0 0
        %3132 = vmatpush.bf16.xpose.msra.mxu0 %v1541
        %3133 = vmatmul.bf16.gmra.mxu0 %v791
        %v3134 = vpop.f32.mrf.mxu0
        %v3135 = vadd.f32 %v3122, %v3134
        %v3136 = vpop.f32.mrf.mxu0
        %3137 = vdwg.mxu0
        %3138 = vmatpush.bf16.xpose.msra.mxu0 0
        %3139 = vmatpush.bf16.xpose.msra.mxu0 0
        %3140 = vmatpush.bf16.xpose.msra.mxu0 0
        %3141 = vmatpush.bf16.xpose.msra.mxu0 0
        %3142 = vmatpush.bf16.xpose.msra.mxu0 0
        %3143 = vmatpush.bf16.xpose.msra.mxu0 0
        %3144 = vmatpush.bf16.xpose.msra.mxu0 0
        %3145 = vmatpush.bf16.xpose.msra.mxu0 %v1542
        %3146 = vmatmul.bf16.gmra.mxu0 %v792
        %v3147 = vpop.f32.mrf.mxu0
        %v3148 = vadd.f32 %v3135, %v3147
        %v3149 = vpop.f32.mrf.mxu0
        %3150 = vdwg.mxu0
        %3151 = vmatpush.bf16.xpose.msra.mxu0 0
        %3152 = vmatpush.bf16.xpose.msra.mxu0 0
        %3153 = vmatpush.bf16.xpose.msra.mxu0 0
        %3154 = vmatpush.bf16.xpose.msra.mxu0 0
        %3155 = vmatpush.bf16.xpose.msra.mxu0 0
        %3156 = vmatpush.bf16.xpose.msra.mxu0 0
        %3157 = vmatpush.bf16.xpose.msra.mxu0 0
        %3158 = vmatpush.bf16.xpose.msra.mxu0 %v1543
        %3159 = vmatmul.bf16.gmra.mxu0 %v793
        %v3160 = vpop.f32.mrf.mxu0
        %v3161 = vadd.f32 %v3148, %v3160
        %v3162 = vpop.f32.mrf.mxu0
        %3163 = vdwg.mxu0
        %3164 = vmatpush.bf16.xpose.msra.mxu0 0
        %3165 = vmatpush.bf16.xpose.msra.mxu0 0
        %3166 = vmatpush.bf16.xpose.msra.mxu0 0
        %3167 = vmatpush.bf16.xpose.msra.mxu0 0
        %3168 = vmatpush.bf16.xpose.msra.mxu0 0
        %3169 = vmatpush.bf16.xpose.msra.mxu0 0
        %3170 = vmatpush.bf16.xpose.msra.mxu0 0
        %3171 = vmatpush.bf16.xpose.msra.mxu0 %v1544
        %3172 = vmatmul.bf16.gmra.mxu0 %v794
        %v3173 = vpop.f32.mrf.mxu0
        %v3174 = vadd.f32 %v3161, %v3173
        %v3175 = vpop.f32.mrf.mxu0
        %3176 = vdwg.mxu0
        %3177 = vmatpush.bf16.xpose.msra.mxu0 0
        %3178 = vmatpush.bf16.xpose.msra.mxu0 0
        %3179 = vmatpush.bf16.xpose.msra.mxu0 0
        %3180 = vmatpush.bf16.xpose.msra.mxu0 0
        %3181 = vmatpush.bf16.xpose.msra.mxu0 0
        %3182 = vmatpush.bf16.xpose.msra.mxu0 0
        %3183 = vmatpush.bf16.xpose.msra.mxu0 0
        %3184 = vmatpush.bf16.xpose.msra.mxu0 %v1545
        %3185 = vmatmul.bf16.gmra.mxu0 %v795
        %v3186 = vpop.f32.mrf.mxu0
        %v3187 = vadd.f32 %v3174, %v3186
        %v3188 = vpop.f32.mrf.mxu0
        %3189 = vdwg.mxu0
        %3190 = vmatpush.bf16.xpose.msra.mxu0 0
        %3191 = vmatpush.bf16.xpose.msra.mxu0 0
        %3192 = vmatpush.bf16.xpose.msra.mxu0 0
        %3193 = vmatpush.bf16.xpose.msra.mxu0 0
        %3194 = vmatpush.bf16.xpose.msra.mxu0 0
        %3195 = vmatpush.bf16.xpose.msra.mxu0 0
        %3196 = vmatpush.bf16.xpose.msra.mxu0 0
        %3197 = vmatpush.bf16.xpose.msra.mxu0 %v1546
        %3198 = vmatmul.bf16.gmra.mxu0 %v796
        %v3199 = vpop.f32.mrf.mxu0
        %v3200 = vadd.f32 %v3187, %v3199
        %v3201 = vpop.f32.mrf.mxu0
        %3202 = vdwg.mxu0
        %3203 = vmatpush.bf16.xpose.msra.mxu0 0
        %3204 = vmatpush.bf16.xpose.msra.mxu0 0
        %3205 = vmatpush.bf16.xpose.msra.mxu0 0
        %3206 = vmatpush.bf16.xpose.msra.mxu0 0
        %3207 = vmatpush.bf16.xpose.msra.mxu0 0
        %3208 = vmatpush.bf16.xpose.msra.mxu0 0
        %3209 = vmatpush.bf16.xpose.msra.mxu0 0
        %3210 = vmatpush.bf16.xpose.msra.mxu0 %v1547
        %3211 = vmatmul.bf16.gmra.mxu0 %v797
        %v3212 = vpop.f32.mrf.mxu0
        %v3213 = vadd.f32 %v3200, %v3212
        %v3214 = vpop.f32.mrf.mxu0
        %3215 = vdwg.mxu0
        %3216 = vmatpush.bf16.xpose.msra.mxu0 0
        %3217 = vmatpush.bf16.xpose.msra.mxu0 0
        %3218 = vmatpush.bf16.xpose.msra.mxu0 0
        %3219 = vmatpush.bf16.xpose.msra.mxu0 0
        %3220 = vmatpush.bf16.xpose.msra.mxu0 0
        %3221 = vmatpush.bf16.xpose.msra.mxu0 0
        %3222 = vmatpush.bf16.xpose.msra.mxu0 0
        %3223 = vmatpush.bf16.xpose.msra.mxu0 %v1548
        %3224 = vmatmul.bf16.gmra.mxu0 %v798
        %v3225 = vpop.f32.mrf.mxu0
        %v3226 = vadd.f32 %v3213, %v3225
        %v3227 = vpop.f32.mrf.mxu0
        %3228 = vdwg.mxu0
        %3229 = vmatpush.bf16.xpose.msra.mxu0 0
        %3230 = vmatpush.bf16.xpose.msra.mxu0 0
        %3231 = vmatpush.bf16.xpose.msra.mxu0 0
        %3232 = vmatpush.bf16.xpose.msra.mxu0 0
        %3233 = vmatpush.bf16.xpose.msra.mxu0 0
        %3234 = vmatpush.bf16.xpose.msra.mxu0 0
        %3235 = vmatpush.bf16.xpose.msra.mxu0 0
        %3236 = vmatpush.bf16.xpose.msra.mxu0 %v1549
        %3237 = vmatmul.bf16.gmra.mxu0 %v799
        %v3238 = vpop.f32.mrf.mxu0
        %v3239 = vadd.f32 %v3226, %v3238
        %v3240 = vpop.f32.mrf.mxu0
        %3241 = vdwg.mxu0
        %3242 = vmatpush.bf16.xpose.msra.mxu0 0
        %3243 = vmatpush.bf16.xpose.msra.mxu0 0
        %3244 = vmatpush.bf16.xpose.msra.mxu0 0
        %3245 = vmatpush.bf16.xpose.msra.mxu0 0
        %3246 = vmatpush.bf16.xpose.msra.mxu0 0
        %3247 = vmatpush.bf16.xpose.msra.mxu0 0
        %3248 = vmatpush.bf16.xpose.msra.mxu0 0
        %3249 = vmatpush.bf16.xpose.msra.mxu0 %v1550
        %3250 = vmatmul.bf16.gmra.mxu0 %v800
        %v3251 = vpop.f32.mrf.mxu0
        %v3252 = vadd.f32 %v3239, %v3251
        %v3253 = vpop.f32.mrf.mxu0
        %3254 = vdwg.mxu0
        %3255 = vmatpush.bf16.xpose.msra.mxu0 0
        %3256 = vmatpush.bf16.xpose.msra.mxu0 0
        %3257 = vmatpush.bf16.xpose.msra.mxu0 0
        %3258 = vmatpush.bf16.xpose.msra.mxu0 0
        %3259 = vmatpush.bf16.xpose.msra.mxu0 0
        %3260 = vmatpush.bf16.xpose.msra.mxu0 0
        %3261 = vmatpush.bf16.xpose.msra.mxu0 0
        %3262 = vmatpush.bf16.xpose.msra.mxu0 %v1551
        %3263 = vmatmul.bf16.gmra.mxu0 %v801
        %v3264 = vpop.f32.mrf.mxu0
        %v3265 = vadd.f32 %v3252, %v3264
        %v3266 = vpop.f32.mrf.mxu0
        %3267 = vdwg.mxu0
        %3268 = vmatpush.bf16.xpose.msra.mxu0 0
        %3269 = vmatpush.bf16.xpose.msra.mxu0 0
        %3270 = vmatpush.bf16.xpose.msra.mxu0 0
        %3271 = vmatpush.bf16.xpose.msra.mxu0 0
        %3272 = vmatpush.bf16.xpose.msra.mxu0 0
        %3273 = vmatpush.bf16.xpose.msra.mxu0 0
        %3274 = vmatpush.bf16.xpose.msra.mxu0 0
        %3275 = vmatpush.bf16.xpose.msra.mxu0 %v1552
        %3276 = vmatmul.bf16.gmra.mxu0 %v802
        %v3277 = vpop.f32.mrf.mxu0
        %v3278 = vadd.f32 %v3265, %v3277
        %v3279 = vpop.f32.mrf.mxu0
        %3280 = vdwg.mxu0
        %3281 = vmatpush.bf16.xpose.msra.mxu0 0
        %3282 = vmatpush.bf16.xpose.msra.mxu0 0
        %3283 = vmatpush.bf16.xpose.msra.mxu0 0
        %3284 = vmatpush.bf16.xpose.msra.mxu0 0
        %3285 = vmatpush.bf16.xpose.msra.mxu0 0
        %3286 = vmatpush.bf16.xpose.msra.mxu0 0
        %3287 = vmatpush.bf16.xpose.msra.mxu0 0
        %3288 = vmatpush.bf16.xpose.msra.mxu0 %v1553
        %3289 = vmatmul.bf16.gmra.mxu0 %v803
        %v3290 = vpop.f32.mrf.mxu0
        %v3291 = vadd.f32 %v3278, %v3290
        %v3292 = vpop.f32.mrf.mxu0
        %3293 = vdwg.mxu0
        %3294 = vmatpush.bf16.xpose.msra.mxu0 0
        %3295 = vmatpush.bf16.xpose.msra.mxu0 0
        %3296 = vmatpush.bf16.xpose.msra.mxu0 0
        %3297 = vmatpush.bf16.xpose.msra.mxu0 0
        %3298 = vmatpush.bf16.xpose.msra.mxu0 0
        %3299 = vmatpush.bf16.xpose.msra.mxu0 0
        %3300 = vmatpush.bf16.xpose.msra.mxu0 0
        %3301 = vmatpush.bf16.xpose.msra.mxu0 %v1554
        %3302 = vmatmul.bf16.gmra.mxu0 %v804
        %v3303 = vpop.f32.mrf.mxu0
        %v3304 = vadd.f32 %v3291, %v3303
        %v3305 = vpop.f32.mrf.mxu0
        %3306 = vdwg.mxu0
        %3307 = vmatpush.bf16.xpose.msra.mxu0 0
        %3308 = vmatpush.bf16.xpose.msra.mxu0 0
        %3309 = vmatpush.bf16.xpose.msra.mxu0 0
        %3310 = vmatpush.bf16.xpose.msra.mxu0 0
        %3311 = vmatpush.bf16.xpose.msra.mxu0 0
        %3312 = vmatpush.bf16.xpose.msra.mxu0 0
        %3313 = vmatpush.bf16.xpose.msra.mxu0 0
        %3314 = vmatpush.bf16.xpose.msra.mxu0 %v1555
        %3315 = vmatmul.bf16.gmra.mxu0 %v805
        %v3316 = vpop.f32.mrf.mxu0
        %v3317 = vadd.f32 %v3304, %v3316
        %v3318 = vpop.f32.mrf.mxu0
        %3319 = vdwg.mxu0
        %3320 = vmatpush.bf16.xpose.msra.mxu0 0
        %3321 = vmatpush.bf16.xpose.msra.mxu0 0
        %3322 = vmatpush.bf16.xpose.msra.mxu0 0
        %3323 = vmatpush.bf16.xpose.msra.mxu0 0
        %3324 = vmatpush.bf16.xpose.msra.mxu0 0
        %3325 = vmatpush.bf16.xpose.msra.mxu0 0
        %3326 = vmatpush.bf16.xpose.msra.mxu0 0
        %3327 = vmatpush.bf16.xpose.msra.mxu0 %v1556
        %3328 = vmatmul.bf16.gmra.mxu0 %v806
        %v3329 = vpop.f32.mrf.mxu0
        %v3330 = vadd.f32 %v3317, %v3329
        %v3331 = vpop.f32.mrf.mxu0
        %3332 = vdwg.mxu0
        %3333 = vmatpush.bf16.xpose.msra.mxu0 0
        %3334 = vmatpush.bf16.xpose.msra.mxu0 0
        %3335 = vmatpush.bf16.xpose.msra.mxu0 0
        %3336 = vmatpush.bf16.xpose.msra.mxu0 0
        %3337 = vmatpush.bf16.xpose.msra.mxu0 0
        %3338 = vmatpush.bf16.xpose.msra.mxu0 0
        %3339 = vmatpush.bf16.xpose.msra.mxu0 0
        %3340 = vmatpush.bf16.xpose.msra.mxu0 %v1557
        %3341 = vmatmul.bf16.gmra.mxu0 %v807
        %v3342 = vpop.f32.mrf.mxu0
        %v3343 = vadd.f32 %v3330, %v3342
        %v3344 = vpop.f32.mrf.mxu0
        %3345 = vdwg.mxu0
        %3346 = vmatpush.bf16.xpose.msra.mxu0 0
        %3347 = vmatpush.bf16.xpose.msra.mxu0 0
        %3348 = vmatpush.bf16.xpose.msra.mxu0 0
        %3349 = vmatpush.bf16.xpose.msra.mxu0 0
        %3350 = vmatpush.bf16.xpose.msra.mxu0 0
        %3351 = vmatpush.bf16.xpose.msra.mxu0 0
        %3352 = vmatpush.bf16.xpose.msra.mxu0 0
        %3353 = vmatpush.bf16.xpose.msra.mxu0 %v1558
        %3354 = vmatmul.bf16.gmra.mxu0 %v808
        %v3355 = vpop.f32.mrf.mxu0
        %v3356 = vadd.f32 %v3343, %v3355
        %v3357 = vpop.f32.mrf.mxu0
        %3358 = vdwg.mxu0
        %3359 = vmatpush.bf16.xpose.msra.mxu0 0
        %3360 = vmatpush.bf16.xpose.msra.mxu0 0
        %3361 = vmatpush.bf16.xpose.msra.mxu0 0
        %3362 = vmatpush.bf16.xpose.msra.mxu0 0
        %3363 = vmatpush.bf16.xpose.msra.mxu0 0
        %3364 = vmatpush.bf16.xpose.msra.mxu0 0
        %3365 = vmatpush.bf16.xpose.msra.mxu0 0
        %3366 = vmatpush.bf16.xpose.msra.mxu0 %v1559
        %3367 = vmatmul.bf16.gmra.mxu0 %v809
        %v3368 = vpop.f32.mrf.mxu0
        %v3369 = vadd.f32 %v3356, %v3368
        %v3370 = vpop.f32.mrf.mxu0
        %3371 = vdwg.mxu0
        %3372 = vmatpush.bf16.xpose.msra.mxu0 0
        %3373 = vmatpush.bf16.xpose.msra.mxu0 0
        %3374 = vmatpush.bf16.xpose.msra.mxu0 0
        %3375 = vmatpush.bf16.xpose.msra.mxu0 0
        %3376 = vmatpush.bf16.xpose.msra.mxu0 0
        %3377 = vmatpush.bf16.xpose.msra.mxu0 0
        %3378 = vmatpush.bf16.xpose.msra.mxu0 0
        %3379 = vmatpush.bf16.xpose.msra.mxu0 %v1560
        %3380 = vmatmul.bf16.gmra.mxu0 %v810
        %v3381 = vpop.f32.mrf.mxu0
        %v3382 = vadd.f32 %v3369, %v3381
        %v3383 = vpop.f32.mrf.mxu0
        %3384 = vdwg.mxu0
        %3385 = vmatpush.bf16.xpose.msra.mxu0 0
        %3386 = vmatpush.bf16.xpose.msra.mxu0 0
        %3387 = vmatpush.bf16.xpose.msra.mxu0 0
        %3388 = vmatpush.bf16.xpose.msra.mxu0 0
        %3389 = vmatpush.bf16.xpose.msra.mxu0 0
        %3390 = vmatpush.bf16.xpose.msra.mxu0 0
        %3391 = vmatpush.bf16.xpose.msra.mxu0 0
        %3392 = vmatpush.bf16.xpose.msra.mxu0 %v1561
        %3393 = vmatmul.bf16.gmra.mxu0 %v811
        %v3394 = vpop.f32.mrf.mxu0
        %v3395 = vadd.f32 %v3382, %v3394
        %v3396 = vpop.f32.mrf.mxu0
        %3397 = vdwg.mxu0
        %3398 = vmatpush.bf16.xpose.msra.mxu0 0
        %3399 = vmatpush.bf16.xpose.msra.mxu0 0
        %3400 = vmatpush.bf16.xpose.msra.mxu0 0
        %3401 = vmatpush.bf16.xpose.msra.mxu0 0
        %3402 = vmatpush.bf16.xpose.msra.mxu0 0
        %3403 = vmatpush.bf16.xpose.msra.mxu0 0
        %3404 = vmatpush.bf16.xpose.msra.mxu0 0
        %3405 = vmatpush.bf16.xpose.msra.mxu0 %v1562
        %3406 = vmatmul.bf16.gmra.mxu0 %v812
        %v3407 = vpop.f32.mrf.mxu0
        %v3408 = vadd.f32 %v3395, %v3407
        %v3409 = vpop.f32.mrf.mxu0
        %3410 = vdwg.mxu0
        %3411 = vmatpush.bf16.xpose.msra.mxu0 0
        %3412 = vmatpush.bf16.xpose.msra.mxu0 0
        %3413 = vmatpush.bf16.xpose.msra.mxu0 0
        %3414 = vmatpush.bf16.xpose.msra.mxu0 0
        %3415 = vmatpush.bf16.xpose.msra.mxu0 0
        %3416 = vmatpush.bf16.xpose.msra.mxu0 0
        %3417 = vmatpush.bf16.xpose.msra.mxu0 0
        %3418 = vmatpush.bf16.xpose.msra.mxu0 %v1563
        %3419 = vmatmul.bf16.gmra.mxu0 %v813
        %v3420 = vpop.f32.mrf.mxu0
        %v3421 = vadd.f32 %v3408, %v3420
        %v3422 = vpop.f32.mrf.mxu0
        %3423 = vdwg.mxu0
        %3424 = vmatpush.bf16.xpose.msra.mxu0 0
        %3425 = vmatpush.bf16.xpose.msra.mxu0 0
        %3426 = vmatpush.bf16.xpose.msra.mxu0 0
        %3427 = vmatpush.bf16.xpose.msra.mxu0 0
        %3428 = vmatpush.bf16.xpose.msra.mxu0 0
        %3429 = vmatpush.bf16.xpose.msra.mxu0 0
        %3430 = vmatpush.bf16.xpose.msra.mxu0 0
        %3431 = vmatpush.bf16.xpose.msra.mxu0 %v1564
        %3432 = vmatmul.bf16.gmra.mxu0 %v814
        %v3433 = vpop.f32.mrf.mxu0
        %v3434 = vadd.f32 %v3421, %v3433
        %v3435 = vpop.f32.mrf.mxu0
        %3436 = vdwg.mxu0
        %3437 = vmatpush.bf16.xpose.msra.mxu0 0
        %3438 = vmatpush.bf16.xpose.msra.mxu0 0
        %3439 = vmatpush.bf16.xpose.msra.mxu0 0
        %3440 = vmatpush.bf16.xpose.msra.mxu0 0
        %3441 = vmatpush.bf16.xpose.msra.mxu0 0
        %3442 = vmatpush.bf16.xpose.msra.mxu0 0
        %3443 = vmatpush.bf16.xpose.msra.mxu0 0
        %3444 = vmatpush.bf16.xpose.msra.mxu0 %v1565
        %3445 = vmatmul.bf16.gmra.mxu0 %v815
        %v3446 = vpop.f32.mrf.mxu0
        %v3447 = vadd.f32 %v3434, %v3446
        %v3448 = vpop.f32.mrf.mxu0
        %3449 = vdwg.mxu0
        %3450 = vmatpush.bf16.xpose.msra.mxu0 0
        %3451 = vmatpush.bf16.xpose.msra.mxu0 0
        %3452 = vmatpush.bf16.xpose.msra.mxu0 0
        %3453 = vmatpush.bf16.xpose.msra.mxu0 0
        %3454 = vmatpush.bf16.xpose.msra.mxu0 0
        %3455 = vmatpush.bf16.xpose.msra.mxu0 0
        %3456 = vmatpush.bf16.xpose.msra.mxu0 0
        %3457 = vmatpush.bf16.xpose.msra.mxu0 %v1566
        %3458 = vmatmul.bf16.gmra.mxu0 %v816
        %v3459 = vpop.f32.mrf.mxu0
        %v3460 = vadd.f32 %v3447, %v3459
        %v3461 = vpop.f32.mrf.mxu0
        %3462 = vdwg.mxu0
        %3463 = vmatpush.bf16.xpose.msra.mxu0 0
        %3464 = vmatpush.bf16.xpose.msra.mxu0 0
        %3465 = vmatpush.bf16.xpose.msra.mxu0 0
        %3466 = vmatpush.bf16.xpose.msra.mxu0 0
        %3467 = vmatpush.bf16.xpose.msra.mxu0 0
        %3468 = vmatpush.bf16.xpose.msra.mxu0 0
        %3469 = vmatpush.bf16.xpose.msra.mxu0 0
        %3470 = vmatpush.bf16.xpose.msra.mxu0 %v1567
        %3471 = vmatmul.bf16.gmra.mxu0 %v817
        %v3472 = vpop.f32.mrf.mxu0
        %v3473 = vadd.f32 %v3460, %v3472
        %v3474 = vpop.f32.mrf.mxu0
        %3475 = vdwg.mxu0
        %3476 = vmatpush.bf16.xpose.msra.mxu0 0
        %3477 = vmatpush.bf16.xpose.msra.mxu0 0
        %3478 = vmatpush.bf16.xpose.msra.mxu0 0
        %3479 = vmatpush.bf16.xpose.msra.mxu0 0
        %3480 = vmatpush.bf16.xpose.msra.mxu0 0
        %3481 = vmatpush.bf16.xpose.msra.mxu0 0
        %3482 = vmatpush.bf16.xpose.msra.mxu0 0
        %3483 = vmatpush.bf16.xpose.msra.mxu0 %v1568
        %3484 = vmatmul.bf16.gmra.mxu0 %v818
        %v3485 = vpop.f32.mrf.mxu0
        %v3486 = vadd.f32 %v3473, %v3485
        %v3487 = vpop.f32.mrf.mxu0
        %3488 = vdwg.mxu0
        %3489 = vmatpush.bf16.xpose.msra.mxu0 0
        %3490 = vmatpush.bf16.xpose.msra.mxu0 0
        %3491 = vmatpush.bf16.xpose.msra.mxu0 0
        %3492 = vmatpush.bf16.xpose.msra.mxu0 0
        %3493 = vmatpush.bf16.xpose.msra.mxu0 0
        %3494 = vmatpush.bf16.xpose.msra.mxu0 0
        %3495 = vmatpush.bf16.xpose.msra.mxu0 0
        %3496 = vmatpush.bf16.xpose.msra.mxu0 %v1569
        %3497 = vmatmul.bf16.gmra.mxu0 %v819
        %v3498 = vpop.f32.mrf.mxu0
        %v3499 = vadd.f32 %v3486, %v3498
        %v3500 = vpop.f32.mrf.mxu0
        %3501 = vdwg.mxu0
        %3502 = vmatpush.bf16.xpose.msra.mxu0 0
        %3503 = vmatpush.bf16.xpose.msra.mxu0 0
        %3504 = vmatpush.bf16.xpose.msra.mxu0 0
        %3505 = vmatpush.bf16.xpose.msra.mxu0 0
        %3506 = vmatpush.bf16.xpose.msra.mxu0 0
        %3507 = vmatpush.bf16.xpose.msra.mxu0 0
        %3508 = vmatpush.bf16.xpose.msra.mxu0 0
        %3509 = vmatpush.bf16.xpose.msra.mxu0 %v1570
        %3510 = vmatmul.bf16.gmra.mxu0 %v820
        %v3511 = vpop.f32.mrf.mxu0
        %v3512 = vadd.f32 %v3499, %v3511
        %v3513 = vpop.f32.mrf.mxu0
        %3514 = vdwg.mxu0
        %3515 = vmatpush.bf16.xpose.msra.mxu0 0
        %3516 = vmatpush.bf16.xpose.msra.mxu0 0
        %3517 = vmatpush.bf16.xpose.msra.mxu0 0
        %3518 = vmatpush.bf16.xpose.msra.mxu0 0
        %3519 = vmatpush.bf16.xpose.msra.mxu0 0
        %3520 = vmatpush.bf16.xpose.msra.mxu0 0
        %3521 = vmatpush.bf16.xpose.msra.mxu0 0
        %3522 = vmatpush.bf16.xpose.msra.mxu0 %v1571
        %3523 = vmatmul.bf16.gmra.mxu0 %v821
        %v3524 = vpop.f32.mrf.mxu0
        %v3525 = vadd.f32 %v3512, %v3524
        %v3526 = vpop.f32.mrf.mxu0
        %3527 = vdwg.mxu0
        %3528 = vmatpush.bf16.xpose.msra.mxu0 0
        %3529 = vmatpush.bf16.xpose.msra.mxu0 0
        %3530 = vmatpush.bf16.xpose.msra.mxu0 0
        %3531 = vmatpush.bf16.xpose.msra.mxu0 0
        %3532 = vmatpush.bf16.xpose.msra.mxu0 0
        %3533 = vmatpush.bf16.xpose.msra.mxu0 0
        %3534 = vmatpush.bf16.xpose.msra.mxu0 0
        %3535 = vmatpush.bf16.xpose.msra.mxu0 %v1572
        %3536 = vmatmul.bf16.gmra.mxu0 %v822
        %v3537 = vpop.f32.mrf.mxu0
        %v3538 = vadd.f32 %v3525, %v3537
        %v3539 = vpop.f32.mrf.mxu0
        %3540 = vdwg.mxu0
        %3541 = vmatpush.bf16.xpose.msra.mxu0 0
        %3542 = vmatpush.bf16.xpose.msra.mxu0 0
        %3543 = vmatpush.bf16.xpose.msra.mxu0 0
        %3544 = vmatpush.bf16.xpose.msra.mxu0 0
        %3545 = vmatpush.bf16.xpose.msra.mxu0 0
        %3546 = vmatpush.bf16.xpose.msra.mxu0 0
        %3547 = vmatpush.bf16.xpose.msra.mxu0 0
        %3548 = vmatpush.bf16.xpose.msra.mxu0 %v1573
        %3549 = vmatmul.bf16.gmra.mxu0 %v823
        %v3550 = vpop.f32.mrf.mxu0
        %v3551 = vadd.f32 %v3538, %v3550
        %v3552 = vpop.f32.mrf.mxu0
        %3553 = vdwg.mxu0
        %3554 = vmatpush.bf16.xpose.msra.mxu0 0
        %3555 = vmatpush.bf16.xpose.msra.mxu0 0
        %3556 = vmatpush.bf16.xpose.msra.mxu0 0
        %3557 = vmatpush.bf16.xpose.msra.mxu0 0
        %3558 = vmatpush.bf16.xpose.msra.mxu0 0
        %3559 = vmatpush.bf16.xpose.msra.mxu0 0
        %3560 = vmatpush.bf16.xpose.msra.mxu0 0
        %3561 = vmatpush.bf16.xpose.msra.mxu0 %v1574
        %3562 = vmatmul.bf16.gmra.mxu0 %v824
        %v3563 = vpop.f32.mrf.mxu0
        %v3564 = vadd.f32 %v3551, %v3563
        %v3565 = vpop.f32.mrf.mxu0
        %3566 = vdwg.mxu0
        %3567 = vmatpush.bf16.xpose.msra.mxu0 0
        %3568 = vmatpush.bf16.xpose.msra.mxu0 0
        %3569 = vmatpush.bf16.xpose.msra.mxu0 0
        %3570 = vmatpush.bf16.xpose.msra.mxu0 0
        %3571 = vmatpush.bf16.xpose.msra.mxu0 0
        %3572 = vmatpush.bf16.xpose.msra.mxu0 0
        %3573 = vmatpush.bf16.xpose.msra.mxu0 0
        %3574 = vmatpush.bf16.xpose.msra.mxu0 %v1575
        %3575 = vmatmul.bf16.gmra.mxu0 %v825
        %v3576 = vpop.f32.mrf.mxu0
        %v3577 = vadd.f32 %v3564, %v3576
        %v3578 = vpop.f32.mrf.mxu0
        %3579 = vdwg.mxu0
        %3580 = vmatpush.bf16.xpose.msra.mxu0 0
        %3581 = vmatpush.bf16.xpose.msra.mxu0 0
        %3582 = vmatpush.bf16.xpose.msra.mxu0 0
        %3583 = vmatpush.bf16.xpose.msra.mxu0 0
        %3584 = vmatpush.bf16.xpose.msra.mxu0 0
        %3585 = vmatpush.bf16.xpose.msra.mxu0 0
        %3586 = vmatpush.bf16.xpose.msra.mxu0 0
        %3587 = vmatpush.bf16.xpose.msra.mxu0 %v1576
        %3588 = vmatmul.bf16.gmra.mxu0 %v826
        %v3589 = vpop.f32.mrf.mxu0
        %v3590 = vadd.f32 %v3577, %v3589
        %v3591 = vpop.f32.mrf.mxu0
        %3592 = vdwg.mxu0
        %3593 = vmatpush.bf16.xpose.msra.mxu0 0
        %3594 = vmatpush.bf16.xpose.msra.mxu0 0
        %3595 = vmatpush.bf16.xpose.msra.mxu0 0
        %3596 = vmatpush.bf16.xpose.msra.mxu0 0
        %3597 = vmatpush.bf16.xpose.msra.mxu0 0
        %3598 = vmatpush.bf16.xpose.msra.mxu0 0
        %3599 = vmatpush.bf16.xpose.msra.mxu0 0
        %3600 = vmatpush.bf16.xpose.msra.mxu0 %v1577
        %3601 = vmatmul.bf16.gmra.mxu0 %v827
        %v3602 = vpop.f32.mrf.mxu0
        %v3603 = vadd.f32 %v3590, %v3602
        %v3604 = vpop.f32.mrf.mxu0
        %3605 = vdwg.mxu0
        %3606 = vmatpush.bf16.xpose.msra.mxu0 0
        %3607 = vmatpush.bf16.xpose.msra.mxu0 0
        %3608 = vmatpush.bf16.xpose.msra.mxu0 0
        %3609 = vmatpush.bf16.xpose.msra.mxu0 0
        %3610 = vmatpush.bf16.xpose.msra.mxu0 0
        %3611 = vmatpush.bf16.xpose.msra.mxu0 0
        %3612 = vmatpush.bf16.xpose.msra.mxu0 0
        %3613 = vmatpush.bf16.xpose.msra.mxu0 %v1578
        %3614 = vmatmul.bf16.gmra.mxu0 %v828
        %v3615 = vpop.f32.mrf.mxu0
        %v3616 = vadd.f32 %v3603, %v3615
        %v3617 = vpop.f32.mrf.mxu0
        %3618 = vdwg.mxu0
        %3619 = vmatpush.bf16.xpose.msra.mxu0 0
        %3620 = vmatpush.bf16.xpose.msra.mxu0 0
        %3621 = vmatpush.bf16.xpose.msra.mxu0 0
        %3622 = vmatpush.bf16.xpose.msra.mxu0 0
        %3623 = vmatpush.bf16.xpose.msra.mxu0 0
        %3624 = vmatpush.bf16.xpose.msra.mxu0 0
        %3625 = vmatpush.bf16.xpose.msra.mxu0 0
        %3626 = vmatpush.bf16.xpose.msra.mxu0 %v1579
        %3627 = vmatmul.bf16.gmra.mxu0 %v829
        %v3628 = vpop.f32.mrf.mxu0
        %v3629 = vadd.f32 %v3616, %v3628
        %v3630 = vpop.f32.mrf.mxu0
        %3631 = vdwg.mxu0
        %3632 = vmatpush.bf16.xpose.msra.mxu0 0
        %3633 = vmatpush.bf16.xpose.msra.mxu0 0
        %3634 = vmatpush.bf16.xpose.msra.mxu0 0
        %3635 = vmatpush.bf16.xpose.msra.mxu0 0
        %3636 = vmatpush.bf16.xpose.msra.mxu0 0
        %3637 = vmatpush.bf16.xpose.msra.mxu0 0
        %3638 = vmatpush.bf16.xpose.msra.mxu0 0
        %3639 = vmatpush.bf16.xpose.msra.mxu0 %v1580
        %3640 = vmatmul.bf16.gmra.mxu0 %v830
        %v3641 = vpop.f32.mrf.mxu0
        %v3642 = vadd.f32 %v3629, %v3641
        %v3643 = vpop.f32.mrf.mxu0
        %3644 = vdwg.mxu0
        %3645 = vmatpush.bf16.xpose.msra.mxu0 0
        %3646 = vmatpush.bf16.xpose.msra.mxu0 0
        %3647 = vmatpush.bf16.xpose.msra.mxu0 0
        %3648 = vmatpush.bf16.xpose.msra.mxu0 0
        %3649 = vmatpush.bf16.xpose.msra.mxu0 0
        %3650 = vmatpush.bf16.xpose.msra.mxu0 0
        %3651 = vmatpush.bf16.xpose.msra.mxu0 0
        %3652 = vmatpush.bf16.xpose.msra.mxu0 %v1581
        %3653 = vmatmul.bf16.gmra.mxu0 %v831
        %v3654 = vpop.f32.mrf.mxu0
        %v3655 = vadd.f32 %v3642, %v3654
        %v3656 = vpop.f32.mrf.mxu0
        %3657 = vdwg.mxu0
        %3658 = vmatpush.bf16.xpose.msra.mxu0 0
        %3659 = vmatpush.bf16.xpose.msra.mxu0 0
        %3660 = vmatpush.bf16.xpose.msra.mxu0 0
        %3661 = vmatpush.bf16.xpose.msra.mxu0 0
        %3662 = vmatpush.bf16.xpose.msra.mxu0 0
        %3663 = vmatpush.bf16.xpose.msra.mxu0 0
        %3664 = vmatpush.bf16.xpose.msra.mxu0 0
        %3665 = vmatpush.bf16.xpose.msra.mxu0 %v1582
        %3666 = vmatmul.bf16.gmra.mxu0 %v832
        %v3667 = vpop.f32.mrf.mxu0
        %v3668 = vadd.f32 %v3655, %v3667
        %v3669 = vpop.f32.mrf.mxu0
        %3670 = vdwg.mxu0
        %3671 = vmatpush.bf16.xpose.msra.mxu0 0
        %3672 = vmatpush.bf16.xpose.msra.mxu0 0
        %3673 = vmatpush.bf16.xpose.msra.mxu0 0
        %3674 = vmatpush.bf16.xpose.msra.mxu0 0
        %3675 = vmatpush.bf16.xpose.msra.mxu0 0
        %3676 = vmatpush.bf16.xpose.msra.mxu0 0
        %3677 = vmatpush.bf16.xpose.msra.mxu0 0
        %3678 = vmatpush.bf16.xpose.msra.mxu0 %v1583
        %3679 = vmatmul.bf16.gmra.mxu0 %v833
        %v3680 = vpop.f32.mrf.mxu0
        %v3681 = vadd.f32 %v3668, %v3680
        %v3682 = vpop.f32.mrf.mxu0
        %3683 = vdwg.mxu0
        %p3684 = scmp.eq.s32.totalorder %s26, 0
        // Predicated region
        $region45: #{ltrans_forward.1} parent=31 // pred_check
          %p3685 = pneg %p3684
        $region46: #{ltrans_forward.1} parent=31 // pred_check_branch
          %3687 = sbr.rel (%p3685) target = $region48
        $region47: #{ltrans_forward.1} parent=31 // pred_region
          %p3688 = scmp.eq.s32.totalorder %s25, 0
          %s3689 = scalar_select %p3688, 1, 0
          %s3690 = scvt.s32.f32 %s3689
          %v3691 = vld [vmem:[#allocation7] sm:$0x1]
          %v3693 = vperm.slane %v3691, 0
          %v3695 = vstv %s3690
          %v3696 = vmul.f32 %v3695, %v3693
          %vm3697 = vcmask 74752
          %3698 = vst.msk [vmem:[#allocation8] sm:$0x3] %vm3697, %v3696
        $region48: #{ltrans_forward.1} parent=31 // pred_fallthru
          _
        %v3699 = vld [vmem:[#allocation8] sm:$0x3]
        %v3700 = vadd.f32 %v3699, %v3681
        %vm3701 = vcmask 74752
        %3702 = vst.msk [vmem:[#allocation8] sm:$0x3] %vm3701, %v3700
        // Predicated region
        $region49: #{ltrans_forward.1} parent=31 // pred_check
          %p3703 = pneg %p132
        $region50: #{ltrans_forward.1} parent=31 // pred_check_branch
          %3705 = sbr.rel (%p3703) target = $region52
        $region51: #{ltrans_forward.1} parent=31 // pred_region
          %3707 = vsyncadd [#allocation4], 0
          %s3708 = smul.addr %s25, 2
          %s3709 = scalar_lea.hbm %s3, %s3708
          %s3711 = sshll.u32 [#allocation8], 4
          %s3712 = int_to_ptr.vmem [resolvable:$true] %s3711
          %s3713 = sshll.u32 %s3709, 4
          %s3714 = int_to_ptr.hbm [resolvable:$true] %s3713
          %3716 = dma.vmem_to_hbm [thread:$0]  %s3712, 32, %s3714, [#allocation4]
        $region52: #{ltrans_forward.1} parent=31 // pred_fallthru
          _
        // Predicated region
        $region53: #{ltrans_forward.1} parent=31 // pred_check
          %p3717 = pneg %p132
        $region54: #{ltrans_forward.1} parent=31 // pred_check_branch
          %3719 = sbr.rel (%p3717) target = $region56
        $region55: #{ltrans_forward.1} parent=31 // pred_region
          %3721 = dma.done [#allocation4], 32
        $region56: #{ltrans_forward.1} parent=31 // pred_fallthru
          _
      $region32: #{ltrans_forward.1} parent=5 // pred_fallthru
        _
      %p3722 = scmp.le.s32.totalorder 2, %s16
      // Predicated region
      $region57: #{ltrans_forward.1} parent=5 // pred_check
        %p3723 = pneg %p3722
      $region58: #{ltrans_forward.1} parent=5 // pred_check_branch
        %3725 = sbr.rel (%p3723) target = $region60
      $region59: #{ltrans_forward.1} parent=5 // pred_region
        %s3726 = ssub.s32 %s16, 2
      $region60: #{ltrans_forward.1} parent=5 // pred_fallthru
        _
    $region6: #{ltrans_forward.1} parent=1 // loop_footer
      %s20 = sadd.s32 1, %s16
    $region7: #{ltrans_forward.1} parent=1 // loop_footer_branch
      %15 = sbr.rel target = $region3
    $region8: #{ltrans_forward.1} parent=1 // loop_exit
      _
    %3727 = vsyncpa [#allocation3], 1
    %s3728 = scalar_lea.sflag [#allocation3], 1
    %3729 = vsyncpa %s3728, 1
    %3730 = vsyncpa [#allocation6], 1
    %s3731 = scalar_lea.sflag [#allocation6], 1
    %3732 = vsyncpa %s3731, 1
    %3733 = vsyncpa [#allocation4], 1
    %s3734 = scalar_lea.sflag [#allocation4], 1
    %3735 = vsyncpa %s3734, 1

</llo_original>
